<compile_context>
chip_gen: v7x
topology: tpu7x:2x2x1
jax: 0.10.0
libtpu: 0.0.40
codegen_flags: <defaults>
</compile_context>

<pallas_src>
import functools

import jax
import jax.numpy as jnp
from jax.experimental import pallas as pl
from jax.experimental.pallas import tpu as pltpu

EPS = 1e-5
K1_PAD = 128          # padded input-feature dim for lane alignment of layer 1
TB_MAX = 256          # max batch tile per grid step


def _round_up(x, m):
    return (x + m - 1) // m * m


def _gn_relu(h, gamma, beta):
    """GroupNorm(num_groups=1) over channels of a (TB, C) f32 tensor + affine + ReLU.

    Single-pass stats: var = E[h^2] - mean^2 (biased, matching torch GroupNorm).
    """
    c = h.shape[-1]
    inv_c = 1.0 / float(c)
    s = jnp.sum(h, axis=-1, keepdims=True)
    s2 = jnp.sum(h * h, axis=-1, keepdims=True)
    mean = s * inv_c
    var = s2 * inv_c - mean * mean
    inv = jax.lax.rsqrt(var + EPS)
    hn = (h - mean) * inv
    return jnp.maximum(hn * gamma + beta, 0.0)


def deep_decoder_kernel(
    x_ref,
    w1_ref, p1_ref,
    w2_ref, p2_ref,
    w3_ref, p3_ref,
    w4_ref, p4_ref,
    w5_ref, b5_ref,
    out_ref,
):
    def layer(h_bf16, w_ref, p_ref):
        p = p_ref[...]                       # (3, C) f32: [bias; gamma; beta]
        z = jnp.dot(h_bf16, w_ref[...],
                    preferred_element_type=jnp.float32) + p[0:1, :]
        z = _gn_relu(z, p[1:2, :], p[2:3, :])   # f32 elementwise (v5e-safe)
        return z.astype(jnp.bfloat16)           # bf16 only for the next MXU dot

    h = layer(x_ref[...], w1_ref, p1_ref)    # x already bf16, (TB, 128)
    h = layer(h, w2_ref, p2_ref)
    h = layer(h, w3_ref, p3_ref)
    h = layer(h, w4_ref, p4_ref)
    out_ref[...] = (
        jnp.dot(h, w5_ref[...], preferred_element_type=jnp.float32) + b5_ref[...]
    )


def init_params(key, input_dim, N):
    """Deterministic PyTorch-like init, stored in the kernel-ready layout:
       - w1: (128, 128) bf16 (rows >= input_dim zero-padded)
       - w2..w5: (in, out) bf16
       - p1..p4: (3, C) f32 packed [bias; gamma=1; beta=0]
       - b5: (1, 3N) f32
    """
    dims = [input_dim, 128, 256, 512, 1024, 3 * N]
    keys = jax.random.split(key, 10)
    params = {}
    for i in range(5):
        fan_in = dims[i]
        bound = 1.0 / float(fan_in ** 0.5)
        w = jax.random.uniform(keys[2 * i], (dims[i], dims[i + 1]),
                               jnp.float32, -bound, bound)
        b = jax.random.uniform(keys[2 * i + 1], (dims[i + 1],),
                               jnp.float32, -bound, bound)
        if i == 0:  # pad layer-1 weight rows 4..127 with zeros (lane-aligned K)
            w = jnp.zeros((K1_PAD, dims[1]), jnp.float32).at[:dims[0], :].set(w)
        params[f"w{i + 1}"] = w.astype(jnp.bfloat16)
        if i < 4:
            c = dims[i + 1]
            params[f"p{i + 1}"] = jnp.stack(
                [b, jnp.ones((c,), jnp.float32), jnp.zeros((c,), jnp.float32)],
                axis=0,
            )
        else:
            params["b5"] = b.reshape(1, -1)
    return params


@functools.partial(jax.jit, static_argnames=("N",))
def deep_decoder_forward(x, params, N):
    B, in_dim = x.shape
    out_dim = 3 * N

    TB = min(TB_MAX, _round_up(B, 8))
    B_pad = _round_up(B, TB)

    # Pad input once: (B, in_dim) f32 -> (B_pad, 128) bf16.
    xp = jnp.zeros((B_pad, K1_PAD), jnp.bfloat16)
    xp = xp.at[:B, :in_dim].set(x.astype(jnp.bfloat16))

    args = (
        xp,
        params["w1"], params["p1"],
        params["w2"], params["p2"],
        params["w3"], params["p3"],
        params["w4"], params["p4"],
        params["w5"], params["b5"],
    )

    def resident(shape):
        # Weights / packed vectors: same block every step -> kept in VMEM.
        return pl.BlockSpec(shape, lambda i: (0, 0))

    in_specs = [
        pl.BlockSpec((TB, K1_PAD), lambda i: (i, 0)),   # x tile
        resident((K1_PAD, 128)), resident((3, 128)),
        resident((128, 256)),    resident((3, 256)),
        resident((256, 512)),    resident((3, 512)),
        resident((512, 1024)),   resident((3, 1024)),
        resident((1024, out_dim)), resident((1, out_dim)),
    ]

    out = pl.pallas_call(
        deep_decoder_kernel,
        out_shape=jax.ShapeDtypeStruct((B_pad, out_dim), jnp.float32),
        grid_spec=pltpu.PrefetchScalarGridSpec(
            num_scalar_prefetch=0,
            grid=(B_pad // TB,),
            in_specs=in_specs,
            out_specs=pl.BlockSpec((TB, out_dim), lambda i: (i, 0)),
        ),
        compiler_params=pltpu.CompilerParams(
            dimension_semantics=("parallel",),
            vmem_limit_bytes=32 << 20,
        ),
    )(*args)
    return out[:B]


def deep_decoder_reference(x, params):
    """Pure-JAX reference following the same numeric path (bf16 dots, f32 GN)."""
    B, in_dim = x.shape
    h = jnp.zeros((B, K1_PAD), jnp.float32).at[:, :in_dim].set(x)
    h = h.astype(jnp.bfloat16)
    for i in range(1, 5):
        p = params[f"p{i}"]
        z = jnp.dot(h, params[f"w{i}"],
                    preferred_element_type=jnp.float32) + p[0:1]
        mean = jnp.mean(z, axis=-1, keepdims=True)
        var = jnp.mean((z - mean) ** 2, axis=-1, keepdims=True)
        zn = (z - mean) / jnp.sqrt(var + EPS)
        h = jnp.maximum(zn * p[1:2] + p[2:3], 0.0).astype(jnp.bfloat16)
    return jnp.dot(h, params["w5"],
                   preferred_element_type=jnp.float32) + params["b5"]


if __name__ == "__main__":
    N = 128          # fc5 produces 3*N = 384 features (lane-dense output)
    hys = False
    input_dim = 8 if hys else 4
    batch = 8

    key = jax.random.PRNGKey(0)
    k_param, k_x = jax.random.split(key)
    params = init_params(k_param, input_dim, N)
    x = jax.random.normal(k_x, (batch, input_dim), jnp.float32)

    out = deep_decoder_forward(x, params, N)
    out = jax.block_until_ready(out)

    ref = deep_decoder_reference(x, params)
    assert out.shape == (batch, 3 * N)
    assert bool(jnp.all(jnp.isfinite(out)))
    assert jnp.allclose(out, ref, atol=5e-3, rtol=5e-3), "mismatch vs reference"

    # TODO(synk): ChamferLoss (get_chamfer_loss) is not part of forward(); not
    # implemented here.
    print("KERNEL_OK")
</pallas_src>

<mosaic_0001>
module attributes {stable_mosaic.version = 11 : i64} {
  func.func @deep_decoder_kernel(%arg0: i32, %arg1: memref<8x128xbf16, #tpu.memory_space<vmem>>, %arg2: memref<128x128xbf16, #tpu.memory_space<vmem>>, %arg3: memref<3x128xf32, #tpu.memory_space<vmem>>, %arg4: memref<128x256xbf16, #tpu.memory_space<vmem>>, %arg5: memref<3x256xf32, #tpu.memory_space<vmem>>, %arg6: memref<256x512xbf16, #tpu.memory_space<vmem>>, %arg7: memref<3x512xf32, #tpu.memory_space<vmem>>, %arg8: memref<512x1024xbf16, #tpu.memory_space<vmem>>, %arg9: memref<3x1024xf32, #tpu.memory_space<vmem>>, %arg10: memref<1024x384xbf16, #tpu.memory_space<vmem>>, %arg11: memref<1x384xf32, #tpu.memory_space<vmem>>, %arg12: memref<8x384xf32, #tpu.memory_space<vmem>>) attributes {dimension_semantics = [#tpu.dimension_semantics<parallel>], iteration_bounds = array<i64: 1>, scalar_prefetch = 0 : i64, scratch_operands = 0 : i64, tpu.core_type = #tpu.core_type<tc>, window_params = [{transform_indices = @transform_0, window_bounds = array<i64: 8, 128>}, {pipeline_mode = #tpu.pipeline_mode<synchronous>, transform_indices = @transform_1, window_bounds = array<i64: 128, 128>}, {pipeline_mode = #tpu.pipeline_mode<synchronous>, transform_indices = @transform_2, window_bounds = array<i64: 3, 128>}, {pipeline_mode = #tpu.pipeline_mode<synchronous>, transform_indices = @transform_3, window_bounds = array<i64: 128, 256>}, {pipeline_mode = #tpu.pipeline_mode<synchronous>, transform_indices = @transform_4, window_bounds = array<i64: 3, 256>}, {pipeline_mode = #tpu.pipeline_mode<synchronous>, transform_indices = @transform_5, window_bounds = array<i64: 256, 512>}, {pipeline_mode = #tpu.pipeline_mode<synchronous>, transform_indices = @transform_6, window_bounds = array<i64: 3, 512>}, {pipeline_mode = #tpu.pipeline_mode<synchronous>, transform_indices = @transform_7, window_bounds = array<i64: 512, 1024>}, {pipeline_mode = #tpu.pipeline_mode<synchronous>, transform_indices = @transform_8, window_bounds = array<i64: 3, 1024>}, {pipeline_mode = #tpu.pipeline_mode<synchronous>, transform_indices = @transform_9, window_bounds = array<i64: 1024, 384>}, {pipeline_mode = #tpu.pipeline_mode<synchronous>, transform_indices = @transform_10, window_bounds = array<i64: 1, 384>}, {transform_indices = @transform_11, window_bounds = array<i64: 8, 384>}]} {
    %c0 = arith.constant 0 : index
    %c0_0 = arith.constant 0 : index
    %0 = vector.load %arg1[%c0, %c0_0] : memref<8x128xbf16, #tpu.memory_space<vmem>>, vector<8x128xbf16>
    %c0_1 = arith.constant 0 : index
    %c0_2 = arith.constant 0 : index
    %1 = vector.load %arg3[%c0_1, %c0_2] : memref<3x128xf32, #tpu.memory_space<vmem>>, vector<3x128xf32>
    %c0_3 = arith.constant 0 : index
    %c0_4 = arith.constant 0 : index
    %2 = vector.load %arg2[%c0_3, %c0_4] : memref<128x128xbf16, #tpu.memory_space<vmem>>, vector<128x128xbf16>
    %cst = arith.constant dense<0.000000e+00> : vector<8x128xf32>
    %3 = tpu.matmul %0, %2, %cst {dimension_numbers = #tpu.dot_dimension_numbers<[1], [0], [0], [1], [0, 0, 1, 1], [], []>} : vector<8x128xbf16>, vector<128x128xbf16>, vector<8x128xf32> -> vector<8x128xf32>
    %4 = vector.extract_strided_slice %1 {offsets = [0, 0], sizes = [1, 128], strides = [1, 1]} : vector<3x128xf32> to vector<1x128xf32>
    %5 = vector.broadcast %4 : vector<1x128xf32> to vector<8x128xf32>
    %6 = arith.addf %3, %5 : vector<8x128xf32>
    %7 = vector.extract_strided_slice %1 {offsets = [1, 0], sizes = [1, 128], strides = [1, 1]} : vector<3x128xf32> to vector<1x128xf32>
    %8 = vector.extract_strided_slice %1 {offsets = [2, 0], sizes = [1, 128], strides = [1, 1]} : vector<3x128xf32> to vector<1x128xf32>
    %cst_5 = arith.constant dense<0.000000e+00> : vector<8xf32>
    %9 = vector.multi_reduction <add>, %6, %cst_5 [1] : vector<8x128xf32> to vector<8xf32>
    %10 = vector.shape_cast %9 : vector<8xf32> to vector<8x1xf32>
    %11 = arith.mulf %6, %6 : vector<8x128xf32>
    %cst_6 = arith.constant dense<0.000000e+00> : vector<8xf32>
    %12 = vector.multi_reduction <add>, %11, %cst_6 [1] : vector<8x128xf32> to vector<8xf32>
    %13 = vector.shape_cast %12 : vector<8xf32> to vector<8x1xf32>
    %cst_7 = arith.constant 7.812500e-03 : f32
    %14 = vector.broadcast %cst_7 : f32 to vector<8x1xf32>
    %15 = arith.mulf %10, %14 : vector<8x1xf32>
    %cst_8 = arith.constant 7.812500e-03 : f32
    %16 = vector.broadcast %cst_8 : f32 to vector<8x1xf32>
    %17 = arith.mulf %13, %16 : vector<8x1xf32>
    %18 = arith.mulf %15, %15 : vector<8x1xf32>
    %19 = arith.subf %17, %18 : vector<8x1xf32>
    %cst_9 = arith.constant 9.99999974E-6 : f32
    %20 = vector.broadcast %cst_9 : f32 to vector<8x1xf32>
    %21 = arith.addf %19, %20 : vector<8x1xf32>
    %22 = math.rsqrt %21 : vector<8x1xf32>
    %23 = vector.broadcast %15 : vector<8x1xf32> to vector<8x128xf32>
    %24 = arith.subf %6, %23 : vector<8x128xf32>
    %25 = vector.broadcast %22 : vector<8x1xf32> to vector<8x128xf32>
    %26 = arith.mulf %24, %25 : vector<8x128xf32>
    %27 = vector.broadcast %7 : vector<1x128xf32> to vector<8x128xf32>
    %28 = arith.mulf %26, %27 : vector<8x128xf32>
    %29 = vector.broadcast %8 : vector<1x128xf32> to vector<8x128xf32>
    %30 = arith.addf %28, %29 : vector<8x128xf32>
    %cst_10 = arith.constant 0.000000e+00 : f32
    %31 = vector.broadcast %cst_10 : f32 to vector<8x128xf32>
    %32 = arith.maximumf %30, %31 : vector<8x128xf32>
    %33 = arith.truncf %32 : vector<8x128xf32> to vector<8x128xbf16>
    %c0_11 = arith.constant 0 : index
    %c0_12 = arith.constant 0 : index
    %34 = vector.load %arg5[%c0_11, %c0_12] : memref<3x256xf32, #tpu.memory_space<vmem>>, vector<3x256xf32>
    %c0_13 = arith.constant 0 : index
    %c0_14 = arith.constant 0 : index
    %35 = vector.load %arg4[%c0_13, %c0_14] : memref<128x256xbf16, #tpu.memory_space<vmem>>, vector<128x256xbf16>
    %cst_15 = arith.constant dense<0.000000e+00> : vector<8x256xf32>
    %36 = tpu.matmul %33, %35, %cst_15 {dimension_numbers = #tpu.dot_dimension_numbers<[1], [0], [0], [1], [0, 0, 1, 1], [], []>} : vector<8x128xbf16>, vector<128x256xbf16>, vector<8x256xf32> -> vector<8x256xf32>
    %37 = vector.extract_strided_slice %34 {offsets = [0, 0], sizes = [1, 256], strides = [1, 1]} : vector<3x256xf32> to vector<1x256xf32>
    %38 = vector.broadcast %37 : vector<1x256xf32> to vector<8x256xf32>
    %39 = arith.addf %36, %38 : vector<8x256xf32>
    %40 = vector.extract_strided_slice %34 {offsets = [1, 0], sizes = [1, 256], strides = [1, 1]} : vector<3x256xf32> to vector<1x256xf32>
    %41 = vector.extract_strided_slice %34 {offsets = [2, 0], sizes = [1, 256], strides = [1, 1]} : vector<3x256xf32> to vector<1x256xf32>
    %cst_16 = arith.constant dense<0.000000e+00> : vector<8xf32>
    %42 = vector.multi_reduction <add>, %39, %cst_16 [1] : vector<8x256xf32> to vector<8xf32>
    %43 = vector.shape_cast %42 : vector<8xf32> to vector<8x1xf32>
    %44 = arith.mulf %39, %39 : vector<8x256xf32>
    %cst_17 = arith.constant dense<0.000000e+00> : vector<8xf32>
    %45 = vector.multi_reduction <add>, %44, %cst_17 [1] : vector<8x256xf32> to vector<8xf32>
    %46 = vector.shape_cast %45 : vector<8xf32> to vector<8x1xf32>
    %cst_18 = arith.constant 3.906250e-03 : f32
    %47 = vector.broadcast %cst_18 : f32 to vector<8x1xf32>
    %48 = arith.mulf %43, %47 : vector<8x1xf32>
    %cst_19 = arith.constant 3.906250e-03 : f32
    %49 = vector.broadcast %cst_19 : f32 to vector<8x1xf32>
    %50 = arith.mulf %46, %49 : vector<8x1xf32>
    %51 = arith.mulf %48, %48 : vector<8x1xf32>
    %52 = arith.subf %50, %51 : vector<8x1xf32>
    %cst_20 = arith.constant 9.99999974E-6 : f32
    %53 = vector.broadcast %cst_20 : f32 to vector<8x1xf32>
    %54 = arith.addf %52, %53 : vector<8x1xf32>
    %55 = math.rsqrt %54 : vector<8x1xf32>
    %56 = vector.broadcast %48 : vector<8x1xf32> to vector<8x256xf32>
    %57 = arith.subf %39, %56 : vector<8x256xf32>
    %58 = vector.broadcast %55 : vector<8x1xf32> to vector<8x256xf32>
    %59 = arith.mulf %57, %58 : vector<8x256xf32>
    %60 = vector.broadcast %40 : vector<1x256xf32> to vector<8x256xf32>
    %61 = arith.mulf %59, %60 : vector<8x256xf32>
    %62 = vector.broadcast %41 : vector<1x256xf32> to vector<8x256xf32>
    %63 = arith.addf %61, %62 : vector<8x256xf32>
    %cst_21 = arith.constant 0.000000e+00 : f32
    %64 = vector.broadcast %cst_21 : f32 to vector<8x256xf32>
    %65 = arith.maximumf %63, %64 : vector<8x256xf32>
    %66 = arith.truncf %65 : vector<8x256xf32> to vector<8x256xbf16>
    %c0_22 = arith.constant 0 : index
    %c0_23 = arith.constant 0 : index
    %67 = vector.load %arg7[%c0_22, %c0_23] : memref<3x512xf32, #tpu.memory_space<vmem>>, vector<3x512xf32>
    %c0_24 = arith.constant 0 : index
    %c0_25 = arith.constant 0 : index
    %68 = vector.load %arg6[%c0_24, %c0_25] : memref<256x512xbf16, #tpu.memory_space<vmem>>, vector<256x512xbf16>
    %cst_26 = arith.constant dense<0.000000e+00> : vector<8x512xf32>
    %69 = tpu.matmul %66, %68, %cst_26 {dimension_numbers = #tpu.dot_dimension_numbers<[1], [0], [0], [1], [0, 0, 1, 1], [], []>} : vector<8x256xbf16>, vector<256x512xbf16>, vector<8x512xf32> -> vector<8x512xf32>
    %70 = vector.extract_strided_slice %67 {offsets = [0, 0], sizes = [1, 512], strides = [1, 1]} : vector<3x512xf32> to vector<1x512xf32>
    %71 = vector.broadcast %70 : vector<1x512xf32> to vector<8x512xf32>
    %72 = arith.addf %69, %71 : vector<8x512xf32>
    %73 = vector.extract_strided_slice %67 {offsets = [1, 0], sizes = [1, 512], strides = [1, 1]} : vector<3x512xf32> to vector<1x512xf32>
    %74 = vector.extract_strided_slice %67 {offsets = [2, 0], sizes = [1, 512], strides = [1, 1]} : vector<3x512xf32> to vector<1x512xf32>
    %cst_27 = arith.constant dense<0.000000e+00> : vector<8xf32>
    %75 = vector.multi_reduction <add>, %72, %cst_27 [1] : vector<8x512xf32> to vector<8xf32>
    %76 = vector.shape_cast %75 : vector<8xf32> to vector<8x1xf32>
    %77 = arith.mulf %72, %72 : vector<8x512xf32>
    %cst_28 = arith.constant dense<0.000000e+00> : vector<8xf32>
    %78 = vector.multi_reduction <add>, %77, %cst_28 [1] : vector<8x512xf32> to vector<8xf32>
    %79 = vector.shape_cast %78 : vector<8xf32> to vector<8x1xf32>
    %cst_29 = arith.constant 0.001953125 : f32
    %80 = vector.broadcast %cst_29 : f32 to vector<8x1xf32>
    %81 = arith.mulf %76, %80 : vector<8x1xf32>
    %cst_30 = arith.constant 0.001953125 : f32
    %82 = vector.broadcast %cst_30 : f32 to vector<8x1xf32>
    %83 = arith.mulf %79, %82 : vector<8x1xf32>
    %84 = arith.mulf %81, %81 : vector<8x1xf32>
    %85 = arith.subf %83, %84 : vector<8x1xf32>
    %cst_31 = arith.constant 9.99999974E-6 : f32
    %86 = vector.broadcast %cst_31 : f32 to vector<8x1xf32>
    %87 = arith.addf %85, %86 : vector<8x1xf32>
    %88 = math.rsqrt %87 : vector<8x1xf32>
    %89 = vector.broadcast %81 : vector<8x1xf32> to vector<8x512xf32>
    %90 = arith.subf %72, %89 : vector<8x512xf32>
    %91 = vector.broadcast %88 : vector<8x1xf32> to vector<8x512xf32>
    %92 = arith.mulf %90, %91 : vector<8x512xf32>
    %93 = vector.broadcast %73 : vector<1x512xf32> to vector<8x512xf32>
    %94 = arith.mulf %92, %93 : vector<8x512xf32>
    %95 = vector.broadcast %74 : vector<1x512xf32> to vector<8x512xf32>
    %96 = arith.addf %94, %95 : vector<8x512xf32>
    %cst_32 = arith.constant 0.000000e+00 : f32
    %97 = vector.broadcast %cst_32 : f32 to vector<8x512xf32>
    %98 = arith.maximumf %96, %97 : vector<8x512xf32>
    %99 = arith.truncf %98 : vector<8x512xf32> to vector<8x512xbf16>
    %c0_33 = arith.constant 0 : index
    %c0_34 = arith.constant 0 : index
    %100 = vector.load %arg9[%c0_33, %c0_34] : memref<3x1024xf32, #tpu.memory_space<vmem>>, vector<3x1024xf32>
    %c0_35 = arith.constant 0 : index
    %c0_36 = arith.constant 0 : index
    %101 = vector.load %arg8[%c0_35, %c0_36] : memref<512x1024xbf16, #tpu.memory_space<vmem>>, vector<512x1024xbf16>
    %cst_37 = arith.constant dense<0.000000e+00> : vector<8x1024xf32>
    %102 = tpu.matmul %99, %101, %cst_37 {dimension_numbers = #tpu.dot_dimension_numbers<[1], [0], [0], [1], [0, 0, 1, 1], [], []>} : vector<8x512xbf16>, vector<512x1024xbf16>, vector<8x1024xf32> -> vector<8x1024xf32>
    %103 = vector.extract_strided_slice %100 {offsets = [0, 0], sizes = [1, 1024], strides = [1, 1]} : vector<3x1024xf32> to vector<1x1024xf32>
    %104 = vector.broadcast %103 : vector<1x1024xf32> to vector<8x1024xf32>
    %105 = arith.addf %102, %104 : vector<8x1024xf32>
    %106 = vector.extract_strided_slice %100 {offsets = [1, 0], sizes = [1, 1024], strides = [1, 1]} : vector<3x1024xf32> to vector<1x1024xf32>
    %107 = vector.extract_strided_slice %100 {offsets = [2, 0], sizes = [1, 1024], strides = [1, 1]} : vector<3x1024xf32> to vector<1x1024xf32>
    %cst_38 = arith.constant dense<0.000000e+00> : vector<8xf32>
    %108 = vector.multi_reduction <add>, %105, %cst_38 [1] : vector<8x1024xf32> to vector<8xf32>
    %109 = vector.shape_cast %108 : vector<8xf32> to vector<8x1xf32>
    %110 = arith.mulf %105, %105 : vector<8x1024xf32>
    %cst_39 = arith.constant dense<0.000000e+00> : vector<8xf32>
    %111 = vector.multi_reduction <add>, %110, %cst_39 [1] : vector<8x1024xf32> to vector<8xf32>
    %112 = vector.shape_cast %111 : vector<8xf32> to vector<8x1xf32>
    %cst_40 = arith.constant 9.765625E-4 : f32
    %113 = vector.broadcast %cst_40 : f32 to vector<8x1xf32>
    %114 = arith.mulf %109, %113 : vector<8x1xf32>
    %cst_41 = arith.constant 9.765625E-4 : f32
    %115 = vector.broadcast %cst_41 : f32 to vector<8x1xf32>
    %116 = arith.mulf %112, %115 : vector<8x1xf32>
    %117 = arith.mulf %114, %114 : vector<8x1xf32>
    %118 = arith.subf %116, %117 : vector<8x1xf32>
    %cst_42 = arith.constant 9.99999974E-6 : f32
    %119 = vector.broadcast %cst_42 : f32 to vector<8x1xf32>
    %120 = arith.addf %118, %119 : vector<8x1xf32>
    %121 = math.rsqrt %120 : vector<8x1xf32>
    %122 = vector.broadcast %114 : vector<8x1xf32> to vector<8x1024xf32>
    %123 = arith.subf %105, %122 : vector<8x1024xf32>
    %124 = vector.broadcast %121 : vector<8x1xf32> to vector<8x1024xf32>
    %125 = arith.mulf %123, %124 : vector<8x1024xf32>
    %126 = vector.broadcast %106 : vector<1x1024xf32> to vector<8x1024xf32>
    %127 = arith.mulf %125, %126 : vector<8x1024xf32>
    %128 = vector.broadcast %107 : vector<1x1024xf32> to vector<8x1024xf32>
    %129 = arith.addf %127, %128 : vector<8x1024xf32>
    %cst_43 = arith.constant 0.000000e+00 : f32
    %130 = vector.broadcast %cst_43 : f32 to vector<8x1024xf32>
    %131 = arith.maximumf %129, %130 : vector<8x1024xf32>
    %132 = arith.truncf %131 : vector<8x1024xf32> to vector<8x1024xbf16>
    %c0_44 = arith.constant 0 : index
    %c0_45 = arith.constant 0 : index
    %133 = vector.load %arg10[%c0_44, %c0_45] : memref<1024x384xbf16, #tpu.memory_space<vmem>>, vector<1024x384xbf16>
    %cst_46 = arith.constant dense<0.000000e+00> : vector<8x384xf32>
    %134 = tpu.matmul %132, %133, %cst_46 {dimension_numbers = #tpu.dot_dimension_numbers<[1], [0], [0], [1], [0, 0, 1, 1], [], []>} : vector<8x1024xbf16>, vector<1024x384xbf16>, vector<8x384xf32> -> vector<8x384xf32>
    %c0_47 = arith.constant 0 : index
    %c0_48 = arith.constant 0 : index
    %135 = vector.load %arg11[%c0_47, %c0_48] : memref<1x384xf32, #tpu.memory_space<vmem>>, vector<1x384xf32>
    %136 = vector.broadcast %135 : vector<1x384xf32> to vector<8x384xf32>
    %137 = arith.addf %134, %136 : vector<8x384xf32>
    %c0_49 = arith.constant 0 : index
    %c0_50 = arith.constant 0 : index
    %138 = vector.load %arg12[%c0_49, %c0_50] : memref<8x384xf32, #tpu.memory_space<vmem>>, vector<8x384xf32>
    tpu.vector_store %arg12[%c0_49, %c0_50], %137 {strides = array<i32>} : memref<8x384xf32, #tpu.memory_space<vmem>>, vector<8x384xf32>,
    return
  }
  func.func @transform_0(%arg0: i32) -> (i32, i32) {
    %c0_i32 = arith.constant 0 : i32
    %c0_i32_0 = arith.constant 0 : i32
    return %arg0, %c0_i32 : i32, i32
  }
  func.func @transform_1(%arg0: i32) -> (i32, i32) {
    %c0_i32 = arith.constant 0 : i32
    %c0_i32_0 = arith.constant 0 : i32
    %c0_i32_1 = arith.constant 0 : i32
    return %c0_i32, %c0_i32_0 : i32, i32
  }
  func.func @transform_2(%arg0: i32) -> (i32, i32) {
    %c0_i32 = arith.constant 0 : i32
    %c0_i32_0 = arith.constant 0 : i32
    %c0_i32_1 = arith.constant 0 : i32
    return %c0_i32, %c0_i32_0 : i32, i32
  }
  func.func @transform_3(%arg0: i32) -> (i32, i32) {
    %c0_i32 = arith.constant 0 : i32
    %c0_i32_0 = arith.constant 0 : i32
    %c0_i32_1 = arith.constant 0 : i32
    return %c0_i32, %c0_i32_0 : i32, i32
  }
  func.func @transform_4(%arg0: i32) -> (i32, i32) {
    %c0_i32 = arith.constant 0 : i32
    %c0_i32_0 = arith.constant 0 : i32
    %c0_i32_1 = arith.constant 0 : i32
    return %c0_i32, %c0_i32_0 : i32, i32
  }
  func.func @transform_5(%arg0: i32) -> (i32, i32) {
    %c0_i32 = arith.constant 0 : i32
    %c0_i32_0 = arith.constant 0 : i32
    %c0_i32_1 = arith.constant 0 : i32
    return %c0_i32, %c0_i32_0 : i32, i32
  }
  func.func @transform_6(%arg0: i32) -> (i32, i32) {
    %c0_i32 = arith.constant 0 : i32
    %c0_i32_0 = arith.constant 0 : i32
    %c0_i32_1 = arith.constant 0 : i32
    return %c0_i32, %c0_i32_0 : i32, i32
  }
  func.func @transform_7(%arg0: i32) -> (i32, i32) {
    %c0_i32 = arith.constant 0 : i32
    %c0_i32_0 = arith.constant 0 : i32
    %c0_i32_1 = arith.constant 0 : i32
    return %c0_i32, %c0_i32_0 : i32, i32
  }
  func.func @transform_8(%arg0: i32) -> (i32, i32) {
    %c0_i32 = arith.constant 0 : i32
    %c0_i32_0 = arith.constant 0 : i32
    %c0_i32_1 = arith.constant 0 : i32
    return %c0_i32, %c0_i32_0 : i32, i32
  }
  func.func @transform_9(%arg0: i32) -> (i32, i32) {
    %c0_i32 = arith.constant 0 : i32
    %c0_i32_0 = arith.constant 0 : i32
    %c0_i32_1 = arith.constant 0 : i32
    return %c0_i32, %c0_i32_0 : i32, i32
  }
  func.func @transform_10(%arg0: i32) -> (i32, i32) {
    %c0_i32 = arith.constant 0 : i32
    %c0_i32_0 = arith.constant 0 : i32
    %c0_i32_1 = arith.constant 0 : i32
    return %c0_i32, %c0_i32_0 : i32, i32
  }
  func.func @transform_11(%arg0: i32) -> (i32, i32) {
    %c0_i32 = arith.constant 0 : i32
    %c0_i32_0 = arith.constant 0 : i32
    return %arg0, %c0_i32 : i32, i32
  }
}

</mosaic_0001>

<llo_original>
// kernel: deep_decoder_forward.1
$region0: #{deep_decoder_forward.1}
  #allocation0 [shape = 'u32[]', space=smem, size = 0x4, offset = 0x4, fixed_abs, tag = 'smem constant byte address 0x4 - core index']
  #allocation1 [shape = 'u32[144,128]{1,0:T(1,128)}', space=vmem, size = 0x12000, scoped, tag = 'internal scratch']
  %s0 = inlined_call_operand.vmem [shape: bf16[8,128], index: 0, kind: input, shape index: {}]
  %s1 = inlined_call_operand.hbm [shape: bf16[128,128], index: 1, kind: input, shape index: {}]
  %s2 = inlined_call_operand.hbm [shape: f32[3,128], index: 2, kind: input, shape index: {}]
  %s3 = inlined_call_operand.hbm [shape: bf16[128,256], index: 3, kind: input, shape index: {}]
  %s4 = inlined_call_operand.hbm [shape: f32[3,256], index: 4, kind: input, shape index: {}]
  %s5 = inlined_call_operand.hbm [shape: bf16[256,512], index: 5, kind: input, shape index: {}]
  %s6 = inlined_call_operand.vmem [shape: f32[3,512], index: 6, kind: input, shape index: {}]
  %s7 = inlined_call_operand.hbm [shape: bf16[512,1024], index: 7, kind: input, shape index: {}]
  %s8 = inlined_call_operand.vmem [shape: f32[3,1024], index: 8, kind: input, shape index: {}]
  %s9 = inlined_call_operand.hbm [shape: bf16[1024,384], index: 9, kind: input, shape index: {}]
  %s10 = inlined_call_operand.hbm [shape: f32[1,384], index: 10, kind: input, shape index: {}]
  %s11 = inlined_call_operand.hbm [shape: f32[8,384], index: 11, kind: output, shape index: {}]
  %s12 = sld [smem:[#allocation0]]
  $region86: #{deep_decoder_forward.1} parent=0
    _
  %s14 = ssub.s32 1, %s12
  %s15 = scalar_select 0, %s14, %s12
  $region1: #{deep_decoder_forward.1} parent=0
    #allocation2 [shape = 'u8[32768]{0}', space=vmem, size = 0x8000, scoped, tag = 'input window, operand 1, single buffered']
    #allocation3 [shape = 's32[1]{0}', space=sflag, size = 0x4, scoped, tag = 'scoped memory for deep_decoder_forward.1']
    #allocation4 [shape = 's32[1]{0}', space=sflag, size = 0x4, scoped, tag = 'scoped memory for deep_decoder_forward.1']
    #allocation5 [shape = 'u8[2048]{0}', space=vmem, size = 0x800, scoped, tag = 'input window, operand 2, single buffered']
    #allocation6 [shape = 's32[1]{0}', space=sflag, size = 0x4, scoped, tag = 'scoped memory for deep_decoder_forward.1']
    #allocation7 [shape = 'u8[65536]{0}', space=vmem, size = 0x10000, scoped, tag = 'input window, operand 3, single buffered']
    #allocation8 [shape = 'u8[4096]{0}', space=vmem, size = 0x1000, scoped, tag = 'input window, operand 4, single buffered']
    #allocation9 [shape = 's32[1]{0}', space=sflag, size = 0x4, scoped, tag = 'scoped memory for deep_decoder_forward.1']
    #allocation10 [shape = 'u8[262144]{0}', space=vmem, size = 0x40000, scoped, tag = 'input window, operand 5, single buffered']
    #allocation11 [shape = 'u8[1048576]{0}', space=vmem, size = 0x100000, scoped, tag = 'input window, operand 7, single buffered']
    #allocation12 [shape = 's32[1]{0}', space=sflag, size = 0x4, scoped, tag = 'scoped memory for deep_decoder_forward.1']
    #allocation13 [shape = 'u8[786432]{0}', space=vmem, size = 0xc0000, scoped, tag = 'input window, operand 9, single buffered']
    #allocation14 [shape = 'u8[1536]{0}', space=vmem, size = 0x800, scoped, tag = 'input window, operand 10, single buffered']
    #allocation15 [shape = 's32[1]{0}', space=sflag, size = 0x4, scoped, tag = 'scoped memory for deep_decoder_forward.1']
    #allocation16 [shape = 'u8[12288]{0}', space=vmem, size = 0x3000, scoped, tag = 'output window, operand 0, single buffered']
    %16 = vsyncpa [#allocation3], 0
    %17 = vsyncpa [#allocation6], 0
    %18 = vsyncpa [#allocation9], 0
    %19 = vsyncpa [#allocation12], 0
    %20 = vsyncpa [#allocation15], 0
    %21 = vsyncpa [#allocation4], 0
    // Predicated region
    $region2: #{deep_decoder_forward.1} parent=1 // pred_check
      _
    $region3: #{deep_decoder_forward.1} parent=1 // pred_check_branch
      %23 = sbr.rel (0) target = $region5
    $region4: #{deep_decoder_forward.1} parent=1 // pred_region
      _
    $region5: #{deep_decoder_forward.1} parent=1 // pred_fallthru
      _
    // Predicated region
    $region6: #{deep_decoder_forward.1} parent=1 // pred_check
      _
    $region7: #{deep_decoder_forward.1} parent=1 // pred_check_branch
      %25 = sbr.rel (0) target = $region9
    $region8: #{deep_decoder_forward.1} parent=1 // pred_region
      %s27 = ssub.s32 1024, 1024
      %28 = vsyncadd [#allocation3], %s27
      %s29 = sshll.u32 [#allocation2], 4
      %s30 = int_to_ptr.vmem [resolvable:$true] %s29
      %35 = dma.hbm_to_vmem [thread:$0]  %s1, 1024, %s30, [#allocation3], 64, 64, 4
    $region9: #{deep_decoder_forward.1} parent=1 // pred_fallthru
      _
    // Predicated region
    $region10: #{deep_decoder_forward.1} parent=1 // pred_check
      _
    $region11: #{deep_decoder_forward.1} parent=1 // pred_check_branch
      %37 = sbr.rel (0) target = $region13
    $region12: #{deep_decoder_forward.1} parent=1 // pred_region
      %s39 = ssub.s32 64, 64
      %40 = vsyncadd [#allocation6], %s39
      %s42 = sshll.u32 [#allocation5], 4
      %s43 = int_to_ptr.vmem [resolvable:$true] %s42
      %45 = dma.hbm_to_vmem [thread:$0]  %s2, 64, %s43, [#allocation6]
    $region13: #{deep_decoder_forward.1} parent=1 // pred_fallthru
      _
    // Predicated region
    $region14: #{deep_decoder_forward.1} parent=1 // pred_check
      _
    $region15: #{deep_decoder_forward.1} parent=1 // pred_check_branch
      %47 = sbr.rel (0) target = $region17
    $region16: #{deep_decoder_forward.1} parent=1 // pred_region
      %s49 = ssub.s32 2048, 2048
      %50 = vsyncadd [#allocation6], %s49
      %s51 = sshll.u32 [#allocation7], 4
      %s52 = int_to_ptr.vmem [resolvable:$true] %s51
      %57 = dma.hbm_to_vmem [thread:$0]  %s3, 2048, %s52, [#allocation6], 128, 128, 8
    $region17: #{deep_decoder_forward.1} parent=1 // pred_fallthru
      _
    // Predicated region
    $region18: #{deep_decoder_forward.1} parent=1 // pred_check
      _
    $region19: #{deep_decoder_forward.1} parent=1 // pred_check_branch
      %59 = sbr.rel (0) target = $region21
    $region20: #{deep_decoder_forward.1} parent=1 // pred_region
      %s61 = ssub.s32 128, 128
      %62 = vsyncadd [#allocation9], %s61
      %s64 = sshll.u32 [#allocation8], 4
      %s65 = int_to_ptr.vmem [resolvable:$true] %s64
      %67 = dma.hbm_to_vmem [thread:$0]  %s4, 128, %s65, [#allocation9]
    $region21: #{deep_decoder_forward.1} parent=1 // pred_fallthru
      _
    // Predicated region
    $region22: #{deep_decoder_forward.1} parent=1 // pred_check
      _
    $region23: #{deep_decoder_forward.1} parent=1 // pred_check_branch
      %69 = sbr.rel (0) target = $region25
    $region24: #{deep_decoder_forward.1} parent=1 // pred_region
      %s71 = ssub.s32 8192, 8192
      %72 = vsyncadd [#allocation9], %s71
      %s73 = sshll.u32 [#allocation10], 4
      %s74 = int_to_ptr.vmem [resolvable:$true] %s73
      %79 = dma.hbm_to_vmem [thread:$0]  %s5, 8192, %s74, [#allocation9], 256, 256, 16
    $region25: #{deep_decoder_forward.1} parent=1 // pred_fallthru
      _
    // Predicated region
    $region26: #{deep_decoder_forward.1} parent=1 // pred_check
      _
    $region27: #{deep_decoder_forward.1} parent=1 // pred_check_branch
      %81 = sbr.rel (0) target = $region29
    $region28: #{deep_decoder_forward.1} parent=1 // pred_region
      _
    $region29: #{deep_decoder_forward.1} parent=1 // pred_fallthru
      _
    // Predicated region
    $region30: #{deep_decoder_forward.1} parent=1 // pred_check
      _
    $region31: #{deep_decoder_forward.1} parent=1 // pred_check_branch
      %83 = sbr.rel (0) target = $region33
    $region32: #{deep_decoder_forward.1} parent=1 // pred_region
      %s85 = ssub.s32 32768, 32768
      %86 = vsyncadd [#allocation12], %s85
      %s87 = sshll.u32 [#allocation11], 4
      %s88 = int_to_ptr.vmem [resolvable:$true] %s87
      %93 = dma.hbm_to_vmem [thread:$0]  %s7, 32768, %s88, [#allocation12], 512, 512, 32
    $region33: #{deep_decoder_forward.1} parent=1 // pred_fallthru
      _
    // Predicated region
    $region34: #{deep_decoder_forward.1} parent=1 // pred_check
      _
    $region35: #{deep_decoder_forward.1} parent=1 // pred_check_branch
      %95 = sbr.rel (0) target = $region37
    $region36: #{deep_decoder_forward.1} parent=1 // pred_region
      _
    $region37: #{deep_decoder_forward.1} parent=1 // pred_fallthru
      _
    // Predicated region
    $region38: #{deep_decoder_forward.1} parent=1 // pred_check
      _
    $region39: #{deep_decoder_forward.1} parent=1 // pred_check_branch
      %97 = sbr.rel (0) target = $region41
    $region40: #{deep_decoder_forward.1} parent=1 // pred_region
      %s99 = ssub.s32 24576, 24576
      %100 = vsyncadd [#allocation12], %s99
      %s101 = sshll.u32 [#allocation13], 4
      %s102 = int_to_ptr.vmem [resolvable:$true] %s101
      %107 = dma.hbm_to_vmem [thread:$0]  %s9, 24576, %s102, [#allocation12], 192, 192, 12
    $region41: #{deep_decoder_forward.1} parent=1 // pred_fallthru
      _
    // Predicated region
    $region42: #{deep_decoder_forward.1} parent=1 // pred_check
      _
    $region43: #{deep_decoder_forward.1} parent=1 // pred_check_branch
      %109 = sbr.rel (0) target = $region45
    $region44: #{deep_decoder_forward.1} parent=1 // pred_region
      %s111 = ssub.s32 48, 48
      %112 = vsyncadd [#allocation15], %s111
      %s114 = sshll.u32 [#allocation14], 4
      %s115 = int_to_ptr.vmem [resolvable:$true] %s114
      %117 = dma.hbm_to_vmem [thread:$0]  %s10, 48, %s115, [#allocation15]
    $region45: #{deep_decoder_forward.1} parent=1 // pred_fallthru
      _
    // Predicated region
    $region46: #{deep_decoder_forward.1} parent=1 // pred_check
      _
    $region47: #{deep_decoder_forward.1} parent=1 // pred_check_branch
      %119 = sbr.rel (0) target = $region49
    $region48: #{deep_decoder_forward.1} parent=1 // pred_region
      %120 = dma.done [#allocation3], 1024
    $region49: #{deep_decoder_forward.1} parent=1 // pred_fallthru
      _
    // Predicated region
    $region50: #{deep_decoder_forward.1} parent=1 // pred_check
      _
    $region51: #{deep_decoder_forward.1} parent=1 // pred_check_branch
      %122 = sbr.rel (0) target = $region53
    $region52: #{deep_decoder_forward.1} parent=1 // pred_region
      %123 = dma.done [#allocation6], 64
    $region53: #{deep_decoder_forward.1} parent=1 // pred_fallthru
      _
    // Predicated region
    $region54: #{deep_decoder_forward.1} parent=1 // pred_check
      _
    $region55: #{deep_decoder_forward.1} parent=1 // pred_check_branch
      %125 = sbr.rel (0) target = $region57
    $region56: #{deep_decoder_forward.1} parent=1 // pred_region
      %126 = dma.done [#allocation6], 2048
    $region57: #{deep_decoder_forward.1} parent=1 // pred_fallthru
      _
    // Predicated region
    $region58: #{deep_decoder_forward.1} parent=1 // pred_check
      _
    $region59: #{deep_decoder_forward.1} parent=1 // pred_check_branch
      %128 = sbr.rel (0) target = $region61
    $region60: #{deep_decoder_forward.1} parent=1 // pred_region
      %129 = dma.done [#allocation9], 128
    $region61: #{deep_decoder_forward.1} parent=1 // pred_fallthru
      _
    // Predicated region
    $region62: #{deep_decoder_forward.1} parent=1 // pred_check
      _
    $region63: #{deep_decoder_forward.1} parent=1 // pred_check_branch
      %131 = sbr.rel (0) target = $region65
    $region64: #{deep_decoder_forward.1} parent=1 // pred_region
      %132 = dma.done [#allocation9], 8192
    $region65: #{deep_decoder_forward.1} parent=1 // pred_fallthru
      _
    // Predicated region
    $region66: #{deep_decoder_forward.1} parent=1 // pred_check
      _
    $region67: #{deep_decoder_forward.1} parent=1 // pred_check_branch
      %134 = sbr.rel (0) target = $region69
    $region68: #{deep_decoder_forward.1} parent=1 // pred_region
      %135 = dma.done [#allocation12], 32768
    $region69: #{deep_decoder_forward.1} parent=1 // pred_fallthru
      _
    // Predicated region
    $region70: #{deep_decoder_forward.1} parent=1 // pred_check
      _
    $region71: #{deep_decoder_forward.1} parent=1 // pred_check_branch
      %137 = sbr.rel (0) target = $region73
    $region72: #{deep_decoder_forward.1} parent=1 // pred_region
      %138 = dma.done [#allocation12], 24576
    $region73: #{deep_decoder_forward.1} parent=1 // pred_fallthru
      _
    // Predicated region
    $region74: #{deep_decoder_forward.1} parent=1 // pred_check
      _
    $region75: #{deep_decoder_forward.1} parent=1 // pred_check_branch
      %140 = sbr.rel (0) target = $region77
    $region76: #{deep_decoder_forward.1} parent=1 // pred_region
      %141 = dma.done [#allocation15], 48
    $region77: #{deep_decoder_forward.1} parent=1 // pred_fallthru
      _
    %v143 = vld [vmem:[%s0] sm:$0xf]
    %v144 = vld [vmem:[#allocation5] sm:$0x7]
    %v145 = vld [vmem:[#allocation2] sm:$0xf]
    %v146 = vld [vmem:[#allocation2 + $0x4] sm:$0xf]
    %v147 = vld [vmem:[#allocation2 + $0x8] sm:$0xf]
    %v148 = vld [vmem:[#allocation2 + $0xc] sm:$0xf]
    %v149 = vld [vmem:[#allocation2 + $0x10] sm:$0xf]
    %v150 = vld [vmem:[#allocation2 + $0x14] sm:$0xf]
    %v151 = vld [vmem:[#allocation2 + $0x18] sm:$0xf]
    %v152 = vld [vmem:[#allocation2 + $0x1c] sm:$0xf]
    %v153 = vld [vmem:[#allocation2 + $0x20] sm:$0xf]
    %v154 = vld [vmem:[#allocation2 + $0x24] sm:$0xf]
    %v155 = vld [vmem:[#allocation2 + $0x28] sm:$0xf]
    %v156 = vld [vmem:[#allocation2 + $0x2c] sm:$0xf]
    %v157 = vld [vmem:[#allocation2 + $0x30] sm:$0xf]
    %v158 = vld [vmem:[#allocation2 + $0x34] sm:$0xf]
    %v159 = vld [vmem:[#allocation2 + $0x38] sm:$0xf]
    %v160 = vld [vmem:[#allocation2 + $0x3c] sm:$0xf]
    %v161 = vlaneseq
    %v162 = vshrl.u32 %v161, 7
    %v163 = vsub.s32 0, %v162
    %v164 = vrot.slane %v144, %v163
    %v181 = vunpack.c.l.b16 %v145
    %v182 = vunpack.c.l.b16 %v146
    %v183 = vunpack.c.l.b16 %v147
    %v184 = vunpack.c.l.b16 %v148
    %v185 = vunpack.c.l.b16 %v149
    %v186 = vunpack.c.l.b16 %v150
    %v187 = vunpack.c.l.b16 %v151
    %v188 = vunpack.c.l.b16 %v152
    %v189 = vunpack.c.l.b16 %v153
    %v190 = vunpack.c.l.b16 %v154
    %v191 = vunpack.c.l.b16 %v155
    %v192 = vunpack.c.l.b16 %v156
    %v193 = vunpack.c.l.b16 %v157
    %v194 = vunpack.c.l.b16 %v158
    %v195 = vunpack.c.l.b16 %v159
    %v196 = vunpack.c.l.b16 %v160
    %v197 = vpack.c.b16 %v182, %v181
    %v198 = vpack.c.b16 %v184, %v183
    %v199 = vpack.c.b16 %v186, %v185
    %v200 = vpack.c.b16 %v188, %v187
    %v201 = vpack.c.b16 %v190, %v189
    %v202 = vpack.c.b16 %v192, %v191
    %v203 = vpack.c.b16 %v194, %v193
    %v204 = vpack.c.b16 %v196, %v195
    %213 = vmatprep.subr.bf16.mxu0 0
    %214 = vmatpush1.bf16.msra.mxu0 %v197
    %215 = vmatprep.subr.bf16.mxu0 0
    %216 = vmatpush1.bf16.msra.mxu0 %v198
    %217 = vmatprep.subr.bf16.mxu0 0
    %218 = vmatpush1.bf16.msra.mxu0 %v199
    %219 = vmatprep.subr.bf16.mxu0 0
    %220 = vmatpush1.bf16.msra.mxu0 %v200
    %221 = vmatprep.subr.bf16.mxu0 0
    %222 = vmatpush1.bf16.msra.mxu0 %v201
    %223 = vmatprep.subr.bf16.mxu0 0
    %224 = vmatpush1.bf16.msra.mxu0 %v202
    %225 = vmatprep.subr.bf16.mxu0 0
    %226 = vmatpush1.bf16.msra.mxu0 %v203
    %227 = vmatprep.subr.bf16.mxu0 0
    %228 = vmatpush1.bf16.msra.mxu0 %v204
    %229 = vmatprep.subr.bf16.mxu0 0
    %230 = vmatpush1.bf16.msra.mxu0 0
    %231 = vmatprep.subr.bf16.mxu0 0
    %232 = vmatpush1.bf16.msra.mxu0 0
    %233 = vmatprep.subr.bf16.mxu0 0
    %234 = vmatpush1.bf16.msra.mxu0 0
    %235 = vmatprep.subr.bf16.mxu0 0
    %236 = vmatpush1.bf16.msra.mxu0 0
    %237 = vmatprep.subr.bf16.mxu0 0
    %238 = vmatpush1.bf16.msra.mxu0 0
    %239 = vmatprep.subr.bf16.mxu0 0
    %240 = vmatpush1.bf16.msra.mxu0 0
    %241 = vmatprep.subr.bf16.mxu0 0
    %242 = vmatpush1.bf16.msra.mxu0 0
    %243 = vmatprep.subr.bf16.mxu0 0
    %244 = vmatpush1.bf16.msra.mxu0 0
    %245 = vmatprep.mubr.bf16.mxu0 0
    %246 = vmatmul.mubr.bf16.gmra.mrb[0].mxu0 %v143
    %v247 = vpop.f32.mrb[0].mxu0
    %v248 = vadd.f32 %v164, %v247
    %v249 = vpop.f32.mrb[0].mxu0
    %v250 = vpop.f32.mrb[0].mxu0
    %v251 = vpop.f32.mrb[0].mxu0
    %252 = vdwg.mxu0
    %253 = vadd.xlane.f32.xlu0 %v248
    %v254 = vpop.xlane.xlu0 %253
    %v255 = vmul.f32 %v248, %v248
    %256 = vadd.xlane.f32.xlu0 %v255
    %v257 = vpop.xlane.xlu0 %256
    %v258 = vmul.f32 %v254, 0.0078125
    %v259 = vmul.f32 %v257, 0.0078125
    %v260 = vmul.f32 %v258, %v258
    %v261 = vsub.f32 %v259, %v260
    %v262 = vadd.f32 %v261, 1e-05
    %v263 = vrsqrt.pop %v262
    %v264 = vsub.f32 %v248, %v258
    %v265 = vmul.f32 %v264, %v263
    %v266 = vlaneseq
    %v267 = vshrl.u32 %v266, 7
    %v268 = vsub.s32 1, %v267
    %v269 = vrot.slane %v144, %v268
    %v270 = vmul.f32 %v265, %v269
    %v271 = vlaneseq
    %v272 = vshrl.u32 %v271, 7
    %v273 = vsub.s32 2, %v272
    %v274 = vrot.slane %v144, %v273
    %v275 = vadd.f32 %v270, %v274
    %v276 = vmax.f32 %v275, 0.0
    %v277 = vpack.c.bf16 %v276, %v276
    %v278 = vld [vmem:[#allocation8] sm:$0x77]
    %v279 = vld [vmem:[#allocation7] sm:$0xff]
    %v280 = vld [vmem:[#allocation7 + $0x8] sm:$0xff]
    %v281 = vld [vmem:[#allocation7 + $0x10] sm:$0xff]
    %v282 = vld [vmem:[#allocation7 + $0x18] sm:$0xff]
    %v283 = vld [vmem:[#allocation7 + $0x20] sm:$0xff]
    %v284 = vld [vmem:[#allocation7 + $0x28] sm:$0xff]
    %v285 = vld [vmem:[#allocation7 + $0x30] sm:$0xff]
    %v286 = vld [vmem:[#allocation7 + $0x38] sm:$0xff]
    %v287 = vld [vmem:[#allocation7 + $0x40] sm:$0xff]
    %v288 = vld [vmem:[#allocation7 + $0x48] sm:$0xff]
    %v289 = vld [vmem:[#allocation7 + $0x50] sm:$0xff]
    %v290 = vld [vmem:[#allocation7 + $0x58] sm:$0xff]
    %v291 = vld [vmem:[#allocation7 + $0x60] sm:$0xff]
    %v292 = vld [vmem:[#allocation7 + $0x68] sm:$0xff]
    %v293 = vld [vmem:[#allocation7 + $0x70] sm:$0xff]
    %v294 = vld [vmem:[#allocation7 + $0x78] sm:$0xff]
    %v296 = vlaneseq
    %v297 = vshrl.u32 %v296, 7
    %v298 = vsub.s32 0, %v297
    %v299 = vrot.slane %v278, %v298
    %v300 = vlaneseq
    %v301 = vshrl.u32 %v300, 7
    %v302 = vsub.s32 4, %v301
    %v303 = vrot.slane %v278, %v302
    %v306 = vlaneseq
    %v307 = vshrl.u32 %v306, 7
    %v308 = vsub.s32 0, %v307
    %v309 = vrot.slane %v299, %v308
    %v310 = vlaneseq
    %v311 = vshrl.u32 %v310, 7
    %v312 = vsub.s32 0, %v311
    %v313 = vrot.slane %v303, %v312
    %v330 = vunpack.c.l.b16 %v279
    %v331 = vunpack.c.h.b16 %v279
    %v332 = vunpack.c.l.b16 %v280
    %v333 = vunpack.c.h.b16 %v280
    %v334 = vunpack.c.l.b16 %v281
    %v335 = vunpack.c.h.b16 %v281
    %v336 = vunpack.c.l.b16 %v282
    %v337 = vunpack.c.h.b16 %v282
    %v338 = vunpack.c.l.b16 %v283
    %v339 = vunpack.c.h.b16 %v283
    %v340 = vunpack.c.l.b16 %v284
    %v341 = vunpack.c.h.b16 %v284
    %v342 = vunpack.c.l.b16 %v285
    %v343 = vunpack.c.h.b16 %v285
    %v344 = vunpack.c.l.b16 %v286
    %v345 = vunpack.c.h.b16 %v286
    %v346 = vunpack.c.l.b16 %v287
    %v347 = vunpack.c.h.b16 %v287
    %v348 = vunpack.c.l.b16 %v288
    %v349 = vunpack.c.h.b16 %v288
    %v350 = vunpack.c.l.b16 %v289
    %v351 = vunpack.c.h.b16 %v289
    %v352 = vunpack.c.l.b16 %v290
    %v353 = vunpack.c.h.b16 %v290
    %v354 = vunpack.c.l.b16 %v291
    %v355 = vunpack.c.h.b16 %v291
    %v356 = vunpack.c.l.b16 %v292
    %v357 = vunpack.c.h.b16 %v292
    %v358 = vunpack.c.l.b16 %v293
    %v359 = vunpack.c.h.b16 %v293
    %v360 = vunpack.c.l.b16 %v294
    %v361 = vunpack.c.h.b16 %v294
    %v362 = vpack.c.b16 %v332, %v330
    %v363 = vpack.c.b16 %v333, %v331
    %v364 = vpack.c.b16 %v336, %v334
    %v365 = vpack.c.b16 %v337, %v335
    %v366 = vpack.c.b16 %v340, %v338
    %v367 = vpack.c.b16 %v341, %v339
    %v368 = vpack.c.b16 %v344, %v342
    %v369 = vpack.c.b16 %v345, %v343
    %v370 = vpack.c.b16 %v348, %v346
    %v371 = vpack.c.b16 %v349, %v347
    %v372 = vpack.c.b16 %v352, %v350
    %v373 = vpack.c.b16 %v353, %v351
    %v374 = vpack.c.b16 %v356, %v354
    %v375 = vpack.c.b16 %v357, %v355
    %v376 = vpack.c.b16 %v360, %v358
    %v377 = vpack.c.b16 %v361, %v359
    %394 = vmatprep.subr.bf16.mxu0 %v363
    %395 = vmatpush1.bf16.msra.mxu0 %v362
    %396 = vmatprep.subr.bf16.mxu0 %v365
    %397 = vmatpush1.bf16.msra.mxu0 %v364
    %398 = vmatprep.subr.bf16.mxu0 %v367
    %399 = vmatpush1.bf16.msra.mxu0 %v366
    %400 = vmatprep.subr.bf16.mxu0 %v369
    %401 = vmatpush1.bf16.msra.mxu0 %v368
    %402 = vmatprep.subr.bf16.mxu0 %v371
    %403 = vmatpush1.bf16.msra.mxu0 %v370
    %404 = vmatprep.subr.bf16.mxu0 %v373
    %405 = vmatpush1.bf16.msra.mxu0 %v372
    %406 = vmatprep.subr.bf16.mxu0 %v375
    %407 = vmatpush1.bf16.msra.mxu0 %v374
    %408 = vmatprep.subr.bf16.mxu0 %v377
    %409 = vmatpush1.bf16.msra.mxu0 %v376
    %410 = vmatprep.subr.bf16.mxu0 0
    %411 = vmatpush1.bf16.msra.mxu0 0
    %412 = vmatprep.subr.bf16.mxu0 0
    %413 = vmatpush1.bf16.msra.mxu0 0
    %414 = vmatprep.subr.bf16.mxu0 0
    %415 = vmatpush1.bf16.msra.mxu0 0
    %416 = vmatprep.subr.bf16.mxu0 0
    %417 = vmatpush1.bf16.msra.mxu0 0
    %418 = vmatprep.subr.bf16.mxu0 0
    %419 = vmatpush1.bf16.msra.mxu0 0
    %420 = vmatprep.subr.bf16.mxu0 0
    %421 = vmatpush1.bf16.msra.mxu0 0
    %422 = vmatprep.subr.bf16.mxu0 0
    %423 = vmatpush1.bf16.msra.mxu0 0
    %424 = vmatprep.subr.bf16.mxu0 0
    %425 = vmatpush1.bf16.msra.mxu0 0
    %426 = vmatprep.mubr.bf16.mxu0 0
    %427 = vmatmul.mubr.bf16.gmra.mrb[0].mxu0 %v277
    %v428 = vpop.f32.mrb[0].mxu0
    %v429 = vadd.f32 %v309, %v428
    %v430 = vpop.f32.mrb[0].mxu0
    %v431 = vadd.f32 %v313, %v430
    %v432 = vpop.f32.mrb[0].mxu0
    %v433 = vpop.f32.mrb[0].mxu0
    %434 = vdwg.mxu0
    %v435 = vadd.f32 %v429, %v431
    %436 = vadd.xlane.f32.xlu0 %v435
    %v437 = vpop.xlane.xlu0 %436
    %v438 = vmul.f32 %v429, %v429
    %v439 = vmul.f32 %v431, %v431
    %v440 = vadd.f32 %v438, %v439
    %441 = vadd.xlane.f32.xlu0 %v440
    %v442 = vpop.xlane.xlu0 %441
    %v443 = vmul.f32 %v437, 0.00390625
    %v444 = vmul.f32 %v442, 0.00390625
    %v445 = vmul.f32 %v443, %v443
    %v446 = vsub.f32 %v444, %v445
    %v447 = vadd.f32 %v446, 1e-05
    %v448 = vrsqrt.pop %v447
    %v449 = vsub.f32 %v429, %v443
    %v450 = vsub.f32 %v431, %v443
    %v451 = vmul.f32 %v449, %v448
    %v452 = vmul.f32 %v450, %v448
    %v453 = vlaneseq
    %v454 = vshrl.u32 %v453, 7
    %v455 = vsub.s32 1, %v454
    %v456 = vrot.slane %v278, %v455
    %v457 = vlaneseq
    %v458 = vshrl.u32 %v457, 7
    %v459 = vsub.s32 5, %v458
    %v460 = vrot.slane %v278, %v459
    %v463 = vlaneseq
    %v464 = vshrl.u32 %v463, 7
    %v465 = vsub.s32 1, %v464
    %v466 = vrot.slane %v456, %v465
    %v467 = vlaneseq
    %v468 = vshrl.u32 %v467, 7
    %v469 = vsub.s32 1, %v468
    %v470 = vrot.slane %v460, %v469
    %v471 = vmul.f32 %v451, %v466
    %v472 = vmul.f32 %v452, %v470
    %v473 = vlaneseq
    %v474 = vshrl.u32 %v473, 7
    %v475 = vsub.s32 2, %v474
    %v476 = vrot.slane %v278, %v475
    %v477 = vlaneseq
    %v478 = vshrl.u32 %v477, 7
    %v479 = vsub.s32 6, %v478
    %v480 = vrot.slane %v278, %v479
    %v483 = vlaneseq
    %v484 = vshrl.u32 %v483, 7
    %v485 = vsub.s32 2, %v484
    %v486 = vrot.slane %v476, %v485
    %v487 = vlaneseq
    %v488 = vshrl.u32 %v487, 7
    %v489 = vsub.s32 2, %v488
    %v490 = vrot.slane %v480, %v489
    %v491 = vadd.f32 %v471, %v486
    %v492 = vadd.f32 %v472, %v490
    %v493 = vmax.f32 %v491, 0.0
    %v494 = vmax.f32 %v492, 0.0
    %v495 = vpack.c.bf16 %v493, %v493
    %v496 = vpack.c.bf16 %v494, %v494
    %v497 = vld [vmem:[%s6] sm:$0x77]
    %v498 = vld [vmem:[%s6 + $0x8] sm:$0x77]
    %v499 = vld [vmem:[#allocation10] sm:$0xff]
    %v500 = vld [vmem:[#allocation10 + $0x8] sm:$0xff]
    %v501 = vld [vmem:[#allocation10 + $0x10] sm:$0xff]
    %v502 = vld [vmem:[#allocation10 + $0x18] sm:$0xff]
    %v503 = vld [vmem:[#allocation10 + $0x20] sm:$0xff]
    %v504 = vld [vmem:[#allocation10 + $0x28] sm:$0xff]
    %v505 = vld [vmem:[#allocation10 + $0x30] sm:$0xff]
    %v506 = vld [vmem:[#allocation10 + $0x38] sm:$0xff]
    %v507 = vld [vmem:[#allocation10 + $0x40] sm:$0xff]
    %v508 = vld [vmem:[#allocation10 + $0x48] sm:$0xff]
    %v509 = vld [vmem:[#allocation10 + $0x50] sm:$0xff]
    %v510 = vld [vmem:[#allocation10 + $0x58] sm:$0xff]
    %v511 = vld [vmem:[#allocation10 + $0x60] sm:$0xff]
    %v512 = vld [vmem:[#allocation10 + $0x68] sm:$0xff]
    %v513 = vld [vmem:[#allocation10 + $0x70] sm:$0xff]
    %v514 = vld [vmem:[#allocation10 + $0x78] sm:$0xff]
    %v515 = vld [vmem:[#allocation10 + $0x80] sm:$0xff]
    %v516 = vld [vmem:[#allocation10 + $0x88] sm:$0xff]
    %v517 = vld [vmem:[#allocation10 + $0x90] sm:$0xff]
    %v518 = vld [vmem:[#allocation10 + $0x98] sm:$0xff]
    %v519 = vld [vmem:[#allocation10 + $0xa0] sm:$0xff]
    %v520 = vld [vmem:[#allocation10 + $0xa8] sm:$0xff]
    %v521 = vld [vmem:[#allocation10 + $0xb0] sm:$0xff]
    %v522 = vld [vmem:[#allocation10 + $0xb8] sm:$0xff]
    %v523 = vld [vmem:[#allocation10 + $0xc0] sm:$0xff]
    %v524 = vld [vmem:[#allocation10 + $0xc8] sm:$0xff]
    %v525 = vld [vmem:[#allocation10 + $0xd0] sm:$0xff]
    %v526 = vld [vmem:[#allocation10 + $0xd8] sm:$0xff]
    %v527 = vld [vmem:[#allocation10 + $0xe0] sm:$0xff]
    %v528 = vld [vmem:[#allocation10 + $0xe8] sm:$0xff]
    %v529 = vld [vmem:[#allocation10 + $0xf0] sm:$0xff]
    %v530 = vld [vmem:[#allocation10 + $0xf8] sm:$0xff]
    %v531 = vld [vmem:[#allocation10 + $0x100] sm:$0xff]
    %v532 = vld [vmem:[#allocation10 + $0x108] sm:$0xff]
    %v533 = vld [vmem:[#allocation10 + $0x110] sm:$0xff]
    %v534 = vld [vmem:[#allocation10 + $0x118] sm:$0xff]
    %v535 = vld [vmem:[#allocation10 + $0x120] sm:$0xff]
    %v536 = vld [vmem:[#allocation10 + $0x128] sm:$0xff]
    %v537 = vld [vmem:[#allocation10 + $0x130] sm:$0xff]
    %v538 = vld [vmem:[#allocation10 + $0x138] sm:$0xff]
    %v539 = vld [vmem:[#allocation10 + $0x140] sm:$0xff]
    %v540 = vld [vmem:[#allocation10 + $0x148] sm:$0xff]
    %v541 = vld [vmem:[#allocation10 + $0x150] sm:$0xff]
    %v542 = vld [vmem:[#allocation10 + $0x158] sm:$0xff]
    %v543 = vld [vmem:[#allocation10 + $0x160] sm:$0xff]
    %v544 = vld [vmem:[#allocation10 + $0x168] sm:$0xff]
    %v545 = vld [vmem:[#allocation10 + $0x170] sm:$0xff]
    %v546 = vld [vmem:[#allocation10 + $0x178] sm:$0xff]
    %v547 = vld [vmem:[#allocation10 + $0x180] sm:$0xff]
    %v548 = vld [vmem:[#allocation10 + $0x188] sm:$0xff]
    %v549 = vld [vmem:[#allocation10 + $0x190] sm:$0xff]
    %v550 = vld [vmem:[#allocation10 + $0x198] sm:$0xff]
    %v551 = vld [vmem:[#allocation10 + $0x1a0] sm:$0xff]
    %v552 = vld [vmem:[#allocation10 + $0x1a8] sm:$0xff]
    %v553 = vld [vmem:[#allocation10 + $0x1b0] sm:$0xff]
    %v554 = vld [vmem:[#allocation10 + $0x1b8] sm:$0xff]
    %v555 = vld [vmem:[#allocation10 + $0x1c0] sm:$0xff]
    %v556 = vld [vmem:[#allocation10 + $0x1c8] sm:$0xff]
    %v557 = vld [vmem:[#allocation10 + $0x1d0] sm:$0xff]
    %v558 = vld [vmem:[#allocation10 + $0x1d8] sm:$0xff]
    %v559 = vld [vmem:[#allocation10 + $0x1e0] sm:$0xff]
    %v560 = vld [vmem:[#allocation10 + $0x1e8] sm:$0xff]
    %v561 = vld [vmem:[#allocation10 + $0x1f0] sm:$0xff]
    %v562 = vld [vmem:[#allocation10 + $0x1f8] sm:$0xff]
    %v565 = vlaneseq
    %v566 = vshrl.u32 %v565, 7
    %v567 = vsub.s32 0, %v566
    %v568 = vrot.slane %v497, %v567
    %v569 = vlaneseq
    %v570 = vshrl.u32 %v569, 7
    %v571 = vsub.s32 4, %v570
    %v572 = vrot.slane %v497, %v571
    %v573 = vlaneseq
    %v574 = vshrl.u32 %v573, 7
    %v575 = vsub.s32 0, %v574
    %v576 = vrot.slane %v498, %v575
    %v577 = vlaneseq
    %v578 = vshrl.u32 %v577, 7
    %v579 = vsub.s32 4, %v578
    %v580 = vrot.slane %v498, %v579
    %v585 = vlaneseq
    %v586 = vshrl.u32 %v585, 7
    %v587 = vsub.s32 0, %v586
    %v588 = vrot.slane %v568, %v587
    %v589 = vlaneseq
    %v590 = vshrl.u32 %v589, 7
    %v591 = vsub.s32 0, %v590
    %v592 = vrot.slane %v572, %v591
    %v593 = vlaneseq
    %v594 = vshrl.u32 %v593, 7
    %v595 = vsub.s32 0, %v594
    %v596 = vrot.slane %v576, %v595
    %v597 = vlaneseq
    %v598 = vshrl.u32 %v597, 7
    %v599 = vsub.s32 0, %v598
    %v600 = vrot.slane %v580, %v599
    %v665 = vunpack.c.l.b16 %v499
    %v666 = vunpack.c.h.b16 %v499
    %v667 = vunpack.c.l.b16 %v500
    %v668 = vunpack.c.h.b16 %v500
    %v669 = vunpack.c.l.b16 %v501
    %v670 = vunpack.c.h.b16 %v501
    %v671 = vunpack.c.l.b16 %v502
    %v672 = vunpack.c.h.b16 %v502
    %v673 = vunpack.c.l.b16 %v503
    %v674 = vunpack.c.h.b16 %v503
    %v675 = vunpack.c.l.b16 %v504
    %v676 = vunpack.c.h.b16 %v504
    %v677 = vunpack.c.l.b16 %v505
    %v678 = vunpack.c.h.b16 %v505
    %v679 = vunpack.c.l.b16 %v506
    %v680 = vunpack.c.h.b16 %v506
    %v681 = vunpack.c.l.b16 %v507
    %v682 = vunpack.c.h.b16 %v507
    %v683 = vunpack.c.l.b16 %v508
    %v684 = vunpack.c.h.b16 %v508
    %v685 = vunpack.c.l.b16 %v509
    %v686 = vunpack.c.h.b16 %v509
    %v687 = vunpack.c.l.b16 %v510
    %v688 = vunpack.c.h.b16 %v510
    %v689 = vunpack.c.l.b16 %v511
    %v690 = vunpack.c.h.b16 %v511
    %v691 = vunpack.c.l.b16 %v512
    %v692 = vunpack.c.h.b16 %v512
    %v693 = vunpack.c.l.b16 %v513
    %v694 = vunpack.c.h.b16 %v513
    %v695 = vunpack.c.l.b16 %v514
    %v696 = vunpack.c.h.b16 %v514
    %v697 = vunpack.c.l.b16 %v515
    %v698 = vunpack.c.h.b16 %v515
    %v699 = vunpack.c.l.b16 %v516
    %v700 = vunpack.c.h.b16 %v516
    %v701 = vunpack.c.l.b16 %v517
    %v702 = vunpack.c.h.b16 %v517
    %v703 = vunpack.c.l.b16 %v518
    %v704 = vunpack.c.h.b16 %v518
    %v705 = vunpack.c.l.b16 %v519
    %v706 = vunpack.c.h.b16 %v519
    %v707 = vunpack.c.l.b16 %v520
    %v708 = vunpack.c.h.b16 %v520
    %v709 = vunpack.c.l.b16 %v521
    %v710 = vunpack.c.h.b16 %v521
    %v711 = vunpack.c.l.b16 %v522
    %v712 = vunpack.c.h.b16 %v522
    %v713 = vunpack.c.l.b16 %v523
    %v714 = vunpack.c.h.b16 %v523
    %v715 = vunpack.c.l.b16 %v524
    %v716 = vunpack.c.h.b16 %v524
    %v717 = vunpack.c.l.b16 %v525
    %v718 = vunpack.c.h.b16 %v525
    %v719 = vunpack.c.l.b16 %v526
    %v720 = vunpack.c.h.b16 %v526
    %v721 = vunpack.c.l.b16 %v527
    %v722 = vunpack.c.h.b16 %v527
    %v723 = vunpack.c.l.b16 %v528
    %v724 = vunpack.c.h.b16 %v528
    %v725 = vunpack.c.l.b16 %v529
    %v726 = vunpack.c.h.b16 %v529
    %v727 = vunpack.c.l.b16 %v530
    %v728 = vunpack.c.h.b16 %v530
    %v729 = vunpack.c.l.b16 %v531
    %v730 = vunpack.c.h.b16 %v531
    %v731 = vunpack.c.l.b16 %v532
    %v732 = vunpack.c.h.b16 %v532
    %v733 = vunpack.c.l.b16 %v533
    %v734 = vunpack.c.h.b16 %v533
    %v735 = vunpack.c.l.b16 %v534
    %v736 = vunpack.c.h.b16 %v534
    %v737 = vunpack.c.l.b16 %v535
    %v738 = vunpack.c.h.b16 %v535
    %v739 = vunpack.c.l.b16 %v536
    %v740 = vunpack.c.h.b16 %v536
    %v741 = vunpack.c.l.b16 %v537
    %v742 = vunpack.c.h.b16 %v537
    %v743 = vunpack.c.l.b16 %v538
    %v744 = vunpack.c.h.b16 %v538
    %v745 = vunpack.c.l.b16 %v539
    %v746 = vunpack.c.h.b16 %v539
    %v747 = vunpack.c.l.b16 %v540
    %v748 = vunpack.c.h.b16 %v540
    %v749 = vunpack.c.l.b16 %v541
    %v750 = vunpack.c.h.b16 %v541
    %v751 = vunpack.c.l.b16 %v542
    %v752 = vunpack.c.h.b16 %v542
    %v753 = vunpack.c.l.b16 %v543
    %v754 = vunpack.c.h.b16 %v543
    %v755 = vunpack.c.l.b16 %v544
    %v756 = vunpack.c.h.b16 %v544
    %v757 = vunpack.c.l.b16 %v545
    %v758 = vunpack.c.h.b16 %v545
    %v759 = vunpack.c.l.b16 %v546
    %v760 = vunpack.c.h.b16 %v546
    %v761 = vunpack.c.l.b16 %v547
    %v762 = vunpack.c.h.b16 %v547
    %v763 = vunpack.c.l.b16 %v548
    %v764 = vunpack.c.h.b16 %v548
    %v765 = vunpack.c.l.b16 %v549
    %v766 = vunpack.c.h.b16 %v549
    %v767 = vunpack.c.l.b16 %v550
    %v768 = vunpack.c.h.b16 %v550
    %v769 = vunpack.c.l.b16 %v551
    %v770 = vunpack.c.h.b16 %v551
    %v771 = vunpack.c.l.b16 %v552
    %v772 = vunpack.c.h.b16 %v552
    %v773 = vunpack.c.l.b16 %v553
    %v774 = vunpack.c.h.b16 %v553
    %v775 = vunpack.c.l.b16 %v554
    %v776 = vunpack.c.h.b16 %v554
    %v777 = vunpack.c.l.b16 %v555
    %v778 = vunpack.c.h.b16 %v555
    %v779 = vunpack.c.l.b16 %v556
    %v780 = vunpack.c.h.b16 %v556
    %v781 = vunpack.c.l.b16 %v557
    %v782 = vunpack.c.h.b16 %v557
    %v783 = vunpack.c.l.b16 %v558
    %v784 = vunpack.c.h.b16 %v558
    %v785 = vunpack.c.l.b16 %v559
    %v786 = vunpack.c.h.b16 %v559
    %v787 = vunpack.c.l.b16 %v560
    %v788 = vunpack.c.h.b16 %v560
    %v789 = vunpack.c.l.b16 %v561
    %v790 = vunpack.c.h.b16 %v561
    %v791 = vunpack.c.l.b16 %v562
    %v792 = vunpack.c.h.b16 %v562
    %v793 = vpack.c.b16 %v669, %v665
    %v794 = vpack.c.b16 %v670, %v666
    %v795 = vpack.c.b16 %v671, %v667
    %v796 = vpack.c.b16 %v672, %v668
    %v797 = vpack.c.b16 %v677, %v673
    %v798 = vpack.c.b16 %v678, %v674
    %v799 = vpack.c.b16 %v679, %v675
    %v800 = vpack.c.b16 %v680, %v676
    %v801 = vpack.c.b16 %v685, %v681
    %v802 = vpack.c.b16 %v686, %v682
    %v803 = vpack.c.b16 %v687, %v683
    %v804 = vpack.c.b16 %v688, %v684
    %v805 = vpack.c.b16 %v693, %v689
    %v806 = vpack.c.b16 %v694, %v690
    %v807 = vpack.c.b16 %v695, %v691
    %v808 = vpack.c.b16 %v696, %v692
    %v809 = vpack.c.b16 %v701, %v697
    %v810 = vpack.c.b16 %v702, %v698
    %v811 = vpack.c.b16 %v703, %v699
    %v812 = vpack.c.b16 %v704, %v700
    %v813 = vpack.c.b16 %v709, %v705
    %v814 = vpack.c.b16 %v710, %v706
    %v815 = vpack.c.b16 %v711, %v707
    %v816 = vpack.c.b16 %v712, %v708
    %v817 = vpack.c.b16 %v717, %v713
    %v818 = vpack.c.b16 %v718, %v714
    %v819 = vpack.c.b16 %v719, %v715
    %v820 = vpack.c.b16 %v720, %v716
    %v821 = vpack.c.b16 %v725, %v721
    %v822 = vpack.c.b16 %v726, %v722
    %v823 = vpack.c.b16 %v727, %v723
    %v824 = vpack.c.b16 %v728, %v724
    %v825 = vpack.c.b16 %v733, %v729
    %v826 = vpack.c.b16 %v734, %v730
    %v827 = vpack.c.b16 %v735, %v731
    %v828 = vpack.c.b16 %v736, %v732
    %v829 = vpack.c.b16 %v741, %v737
    %v830 = vpack.c.b16 %v742, %v738
    %v831 = vpack.c.b16 %v743, %v739
    %v832 = vpack.c.b16 %v744, %v740
    %v833 = vpack.c.b16 %v749, %v745
    %v834 = vpack.c.b16 %v750, %v746
    %v835 = vpack.c.b16 %v751, %v747
    %v836 = vpack.c.b16 %v752, %v748
    %v837 = vpack.c.b16 %v757, %v753
    %v838 = vpack.c.b16 %v758, %v754
    %v839 = vpack.c.b16 %v759, %v755
    %v840 = vpack.c.b16 %v760, %v756
    %v841 = vpack.c.b16 %v765, %v761
    %v842 = vpack.c.b16 %v766, %v762
    %v843 = vpack.c.b16 %v767, %v763
    %v844 = vpack.c.b16 %v768, %v764
    %v845 = vpack.c.b16 %v773, %v769
    %v846 = vpack.c.b16 %v774, %v770
    %v847 = vpack.c.b16 %v775, %v771
    %v848 = vpack.c.b16 %v776, %v772
    %v849 = vpack.c.b16 %v781, %v777
    %v850 = vpack.c.b16 %v782, %v778
    %v851 = vpack.c.b16 %v783, %v779
    %v852 = vpack.c.b16 %v784, %v780
    %v853 = vpack.c.b16 %v789, %v785
    %v854 = vpack.c.b16 %v790, %v786
    %v855 = vpack.c.b16 %v791, %v787
    %v856 = vpack.c.b16 %v792, %v788
    %921 = vmatprep.subr.bf16.mxu0 %v794
    %922 = vmatpush1.bf16.msra.mxu0 %v793
    %923 = vmatprep.subr.bf16.mxu0 %v798
    %924 = vmatpush1.bf16.msra.mxu0 %v797
    %925 = vmatprep.subr.bf16.mxu0 %v802
    %926 = vmatpush1.bf16.msra.mxu0 %v801
    %927 = vmatprep.subr.bf16.mxu0 %v806
    %928 = vmatpush1.bf16.msra.mxu0 %v805
    %929 = vmatprep.subr.bf16.mxu0 %v810
    %930 = vmatpush1.bf16.msra.mxu0 %v809
    %931 = vmatprep.subr.bf16.mxu0 %v814
    %932 = vmatpush1.bf16.msra.mxu0 %v813
    %933 = vmatprep.subr.bf16.mxu0 %v818
    %934 = vmatpush1.bf16.msra.mxu0 %v817
    %935 = vmatprep.subr.bf16.mxu0 %v822
    %936 = vmatpush1.bf16.msra.mxu0 %v821
    %937 = vmatprep.subr.bf16.mxu0 %v826
    %938 = vmatpush1.bf16.msra.mxu0 %v825
    %939 = vmatprep.subr.bf16.mxu0 %v830
    %940 = vmatpush1.bf16.msra.mxu0 %v829
    %941 = vmatprep.subr.bf16.mxu0 %v834
    %942 = vmatpush1.bf16.msra.mxu0 %v833
    %943 = vmatprep.subr.bf16.mxu0 %v838
    %944 = vmatpush1.bf16.msra.mxu0 %v837
    %945 = vmatprep.subr.bf16.mxu0 %v842
    %946 = vmatpush1.bf16.msra.mxu0 %v841
    %947 = vmatprep.subr.bf16.mxu0 %v846
    %948 = vmatpush1.bf16.msra.mxu0 %v845
    %949 = vmatprep.subr.bf16.mxu0 %v850
    %950 = vmatpush1.bf16.msra.mxu0 %v849
    %951 = vmatprep.subr.bf16.mxu0 %v854
    %952 = vmatpush1.bf16.msra.mxu0 %v853
    %953 = vmatprep.mubr.bf16.mxu0 %v496
    %954 = vmatmul.mubr.bf16.gmra.mrb[0].mxu0 %v495
    %v955 = vpop.f32.mrb[0].mxu0
    %v956 = vadd.f32 %v588, %v955
    %v957 = vpop.f32.mrb[0].mxu0
    %v958 = vadd.f32 %v592, %v957
    %v959 = vpop.f32.mrb[0].mxu0
    %v960 = vpop.f32.mrb[0].mxu0
    %961 = vdwg.mxu0
    %962 = vmatprep.subr.bf16.mxu0 %v796
    %963 = vmatpush1.bf16.msra.mxu0 %v795
    %964 = vmatprep.subr.bf16.mxu0 %v800
    %965 = vmatpush1.bf16.msra.mxu0 %v799
    %966 = vmatprep.subr.bf16.mxu0 %v804
    %967 = vmatpush1.bf16.msra.mxu0 %v803
    %968 = vmatprep.subr.bf16.mxu0 %v808
    %969 = vmatpush1.bf16.msra.mxu0 %v807
    %970 = vmatprep.subr.bf16.mxu0 %v812
    %971 = vmatpush1.bf16.msra.mxu0 %v811
    %972 = vmatprep.subr.bf16.mxu0 %v816
    %973 = vmatpush1.bf16.msra.mxu0 %v815
    %974 = vmatprep.subr.bf16.mxu0 %v820
    %975 = vmatpush1.bf16.msra.mxu0 %v819
    %976 = vmatprep.subr.bf16.mxu0 %v824
    %977 = vmatpush1.bf16.msra.mxu0 %v823
    %978 = vmatprep.subr.bf16.mxu0 %v828
    %979 = vmatpush1.bf16.msra.mxu0 %v827
    %980 = vmatprep.subr.bf16.mxu0 %v832
    %981 = vmatpush1.bf16.msra.mxu0 %v831
    %982 = vmatprep.subr.bf16.mxu0 %v836
    %983 = vmatpush1.bf16.msra.mxu0 %v835
    %984 = vmatprep.subr.bf16.mxu0 %v840
    %985 = vmatpush1.bf16.msra.mxu0 %v839
    %986 = vmatprep.subr.bf16.mxu0 %v844
    %987 = vmatpush1.bf16.msra.mxu0 %v843
    %988 = vmatprep.subr.bf16.mxu0 %v848
    %989 = vmatpush1.bf16.msra.mxu0 %v847
    %990 = vmatprep.subr.bf16.mxu0 %v852
    %991 = vmatpush1.bf16.msra.mxu0 %v851
    %992 = vmatprep.subr.bf16.mxu0 %v856
    %993 = vmatpush1.bf16.msra.mxu0 %v855
    %994 = vmatprep.mubr.bf16.mxu0 %v496
    %995 = vmatmul.mubr.bf16.gmra.mrb[0].mxu0 %v495
    %v996 = vpop.f32.mrb[0].mxu0
    %v997 = vadd.f32 %v596, %v996
    %v998 = vpop.f32.mrb[0].mxu0
    %v999 = vadd.f32 %v600, %v998
    %v1000 = vpop.f32.mrb[0].mxu0
    %v1001 = vpop.f32.mrb[0].mxu0
    %1002 = vdwg.mxu0
    %v1003 = vadd.f32 %v956, %v958
    %v1004 = vadd.f32 %v1003, %v997
    %v1005 = vadd.f32 %v1004, %v999
    %1006 = vadd.xlane.f32.xlu0 %v1005
    %v1007 = vpop.xlane.xlu0 %1006
    %v1008 = vmul.f32 %v956, %v956
    %v1009 = vmul.f32 %v958, %v958
    %v1010 = vmul.f32 %v997, %v997
    %v1011 = vmul.f32 %v999, %v999
    %v1012 = vadd.f32 %v1008, %v1009
    %v1013 = vadd.f32 %v1012, %v1010
    %v1014 = vadd.f32 %v1013, %v1011
    %1015 = vadd.xlane.f32.xlu0 %v1014
    %v1016 = vpop.xlane.xlu0 %1015
    %v1017 = vmul.f32 %v1007, 0.001953125
    %v1018 = vmul.f32 %v1016, 0.001953125
    %v1019 = vmul.f32 %v1017, %v1017
    %v1020 = vsub.f32 %v1018, %v1019
    %v1021 = vadd.f32 %v1020, 1e-05
    %v1022 = vrsqrt.pop %v1021
    %v1023 = vsub.f32 %v956, %v1017
    %v1024 = vsub.f32 %v958, %v1017
    %v1025 = vsub.f32 %v997, %v1017
    %v1026 = vsub.f32 %v999, %v1017
    %v1027 = vmul.f32 %v1023, %v1022
    %v1028 = vmul.f32 %v1024, %v1022
    %v1029 = vmul.f32 %v1025, %v1022
    %v1030 = vmul.f32 %v1026, %v1022
    %v1031 = vlaneseq
    %v1032 = vshrl.u32 %v1031, 7
    %v1033 = vsub.s32 1, %v1032
    %v1034 = vrot.slane %v497, %v1033
    %v1035 = vlaneseq
    %v1036 = vshrl.u32 %v1035, 7
    %v1037 = vsub.s32 5, %v1036
    %v1038 = vrot.slane %v497, %v1037
    %v1039 = vlaneseq
    %v1040 = vshrl.u32 %v1039, 7
    %v1041 = vsub.s32 1, %v1040
    %v1042 = vrot.slane %v498, %v1041
    %v1043 = vlaneseq
    %v1044 = vshrl.u32 %v1043, 7
    %v1045 = vsub.s32 5, %v1044
    %v1046 = vrot.slane %v498, %v1045
    %v1051 = vlaneseq
    %v1052 = vshrl.u32 %v1051, 7
    %v1053 = vsub.s32 1, %v1052
    %v1054 = vrot.slane %v1034, %v1053
    %v1055 = vlaneseq
    %v1056 = vshrl.u32 %v1055, 7
    %v1057 = vsub.s32 1, %v1056
    %v1058 = vrot.slane %v1038, %v1057
    %v1059 = vlaneseq
    %v1060 = vshrl.u32 %v1059, 7
    %v1061 = vsub.s32 1, %v1060
    %v1062 = vrot.slane %v1042, %v1061
    %v1063 = vlaneseq
    %v1064 = vshrl.u32 %v1063, 7
    %v1065 = vsub.s32 1, %v1064
    %v1066 = vrot.slane %v1046, %v1065
    %v1067 = vmul.f32 %v1027, %v1054
    %v1068 = vmul.f32 %v1028, %v1058
    %v1069 = vmul.f32 %v1029, %v1062
    %v1070 = vmul.f32 %v1030, %v1066
    %v1071 = vlaneseq
    %v1072 = vshrl.u32 %v1071, 7
    %v1073 = vsub.s32 2, %v1072
    %v1074 = vrot.slane %v497, %v1073
    %v1075 = vlaneseq
    %v1076 = vshrl.u32 %v1075, 7
    %v1077 = vsub.s32 6, %v1076
    %v1078 = vrot.slane %v497, %v1077
    %v1079 = vlaneseq
    %v1080 = vshrl.u32 %v1079, 7
    %v1081 = vsub.s32 2, %v1080
    %v1082 = vrot.slane %v498, %v1081
    %v1083 = vlaneseq
    %v1084 = vshrl.u32 %v1083, 7
    %v1085 = vsub.s32 6, %v1084
    %v1086 = vrot.slane %v498, %v1085
    %v1091 = vlaneseq
    %v1092 = vshrl.u32 %v1091, 7
    %v1093 = vsub.s32 2, %v1092
    %v1094 = vrot.slane %v1074, %v1093
    %v1095 = vlaneseq
    %v1096 = vshrl.u32 %v1095, 7
    %v1097 = vsub.s32 2, %v1096
    %v1098 = vrot.slane %v1078, %v1097
    %v1099 = vlaneseq
    %v1100 = vshrl.u32 %v1099, 7
    %v1101 = vsub.s32 2, %v1100
    %v1102 = vrot.slane %v1082, %v1101
    %v1103 = vlaneseq
    %v1104 = vshrl.u32 %v1103, 7
    %v1105 = vsub.s32 2, %v1104
    %v1106 = vrot.slane %v1086, %v1105
    %v1107 = vadd.f32 %v1067, %v1094
    %v1108 = vadd.f32 %v1068, %v1098
    %v1109 = vadd.f32 %v1069, %v1102
    %v1110 = vadd.f32 %v1070, %v1106
    %v1111 = vmax.f32 %v1107, 0.0
    %v1112 = vmax.f32 %v1108, 0.0
    %v1113 = vmax.f32 %v1109, 0.0
    %v1114 = vmax.f32 %v1110, 0.0
    %v1115 = vpack.c.bf16 %v1111, %v1111
    %v1116 = vpack.c.bf16 %v1112, %v1112
    %v1117 = vpack.c.bf16 %v1113, %v1113
    %v1118 = vpack.c.bf16 %v1114, %v1114
    %v1119 = vld [vmem:[%s8] sm:$0x77]
    %v1120 = vld [vmem:[%s8 + $0x8] sm:$0x77]
    %v1121 = vld [vmem:[%s8 + $0x10] sm:$0x77]
    %v1122 = vld [vmem:[%s8 + $0x18] sm:$0x77]
    %v1123 = vld [vmem:[#allocation11] sm:$0xff]
    %v1124 = vld [vmem:[#allocation11 + $0x8] sm:$0xff]
    %v1125 = vld [vmem:[#allocation11 + $0x10] sm:$0xff]
    %v1126 = vld [vmem:[#allocation11 + $0x18] sm:$0xff]
    %v1127 = vld [vmem:[#allocation11 + $0x20] sm:$0xff]
    %v1128 = vld [vmem:[#allocation11 + $0x28] sm:$0xff]
    %v1129 = vld [vmem:[#allocation11 + $0x30] sm:$0xff]
    %v1130 = vld [vmem:[#allocation11 + $0x38] sm:$0xff]
    %v1131 = vld [vmem:[#allocation11 + $0x40] sm:$0xff]
    %v1132 = vld [vmem:[#allocation11 + $0x48] sm:$0xff]
    %v1133 = vld [vmem:[#allocation11 + $0x50] sm:$0xff]
    %v1134 = vld [vmem:[#allocation11 + $0x58] sm:$0xff]
    %v1135 = vld [vmem:[#allocation11 + $0x60] sm:$0xff]
    %v1136 = vld [vmem:[#allocation11 + $0x68] sm:$0xff]
    %v1137 = vld [vmem:[#allocation11 + $0x70] sm:$0xff]
    %v1138 = vld [vmem:[#allocation11 + $0x78] sm:$0xff]
    %v1139 = vld [vmem:[#allocation11 + $0x80] sm:$0xff]
    %v1140 = vld [vmem:[#allocation11 + $0x88] sm:$0xff]
    %v1141 = vld [vmem:[#allocation11 + $0x90] sm:$0xff]
    %v1142 = vld [vmem:[#allocation11 + $0x98] sm:$0xff]
    %v1143 = vld [vmem:[#allocation11 + $0xa0] sm:$0xff]
    %v1144 = vld [vmem:[#allocation11 + $0xa8] sm:$0xff]
    %v1145 = vld [vmem:[#allocation11 + $0xb0] sm:$0xff]
    %v1146 = vld [vmem:[#allocation11 + $0xb8] sm:$0xff]
    %v1147 = vld [vmem:[#allocation11 + $0xc0] sm:$0xff]
    %v1148 = vld [vmem:[#allocation11 + $0xc8] sm:$0xff]
    %v1149 = vld [vmem:[#allocation11 + $0xd0] sm:$0xff]
    %v1150 = vld [vmem:[#allocation11 + $0xd8] sm:$0xff]
    %v1151 = vld [vmem:[#allocation11 + $0xe0] sm:$0xff]
    %v1152 = vld [vmem:[#allocation11 + $0xe8] sm:$0xff]
    %v1153 = vld [vmem:[#allocation11 + $0xf0] sm:$0xff]
    %v1154 = vld [vmem:[#allocation11 + $0xf8] sm:$0xff]
    %v1155 = vld [vmem:[#allocation11 + $0x100] sm:$0xff]
    %v1156 = vld [vmem:[#allocation11 + $0x108] sm:$0xff]
    %v1157 = vld [vmem:[#allocation11 + $0x110] sm:$0xff]
    %v1158 = vld [vmem:[#allocation11 + $0x118] sm:$0xff]
    %v1159 = vld [vmem:[#allocation11 + $0x120] sm:$0xff]
    %v1160 = vld [vmem:[#allocation11 + $0x128] sm:$0xff]
    %v1161 = vld [vmem:[#allocation11 + $0x130] sm:$0xff]
    %v1162 = vld [vmem:[#allocation11 + $0x138] sm:$0xff]
    %v1163 = vld [vmem:[#allocation11 + $0x140] sm:$0xff]
    %v1164 = vld [vmem:[#allocation11 + $0x148] sm:$0xff]
    %v1165 = vld [vmem:[#allocation11 + $0x150] sm:$0xff]
    %v1166 = vld [vmem:[#allocation11 + $0x158] sm:$0xff]
    %v1167 = vld [vmem:[#allocation11 + $0x160] sm:$0xff]
    %v1168 = vld [vmem:[#allocation11 + $0x168] sm:$0xff]
    %v1169 = vld [vmem:[#allocation11 + $0x170] sm:$0xff]
    %v1170 = vld [vmem:[#allocation11 + $0x178] sm:$0xff]
    %v1171 = vld [vmem:[#allocation11 + $0x180] sm:$0xff]
    %v1172 = vld [vmem:[#allocation11 + $0x188] sm:$0xff]
    %v1173 = vld [vmem:[#allocation11 + $0x190] sm:$0xff]
    %v1174 = vld [vmem:[#allocation11 + $0x198] sm:$0xff]
    %v1175 = vld [vmem:[#allocation11 + $0x1a0] sm:$0xff]
    %v1176 = vld [vmem:[#allocation11 + $0x1a8] sm:$0xff]
    %v1177 = vld [vmem:[#allocation11 + $0x1b0] sm:$0xff]
    %v1178 = vld [vmem:[#allocation11 + $0x1b8] sm:$0xff]
    %v1179 = vld [vmem:[#allocation11 + $0x1c0] sm:$0xff]
    %v1180 = vld [vmem:[#allocation11 + $0x1c8] sm:$0xff]
    %v1181 = vld [vmem:[#allocation11 + $0x1d0] sm:$0xff]
    %v1182 = vld [vmem:[#allocation11 + $0x1d8] sm:$0xff]
    %v1183 = vld [vmem:[#allocation11 + $0x1e0] sm:$0xff]
    %v1184 = vld [vmem:[#allocation11 + $0x1e8] sm:$0xff]
    %v1185 = vld [vmem:[#allocation11 + $0x1f0] sm:$0xff]
    %v1186 = vld [vmem:[#allocation11 + $0x1f8] sm:$0xff]
    %v1187 = vld [vmem:[#allocation11 + $0x200] sm:$0xff]
    %v1188 = vld [vmem:[#allocation11 + $0x208] sm:$0xff]
    %v1189 = vld [vmem:[#allocation11 + $0x210] sm:$0xff]
    %v1190 = vld [vmem:[#allocation11 + $0x218] sm:$0xff]
    %v1191 = vld [vmem:[#allocation11 + $0x220] sm:$0xff]
    %v1192 = vld [vmem:[#allocation11 + $0x228] sm:$0xff]
    %v1193 = vld [vmem:[#allocation11 + $0x230] sm:$0xff]
    %v1194 = vld [vmem:[#allocation11 + $0x238] sm:$0xff]
    %v1195 = vld [vmem:[#allocation11 + $0x240] sm:$0xff]
    %v1196 = vld [vmem:[#allocation11 + $0x248] sm:$0xff]
    %v1197 = vld [vmem:[#allocation11 + $0x250] sm:$0xff]
    %v1198 = vld [vmem:[#allocation11 + $0x258] sm:$0xff]
    %v1199 = vld [vmem:[#allocation11 + $0x260] sm:$0xff]
    %v1200 = vld [vmem:[#allocation11 + $0x268] sm:$0xff]
    %v1201 = vld [vmem:[#allocation11 + $0x270] sm:$0xff]
    %v1202 = vld [vmem:[#allocation11 + $0x278] sm:$0xff]
    %v1203 = vld [vmem:[#allocation11 + $0x280] sm:$0xff]
    %v1204 = vld [vmem:[#allocation11 + $0x288] sm:$0xff]
    %v1205 = vld [vmem:[#allocation11 + $0x290] sm:$0xff]
    %v1206 = vld [vmem:[#allocation11 + $0x298] sm:$0xff]
    %v1207 = vld [vmem:[#allocation11 + $0x2a0] sm:$0xff]
    %v1208 = vld [vmem:[#allocation11 + $0x2a8] sm:$0xff]
    %v1209 = vld [vmem:[#allocation11 + $0x2b0] sm:$0xff]
    %v1210 = vld [vmem:[#allocation11 + $0x2b8] sm:$0xff]
    %v1211 = vld [vmem:[#allocation11 + $0x2c0] sm:$0xff]
    %v1212 = vld [vmem:[#allocation11 + $0x2c8] sm:$0xff]
    %v1213 = vld [vmem:[#allocation11 + $0x2d0] sm:$0xff]
    %v1214 = vld [vmem:[#allocation11 + $0x2d8] sm:$0xff]
    %v1215 = vld [vmem:[#allocation11 + $0x2e0] sm:$0xff]
    %v1216 = vld [vmem:[#allocation11 + $0x2e8] sm:$0xff]
    %v1217 = vld [vmem:[#allocation11 + $0x2f0] sm:$0xff]
    %v1218 = vld [vmem:[#allocation11 + $0x2f8] sm:$0xff]
    %v1219 = vld [vmem:[#allocation11 + $0x300] sm:$0xff]
    %v1220 = vld [vmem:[#allocation11 + $0x308] sm:$0xff]
    %v1221 = vld [vmem:[#allocation11 + $0x310] sm:$0xff]
    %v1222 = vld [vmem:[#allocation11 + $0x318] sm:$0xff]
    %v1223 = vld [vmem:[#allocation11 + $0x320] sm:$0xff]
    %v1224 = vld [vmem:[#allocation11 + $0x328] sm:$0xff]
    %v1225 = vld [vmem:[#allocation11 + $0x330] sm:$0xff]
    %v1226 = vld [vmem:[#allocation11 + $0x338] sm:$0xff]
    %v1227 = vld [vmem:[#allocation11 + $0x340] sm:$0xff]
    %v1228 = vld [vmem:[#allocation11 + $0x348] sm:$0xff]
    %v1229 = vld [vmem:[#allocation11 + $0x350] sm:$0xff]
    %v1230 = vld [vmem:[#allocation11 + $0x358] sm:$0xff]
    %v1231 = vld [vmem:[#allocation11 + $0x360] sm:$0xff]
    %v1232 = vld [vmem:[#allocation11 + $0x368] sm:$0xff]
    %v1233 = vld [vmem:[#allocation11 + $0x370] sm:$0xff]
    %v1234 = vld [vmem:[#allocation11 + $0x378] sm:$0xff]
    %v1235 = vld [vmem:[#allocation11 + $0x380] sm:$0xff]
    %v1236 = vld [vmem:[#allocation11 + $0x388] sm:$0xff]
    %v1237 = vld [vmem:[#allocation11 + $0x390] sm:$0xff]
    %v1238 = vld [vmem:[#allocation11 + $0x398] sm:$0xff]
    %v1239 = vld [vmem:[#allocation11 + $0x3a0] sm:$0xff]
    %v1240 = vld [vmem:[#allocation11 + $0x3a8] sm:$0xff]
    %v1241 = vld [vmem:[#allocation11 + $0x3b0] sm:$0xff]
    %v1242 = vld [vmem:[#allocation11 + $0x3b8] sm:$0xff]
    %v1243 = vld [vmem:[#allocation11 + $0x3c0] sm:$0xff]
    %v1244 = vld [vmem:[#allocation11 + $0x3c8] sm:$0xff]
    %v1245 = vld [vmem:[#allocation11 + $0x3d0] sm:$0xff]
    %v1246 = vld [vmem:[#allocation11 + $0x3d8] sm:$0xff]
    %v1247 = vld [vmem:[#allocation11 + $0x3e0] sm:$0xff]
    %v1248 = vld [vmem:[#allocation11 + $0x3e8] sm:$0xff]
    %v1249 = vld [vmem:[#allocation11 + $0x3f0] sm:$0xff]
    %v1250 = vld [vmem:[#allocation11 + $0x3f8] sm:$0xff]
    %v1251 = vld [vmem:[#allocation11 + $0x400] sm:$0xff]
    %v1252 = vld [vmem:[#allocation11 + $0x408] sm:$0xff]
    %v1253 = vld [vmem:[#allocation11 + $0x410] sm:$0xff]
    %v1254 = vld [vmem:[#allocation11 + $0x418] sm:$0xff]
    %v1255 = vld [vmem:[#allocation11 + $0x420] sm:$0xff]
    %v1256 = vld [vmem:[#allocation11 + $0x428] sm:$0xff]
    %v1257 = vld [vmem:[#allocation11 + $0x430] sm:$0xff]
    %v1258 = vld [vmem:[#allocation11 + $0x438] sm:$0xff]
    %v1259 = vld [vmem:[#allocation11 + $0x440] sm:$0xff]
    %v1260 = vld [vmem:[#allocation11 + $0x448] sm:$0xff]
    %v1261 = vld [vmem:[#allocation11 + $0x450] sm:$0xff]
    %v1262 = vld [vmem:[#allocation11 + $0x458] sm:$0xff]
    %v1263 = vld [vmem:[#allocation11 + $0x460] sm:$0xff]
    %v1264 = vld [vmem:[#allocation11 + $0x468] sm:$0xff]
    %v1265 = vld [vmem:[#allocation11 + $0x470] sm:$0xff]
    %v1266 = vld [vmem:[#allocation11 + $0x478] sm:$0xff]
    %v1267 = vld [vmem:[#allocation11 + $0x480] sm:$0xff]
    %v1268 = vld [vmem:[#allocation11 + $0x488] sm:$0xff]
    %v1269 = vld [vmem:[#allocation11 + $0x490] sm:$0xff]
    %v1270 = vld [vmem:[#allocation11 + $0x498] sm:$0xff]
    %v1271 = vld [vmem:[#allocation11 + $0x4a0] sm:$0xff]
    %v1272 = vld [vmem:[#allocation11 + $0x4a8] sm:$0xff]
    %v1273 = vld [vmem:[#allocation11 + $0x4b0] sm:$0xff]
    %v1274 = vld [vmem:[#allocation11 + $0x4b8] sm:$0xff]
    %v1275 = vld [vmem:[#allocation11 + $0x4c0] sm:$0xff]
    %v1276 = vld [vmem:[#allocation11 + $0x4c8] sm:$0xff]
    %v1277 = vld [vmem:[#allocation11 + $0x4d0] sm:$0xff]
    %v1278 = vld [vmem:[#allocation11 + $0x4d8] sm:$0xff]
    %v1279 = vld [vmem:[#allocation11 + $0x4e0] sm:$0xff]
    %v1280 = vld [vmem:[#allocation11 + $0x4e8] sm:$0xff]
    %v1281 = vld [vmem:[#allocation11 + $0x4f0] sm:$0xff]
    %v1282 = vld [vmem:[#allocation11 + $0x4f8] sm:$0xff]
    %v1283 = vld [vmem:[#allocation11 + $0x500] sm:$0xff]
    %v1284 = vld [vmem:[#allocation11 + $0x508] sm:$0xff]
    %v1285 = vld [vmem:[#allocation11 + $0x510] sm:$0xff]
    %v1286 = vld [vmem:[#allocation11 + $0x518] sm:$0xff]
    %v1287 = vld [vmem:[#allocation11 + $0x520] sm:$0xff]
    %v1288 = vld [vmem:[#allocation11 + $0x528] sm:$0xff]
    %v1289 = vld [vmem:[#allocation11 + $0x530] sm:$0xff]
    %v1290 = vld [vmem:[#allocation11 + $0x538] sm:$0xff]
    %v1291 = vld [vmem:[#allocation11 + $0x540] sm:$0xff]
    %v1292 = vld [vmem:[#allocation11 + $0x548] sm:$0xff]
    %v1293 = vld [vmem:[#allocation11 + $0x550] sm:$0xff]
    %v1294 = vld [vmem:[#allocation11 + $0x558] sm:$0xff]
    %v1295 = vld [vmem:[#allocation11 + $0x560] sm:$0xff]
    %v1296 = vld [vmem:[#allocation11 + $0x568] sm:$0xff]
    %v1297 = vld [vmem:[#allocation11 + $0x570] sm:$0xff]
    %v1298 = vld [vmem:[#allocation11 + $0x578] sm:$0xff]
    %v1299 = vld [vmem:[#allocation11 + $0x580] sm:$0xff]
    %v1300 = vld [vmem:[#allocation11 + $0x588] sm:$0xff]
    %v1301 = vld [vmem:[#allocation11 + $0x590] sm:$0xff]
    %v1302 = vld [vmem:[#allocation11 + $0x598] sm:$0xff]
    %v1303 = vld [vmem:[#allocation11 + $0x5a0] sm:$0xff]
    %v1304 = vld [vmem:[#allocation11 + $0x5a8] sm:$0xff]
    %v1305 = vld [vmem:[#allocation11 + $0x5b0] sm:$0xff]
    %v1306 = vld [vmem:[#allocation11 + $0x5b8] sm:$0xff]
    %v1307 = vld [vmem:[#allocation11 + $0x5c0] sm:$0xff]
    %v1308 = vld [vmem:[#allocation11 + $0x5c8] sm:$0xff]
    %v1309 = vld [vmem:[#allocation11 + $0x5d0] sm:$0xff]
    %v1310 = vld [vmem:[#allocation11 + $0x5d8] sm:$0xff]
    %v1311 = vld [vmem:[#allocation11 + $0x5e0] sm:$0xff]
    %v1312 = vld [vmem:[#allocation11 + $0x5e8] sm:$0xff]
    %v1313 = vld [vmem:[#allocation11 + $0x5f0] sm:$0xff]
    %v1314 = vld [vmem:[#allocation11 + $0x5f8] sm:$0xff]
    %v1315 = vld [vmem:[#allocation11 + $0x600] sm:$0xff]
    %v1316 = vld [vmem:[#allocation11 + $0x608] sm:$0xff]
    %v1317 = vld [vmem:[#allocation11 + $0x610] sm:$0xff]
    %v1318 = vld [vmem:[#allocation11 + $0x618] sm:$0xff]
    %v1319 = vld [vmem:[#allocation11 + $0x620] sm:$0xff]
    %v1320 = vld [vmem:[#allocation11 + $0x628] sm:$0xff]
    %v1321 = vld [vmem:[#allocation11 + $0x630] sm:$0xff]
    %v1322 = vld [vmem:[#allocation11 + $0x638] sm:$0xff]
    %v1323 = vld [vmem:[#allocation11 + $0x640] sm:$0xff]
    %v1324 = vld [vmem:[#allocation11 + $0x648] sm:$0xff]
    %v1325 = vld [vmem:[#allocation11 + $0x650] sm:$0xff]
    %v1326 = vld [vmem:[#allocation11 + $0x658] sm:$0xff]
    %v1327 = vld [vmem:[#allocation11 + $0x660] sm:$0xff]
    %v1328 = vld [vmem:[#allocation11 + $0x668] sm:$0xff]
    %v1329 = vld [vmem:[#allocation11 + $0x670] sm:$0xff]
    %v1330 = vld [vmem:[#allocation11 + $0x678] sm:$0xff]
    %v1331 = vld [vmem:[#allocation11 + $0x680] sm:$0xff]
    %v1332 = vld [vmem:[#allocation11 + $0x688] sm:$0xff]
    %v1333 = vld [vmem:[#allocation11 + $0x690] sm:$0xff]
    %v1334 = vld [vmem:[#allocation11 + $0x698] sm:$0xff]
    %v1335 = vld [vmem:[#allocation11 + $0x6a0] sm:$0xff]
    %v1336 = vld [vmem:[#allocation11 + $0x6a8] sm:$0xff]
    %v1337 = vld [vmem:[#allocation11 + $0x6b0] sm:$0xff]
    %v1338 = vld [vmem:[#allocation11 + $0x6b8] sm:$0xff]
    %v1339 = vld [vmem:[#allocation11 + $0x6c0] sm:$0xff]
    %v1340 = vld [vmem:[#allocation11 + $0x6c8] sm:$0xff]
    %v1341 = vld [vmem:[#allocation11 + $0x6d0] sm:$0xff]
    %v1342 = vld [vmem:[#allocation11 + $0x6d8] sm:$0xff]
    %v1343 = vld [vmem:[#allocation11 + $0x6e0] sm:$0xff]
    %v1344 = vld [vmem:[#allocation11 + $0x6e8] sm:$0xff]
    %v1345 = vld [vmem:[#allocation11 + $0x6f0] sm:$0xff]
    %v1346 = vld [vmem:[#allocation11 + $0x6f8] sm:$0xff]
    %v1347 = vld [vmem:[#allocation11 + $0x700] sm:$0xff]
    %v1348 = vld [vmem:[#allocation11 + $0x708] sm:$0xff]
    %v1349 = vld [vmem:[#allocation11 + $0x710] sm:$0xff]
    %v1350 = vld [vmem:[#allocation11 + $0x718] sm:$0xff]
    %v1351 = vld [vmem:[#allocation11 + $0x720] sm:$0xff]
    %v1352 = vld [vmem:[#allocation11 + $0x728] sm:$0xff]
    %v1353 = vld [vmem:[#allocation11 + $0x730] sm:$0xff]
    %v1354 = vld [vmem:[#allocation11 + $0x738] sm:$0xff]
    %v1355 = vld [vmem:[#allocation11 + $0x740] sm:$0xff]
    %v1356 = vld [vmem:[#allocation11 + $0x748] sm:$0xff]
    %v1357 = vld [vmem:[#allocation11 + $0x750] sm:$0xff]
    %v1358 = vld [vmem:[#allocation11 + $0x758] sm:$0xff]
    %v1359 = vld [vmem:[#allocation11 + $0x760] sm:$0xff]
    %v1360 = vld [vmem:[#allocation11 + $0x768] sm:$0xff]
    %v1361 = vld [vmem:[#allocation11 + $0x770] sm:$0xff]
    %v1362 = vld [vmem:[#allocation11 + $0x778] sm:$0xff]
    %v1363 = vld [vmem:[#allocation11 + $0x780] sm:$0xff]
    %v1364 = vld [vmem:[#allocation11 + $0x788] sm:$0xff]
    %v1365 = vld [vmem:[#allocation11 + $0x790] sm:$0xff]
    %v1366 = vld [vmem:[#allocation11 + $0x798] sm:$0xff]
    %v1367 = vld [vmem:[#allocation11 + $0x7a0] sm:$0xff]
    %v1368 = vld [vmem:[#allocation11 + $0x7a8] sm:$0xff]
    %v1369 = vld [vmem:[#allocation11 + $0x7b0] sm:$0xff]
    %v1370 = vld [vmem:[#allocation11 + $0x7b8] sm:$0xff]
    %v1371 = vld [vmem:[#allocation11 + $0x7c0] sm:$0xff]
    %v1372 = vld [vmem:[#allocation11 + $0x7c8] sm:$0xff]
    %v1373 = vld [vmem:[#allocation11 + $0x7d0] sm:$0xff]
    %v1374 = vld [vmem:[#allocation11 + $0x7d8] sm:$0xff]
    %v1375 = vld [vmem:[#allocation11 + $0x7e0] sm:$0xff]
    %v1376 = vld [vmem:[#allocation11 + $0x7e8] sm:$0xff]
    %v1377 = vld [vmem:[#allocation11 + $0x7f0] sm:$0xff]
    %v1378 = vld [vmem:[#allocation11 + $0x7f8] sm:$0xff]
    %v1383 = vlaneseq
    %v1384 = vshrl.u32 %v1383, 7
    %v1385 = vsub.s32 0, %v1384
    %v1386 = vrot.slane %v1119, %v1385
    %v1387 = vlaneseq
    %v1388 = vshrl.u32 %v1387, 7
    %v1389 = vsub.s32 4, %v1388
    %v1390 = vrot.slane %v1119, %v1389
    %v1391 = vlaneseq
    %v1392 = vshrl.u32 %v1391, 7
    %v1393 = vsub.s32 0, %v1392
    %v1394 = vrot.slane %v1120, %v1393
    %v1395 = vlaneseq
    %v1396 = vshrl.u32 %v1395, 7
    %v1397 = vsub.s32 4, %v1396
    %v1398 = vrot.slane %v1120, %v1397
    %v1399 = vlaneseq
    %v1400 = vshrl.u32 %v1399, 7
    %v1401 = vsub.s32 0, %v1400
    %v1402 = vrot.slane %v1121, %v1401
    %v1403 = vlaneseq
    %v1404 = vshrl.u32 %v1403, 7
    %v1405 = vsub.s32 4, %v1404
    %v1406 = vrot.slane %v1121, %v1405
    %v1407 = vlaneseq
    %v1408 = vshrl.u32 %v1407, 7
    %v1409 = vsub.s32 0, %v1408
    %v1410 = vrot.slane %v1122, %v1409
    %v1411 = vlaneseq
    %v1412 = vshrl.u32 %v1411, 7
    %v1413 = vsub.s32 4, %v1412
    %v1414 = vrot.slane %v1122, %v1413
    %v1423 = vlaneseq
    %v1424 = vshrl.u32 %v1423, 7
    %v1425 = vsub.s32 0, %v1424
    %v1426 = vrot.slane %v1386, %v1425
    %v1427 = vlaneseq
    %v1428 = vshrl.u32 %v1427, 7
    %v1429 = vsub.s32 0, %v1428
    %v1430 = vrot.slane %v1390, %v1429
    %v1431 = vlaneseq
    %v1432 = vshrl.u32 %v1431, 7
    %v1433 = vsub.s32 0, %v1432
    %v1434 = vrot.slane %v1394, %v1433
    %v1435 = vlaneseq
    %v1436 = vshrl.u32 %v1435, 7
    %v1437 = vsub.s32 0, %v1436
    %v1438 = vrot.slane %v1398, %v1437
    %v1439 = vlaneseq
    %v1440 = vshrl.u32 %v1439, 7
    %v1441 = vsub.s32 0, %v1440
    %v1442 = vrot.slane %v1402, %v1441
    %v1443 = vlaneseq
    %v1444 = vshrl.u32 %v1443, 7
    %v1445 = vsub.s32 0, %v1444
    %v1446 = vrot.slane %v1406, %v1445
    %v1447 = vlaneseq
    %v1448 = vshrl.u32 %v1447, 7
    %v1449 = vsub.s32 0, %v1448
    %v1450 = vrot.slane %v1410, %v1449
    %v1451 = vlaneseq
    %v1452 = vshrl.u32 %v1451, 7
    %v1453 = vsub.s32 0, %v1452
    %v1454 = vrot.slane %v1414, %v1453
    %v1711 = vunpack.c.l.b16 %v1123
    %v1712 = vunpack.c.h.b16 %v1123
    %v1713 = vunpack.c.l.b16 %v1124
    %v1714 = vunpack.c.h.b16 %v1124
    %v1715 = vunpack.c.l.b16 %v1125
    %v1716 = vunpack.c.h.b16 %v1125
    %v1717 = vunpack.c.l.b16 %v1126
    %v1718 = vunpack.c.h.b16 %v1126
    %v1719 = vunpack.c.l.b16 %v1127
    %v1720 = vunpack.c.h.b16 %v1127
    %v1721 = vunpack.c.l.b16 %v1128
    %v1722 = vunpack.c.h.b16 %v1128
    %v1723 = vunpack.c.l.b16 %v1129
    %v1724 = vunpack.c.h.b16 %v1129
    %v1725 = vunpack.c.l.b16 %v1130
    %v1726 = vunpack.c.h.b16 %v1130
    %v1727 = vunpack.c.l.b16 %v1131
    %v1728 = vunpack.c.h.b16 %v1131
    %v1729 = vunpack.c.l.b16 %v1132
    %v1730 = vunpack.c.h.b16 %v1132
    %v1731 = vunpack.c.l.b16 %v1133
    %v1732 = vunpack.c.h.b16 %v1133
    %v1733 = vunpack.c.l.b16 %v1134
    %v1734 = vunpack.c.h.b16 %v1134
    %v1735 = vunpack.c.l.b16 %v1135
    %v1736 = vunpack.c.h.b16 %v1135
    %v1737 = vunpack.c.l.b16 %v1136
    %v1738 = vunpack.c.h.b16 %v1136
    %v1739 = vunpack.c.l.b16 %v1137
    %v1740 = vunpack.c.h.b16 %v1137
    %v1741 = vunpack.c.l.b16 %v1138
    %v1742 = vunpack.c.h.b16 %v1138
    %v1743 = vunpack.c.l.b16 %v1139
    %v1744 = vunpack.c.h.b16 %v1139
    %v1745 = vunpack.c.l.b16 %v1140
    %v1746 = vunpack.c.h.b16 %v1140
    %v1747 = vunpack.c.l.b16 %v1141
    %v1748 = vunpack.c.h.b16 %v1141
    %v1749 = vunpack.c.l.b16 %v1142
    %v1750 = vunpack.c.h.b16 %v1142
    %v1751 = vunpack.c.l.b16 %v1143
    %v1752 = vunpack.c.h.b16 %v1143
    %v1753 = vunpack.c.l.b16 %v1144
    %v1754 = vunpack.c.h.b16 %v1144
    %v1755 = vunpack.c.l.b16 %v1145
    %v1756 = vunpack.c.h.b16 %v1145
    %v1757 = vunpack.c.l.b16 %v1146
    %v1758 = vunpack.c.h.b16 %v1146
    %v1759 = vunpack.c.l.b16 %v1147
    %v1760 = vunpack.c.h.b16 %v1147
    %v1761 = vunpack.c.l.b16 %v1148
    %v1762 = vunpack.c.h.b16 %v1148
    %v1763 = vunpack.c.l.b16 %v1149
    %v1764 = vunpack.c.h.b16 %v1149
    %v1765 = vunpack.c.l.b16 %v1150
    %v1766 = vunpack.c.h.b16 %v1150
    %v1767 = vunpack.c.l.b16 %v1151
    %v1768 = vunpack.c.h.b16 %v1151
    %v1769 = vunpack.c.l.b16 %v1152
    %v1770 = vunpack.c.h.b16 %v1152
    %v1771 = vunpack.c.l.b16 %v1153
    %v1772 = vunpack.c.h.b16 %v1153
    %v1773 = vunpack.c.l.b16 %v1154
    %v1774 = vunpack.c.h.b16 %v1154
    %v1775 = vunpack.c.l.b16 %v1155
    %v1776 = vunpack.c.h.b16 %v1155
    %v1777 = vunpack.c.l.b16 %v1156
    %v1778 = vunpack.c.h.b16 %v1156
    %v1779 = vunpack.c.l.b16 %v1157
    %v1780 = vunpack.c.h.b16 %v1157
    %v1781 = vunpack.c.l.b16 %v1158
    %v1782 = vunpack.c.h.b16 %v1158
    %v1783 = vunpack.c.l.b16 %v1159
    %v1784 = vunpack.c.h.b16 %v1159
    %v1785 = vunpack.c.l.b16 %v1160
    %v1786 = vunpack.c.h.b16 %v1160
    %v1787 = vunpack.c.l.b16 %v1161
    %v1788 = vunpack.c.h.b16 %v1161
    %v1789 = vunpack.c.l.b16 %v1162
    %v1790 = vunpack.c.h.b16 %v1162
    %v1791 = vunpack.c.l.b16 %v1163
    %v1792 = vunpack.c.h.b16 %v1163
    %v1793 = vunpack.c.l.b16 %v1164
    %v1794 = vunpack.c.h.b16 %v1164
    %v1795 = vunpack.c.l.b16 %v1165
    %v1796 = vunpack.c.h.b16 %v1165
    %v1797 = vunpack.c.l.b16 %v1166
    %v1798 = vunpack.c.h.b16 %v1166
    %v1799 = vunpack.c.l.b16 %v1167
    %v1800 = vunpack.c.h.b16 %v1167
    %v1801 = vunpack.c.l.b16 %v1168
    %v1802 = vunpack.c.h.b16 %v1168
    %v1803 = vunpack.c.l.b16 %v1169
    %v1804 = vunpack.c.h.b16 %v1169
    %v1805 = vunpack.c.l.b16 %v1170
    %v1806 = vunpack.c.h.b16 %v1170
    %v1807 = vunpack.c.l.b16 %v1171
    %v1808 = vunpack.c.h.b16 %v1171
    %v1809 = vunpack.c.l.b16 %v1172
    %v1810 = vunpack.c.h.b16 %v1172
    %v1811 = vunpack.c.l.b16 %v1173
    %v1812 = vunpack.c.h.b16 %v1173
    %v1813 = vunpack.c.l.b16 %v1174
    %v1814 = vunpack.c.h.b16 %v1174
    %v1815 = vunpack.c.l.b16 %v1175
    %v1816 = vunpack.c.h.b16 %v1175
    %v1817 = vunpack.c.l.b16 %v1176
    %v1818 = vunpack.c.h.b16 %v1176
    %v1819 = vunpack.c.l.b16 %v1177
    %v1820 = vunpack.c.h.b16 %v1177
    %v1821 = vunpack.c.l.b16 %v1178
    %v1822 = vunpack.c.h.b16 %v1178
    %v1823 = vunpack.c.l.b16 %v1179
    %v1824 = vunpack.c.h.b16 %v1179
    %v1825 = vunpack.c.l.b16 %v1180
    %v1826 = vunpack.c.h.b16 %v1180
    %v1827 = vunpack.c.l.b16 %v1181
    %v1828 = vunpack.c.h.b16 %v1181
    %v1829 = vunpack.c.l.b16 %v1182
    %v1830 = vunpack.c.h.b16 %v1182
    %v1831 = vunpack.c.l.b16 %v1183
    %v1832 = vunpack.c.h.b16 %v1183
    %v1833 = vunpack.c.l.b16 %v1184
    %v1834 = vunpack.c.h.b16 %v1184
    %v1835 = vunpack.c.l.b16 %v1185
    %v1836 = vunpack.c.h.b16 %v1185
    %v1837 = vunpack.c.l.b16 %v1186
    %v1838 = vunpack.c.h.b16 %v1186
    %v1839 = vunpack.c.l.b16 %v1187
    %v1840 = vunpack.c.h.b16 %v1187
    %v1841 = vunpack.c.l.b16 %v1188
    %v1842 = vunpack.c.h.b16 %v1188
    %v1843 = vunpack.c.l.b16 %v1189
    %v1844 = vunpack.c.h.b16 %v1189
    %v1845 = vunpack.c.l.b16 %v1190
    %v1846 = vunpack.c.h.b16 %v1190
    %v1847 = vunpack.c.l.b16 %v1191
    %v1848 = vunpack.c.h.b16 %v1191
    %v1849 = vunpack.c.l.b16 %v1192
    %v1850 = vunpack.c.h.b16 %v1192
    %v1851 = vunpack.c.l.b16 %v1193
    %v1852 = vunpack.c.h.b16 %v1193
    %v1853 = vunpack.c.l.b16 %v1194
    %v1854 = vunpack.c.h.b16 %v1194
    %v1855 = vunpack.c.l.b16 %v1195
    %v1856 = vunpack.c.h.b16 %v1195
    %v1857 = vunpack.c.l.b16 %v1196
    %v1858 = vunpack.c.h.b16 %v1196
    %v1859 = vunpack.c.l.b16 %v1197
    %v1860 = vunpack.c.h.b16 %v1197
    %v1861 = vunpack.c.l.b16 %v1198
    %v1862 = vunpack.c.h.b16 %v1198
    %v1863 = vunpack.c.l.b16 %v1199
    %v1864 = vunpack.c.h.b16 %v1199
    %v1865 = vunpack.c.l.b16 %v1200
    %v1866 = vunpack.c.h.b16 %v1200
    %v1867 = vunpack.c.l.b16 %v1201
    %v1868 = vunpack.c.h.b16 %v1201
    %v1869 = vunpack.c.l.b16 %v1202
    %v1870 = vunpack.c.h.b16 %v1202
    %v1871 = vunpack.c.l.b16 %v1203
    %v1872 = vunpack.c.h.b16 %v1203
    %v1873 = vunpack.c.l.b16 %v1204
    %v1874 = vunpack.c.h.b16 %v1204
    %v1875 = vunpack.c.l.b16 %v1205
    %v1876 = vunpack.c.h.b16 %v1205
    %v1877 = vunpack.c.l.b16 %v1206
    %v1878 = vunpack.c.h.b16 %v1206
    %v1879 = vunpack.c.l.b16 %v1207
    %v1880 = vunpack.c.h.b16 %v1207
    %v1881 = vunpack.c.l.b16 %v1208
    %v1882 = vunpack.c.h.b16 %v1208
    %v1883 = vunpack.c.l.b16 %v1209
    %v1884 = vunpack.c.h.b16 %v1209
    %v1885 = vunpack.c.l.b16 %v1210
    %v1886 = vunpack.c.h.b16 %v1210
    %v1887 = vunpack.c.l.b16 %v1211
    %v1888 = vunpack.c.h.b16 %v1211
    %v1889 = vunpack.c.l.b16 %v1212
    %v1890 = vunpack.c.h.b16 %v1212
    %v1891 = vunpack.c.l.b16 %v1213
    %v1892 = vunpack.c.h.b16 %v1213
    %v1893 = vunpack.c.l.b16 %v1214
    %v1894 = vunpack.c.h.b16 %v1214
    %v1895 = vunpack.c.l.b16 %v1215
    %v1896 = vunpack.c.h.b16 %v1215
    %v1897 = vunpack.c.l.b16 %v1216
    %v1898 = vunpack.c.h.b16 %v1216
    %v1899 = vunpack.c.l.b16 %v1217
    %v1900 = vunpack.c.h.b16 %v1217
    %v1901 = vunpack.c.l.b16 %v1218
    %v1902 = vunpack.c.h.b16 %v1218
    %v1903 = vunpack.c.l.b16 %v1219
    %v1904 = vunpack.c.h.b16 %v1219
    %v1905 = vunpack.c.l.b16 %v1220
    %v1906 = vunpack.c.h.b16 %v1220
    %v1907 = vunpack.c.l.b16 %v1221
    %v1908 = vunpack.c.h.b16 %v1221
    %v1909 = vunpack.c.l.b16 %v1222
    %v1910 = vunpack.c.h.b16 %v1222
    %v1911 = vunpack.c.l.b16 %v1223
    %v1912 = vunpack.c.h.b16 %v1223
    %v1913 = vunpack.c.l.b16 %v1224
    %v1914 = vunpack.c.h.b16 %v1224
    %v1915 = vunpack.c.l.b16 %v1225
    %v1916 = vunpack.c.h.b16 %v1225
    %v1917 = vunpack.c.l.b16 %v1226
    %v1918 = vunpack.c.h.b16 %v1226
    %v1919 = vunpack.c.l.b16 %v1227
    %v1920 = vunpack.c.h.b16 %v1227
    %v1921 = vunpack.c.l.b16 %v1228
    %v1922 = vunpack.c.h.b16 %v1228
    %v1923 = vunpack.c.l.b16 %v1229
    %v1924 = vunpack.c.h.b16 %v1229
    %v1925 = vunpack.c.l.b16 %v1230
    %v1926 = vunpack.c.h.b16 %v1230
    %v1927 = vunpack.c.l.b16 %v1231
    %v1928 = vunpack.c.h.b16 %v1231
    %v1929 = vunpack.c.l.b16 %v1232
    %v1930 = vunpack.c.h.b16 %v1232
    %v1931 = vunpack.c.l.b16 %v1233
    %v1932 = vunpack.c.h.b16 %v1233
    %v1933 = vunpack.c.l.b16 %v1234
    %v1934 = vunpack.c.h.b16 %v1234
    %v1935 = vunpack.c.l.b16 %v1235
    %v1936 = vunpack.c.h.b16 %v1235
    %v1937 = vunpack.c.l.b16 %v1236
    %v1938 = vunpack.c.h.b16 %v1236
    %v1939 = vunpack.c.l.b16 %v1237
    %v1940 = vunpack.c.h.b16 %v1237
    %v1941 = vunpack.c.l.b16 %v1238
    %v1942 = vunpack.c.h.b16 %v1238
    %v1943 = vunpack.c.l.b16 %v1239
    %v1944 = vunpack.c.h.b16 %v1239
    %v1945 = vunpack.c.l.b16 %v1240
    %v1946 = vunpack.c.h.b16 %v1240
    %v1947 = vunpack.c.l.b16 %v1241
    %v1948 = vunpack.c.h.b16 %v1241
    %v1949 = vunpack.c.l.b16 %v1242
    %v1950 = vunpack.c.h.b16 %v1242
    %v1951 = vunpack.c.l.b16 %v1243
    %v1952 = vunpack.c.h.b16 %v1243
    %v1953 = vunpack.c.l.b16 %v1244
    %v1954 = vunpack.c.h.b16 %v1244
    %v1955 = vunpack.c.l.b16 %v1245
    %v1956 = vunpack.c.h.b16 %v1245
    %v1957 = vunpack.c.l.b16 %v1246
    %v1958 = vunpack.c.h.b16 %v1246
    %v1959 = vunpack.c.l.b16 %v1247
    %v1960 = vunpack.c.h.b16 %v1247
    %v1961 = vunpack.c.l.b16 %v1248
    %v1962 = vunpack.c.h.b16 %v1248
    %v1963 = vunpack.c.l.b16 %v1249
    %v1964 = vunpack.c.h.b16 %v1249
    %v1965 = vunpack.c.l.b16 %v1250
    %v1966 = vunpack.c.h.b16 %v1250
    %v1967 = vunpack.c.l.b16 %v1251
    %v1968 = vunpack.c.h.b16 %v1251
    %v1969 = vunpack.c.l.b16 %v1252
    %v1970 = vunpack.c.h.b16 %v1252
    %v1971 = vunpack.c.l.b16 %v1253
    %v1972 = vunpack.c.h.b16 %v1253
    %v1973 = vunpack.c.l.b16 %v1254
    %v1974 = vunpack.c.h.b16 %v1254
    %v1975 = vunpack.c.l.b16 %v1255
    %v1976 = vunpack.c.h.b16 %v1255
    %v1977 = vunpack.c.l.b16 %v1256
    %v1978 = vunpack.c.h.b16 %v1256
    %v1979 = vunpack.c.l.b16 %v1257
    %v1980 = vunpack.c.h.b16 %v1257
    %v1981 = vunpack.c.l.b16 %v1258
    %v1982 = vunpack.c.h.b16 %v1258
    %v1983 = vunpack.c.l.b16 %v1259
    %v1984 = vunpack.c.h.b16 %v1259
    %v1985 = vunpack.c.l.b16 %v1260
    %v1986 = vunpack.c.h.b16 %v1260
    %v1987 = vunpack.c.l.b16 %v1261
    %v1988 = vunpack.c.h.b16 %v1261
    %v1989 = vunpack.c.l.b16 %v1262
    %v1990 = vunpack.c.h.b16 %v1262
    %v1991 = vunpack.c.l.b16 %v1263
    %v1992 = vunpack.c.h.b16 %v1263
    %v1993 = vunpack.c.l.b16 %v1264
    %v1994 = vunpack.c.h.b16 %v1264
    %v1995 = vunpack.c.l.b16 %v1265
    %v1996 = vunpack.c.h.b16 %v1265
    %v1997 = vunpack.c.l.b16 %v1266
    %v1998 = vunpack.c.h.b16 %v1266
    %v1999 = vunpack.c.l.b16 %v1267
    %v2000 = vunpack.c.h.b16 %v1267
    %v2001 = vunpack.c.l.b16 %v1268
    %v2002 = vunpack.c.h.b16 %v1268
    %v2003 = vunpack.c.l.b16 %v1269
    %v2004 = vunpack.c.h.b16 %v1269
    %v2005 = vunpack.c.l.b16 %v1270
    %v2006 = vunpack.c.h.b16 %v1270
    %v2007 = vunpack.c.l.b16 %v1271
    %v2008 = vunpack.c.h.b16 %v1271
    %v2009 = vunpack.c.l.b16 %v1272
    %v2010 = vunpack.c.h.b16 %v1272
    %v2011 = vunpack.c.l.b16 %v1273
    %v2012 = vunpack.c.h.b16 %v1273
    %v2013 = vunpack.c.l.b16 %v1274
    %v2014 = vunpack.c.h.b16 %v1274
    %v2015 = vunpack.c.l.b16 %v1275
    %v2016 = vunpack.c.h.b16 %v1275
    %v2017 = vunpack.c.l.b16 %v1276
    %v2018 = vunpack.c.h.b16 %v1276
    %v2019 = vunpack.c.l.b16 %v1277
    %v2020 = vunpack.c.h.b16 %v1277
    %v2021 = vunpack.c.l.b16 %v1278
    %v2022 = vunpack.c.h.b16 %v1278
    %v2023 = vunpack.c.l.b16 %v1279
    %v2024 = vunpack.c.h.b16 %v1279
    %v2025 = vunpack.c.l.b16 %v1280
    %v2026 = vunpack.c.h.b16 %v1280
    %v2027 = vunpack.c.l.b16 %v1281
    %v2028 = vunpack.c.h.b16 %v1281
    %v2029 = vunpack.c.l.b16 %v1282
    %v2030 = vunpack.c.h.b16 %v1282
    %v2031 = vunpack.c.l.b16 %v1283
    %v2032 = vunpack.c.h.b16 %v1283
    %v2033 = vunpack.c.l.b16 %v1284
    %v2034 = vunpack.c.h.b16 %v1284
    %v2035 = vunpack.c.l.b16 %v1285
    %v2036 = vunpack.c.h.b16 %v1285
    %v2037 = vunpack.c.l.b16 %v1286
    %v2038 = vunpack.c.h.b16 %v1286
    %v2039 = vunpack.c.l.b16 %v1287
    %v2040 = vunpack.c.h.b16 %v1287
    %v2041 = vunpack.c.l.b16 %v1288
    %v2042 = vunpack.c.h.b16 %v1288
    %v2043 = vunpack.c.l.b16 %v1289
    %v2044 = vunpack.c.h.b16 %v1289
    %v2045 = vunpack.c.l.b16 %v1290
    %v2046 = vunpack.c.h.b16 %v1290
    %v2047 = vunpack.c.l.b16 %v1291
    %v2048 = vunpack.c.h.b16 %v1291
    %v2049 = vunpack.c.l.b16 %v1292
    %v2050 = vunpack.c.h.b16 %v1292
    %v2051 = vunpack.c.l.b16 %v1293
    %v2052 = vunpack.c.h.b16 %v1293
    %v2053 = vunpack.c.l.b16 %v1294
    %v2054 = vunpack.c.h.b16 %v1294
    %v2055 = vunpack.c.l.b16 %v1295
    %v2056 = vunpack.c.h.b16 %v1295
    %v2057 = vunpack.c.l.b16 %v1296
    %v2058 = vunpack.c.h.b16 %v1296
    %v2059 = vunpack.c.l.b16 %v1297
    %v2060 = vunpack.c.h.b16 %v1297
    %v2061 = vunpack.c.l.b16 %v1298
    %v2062 = vunpack.c.h.b16 %v1298
    %v2063 = vunpack.c.l.b16 %v1299
    %v2064 = vunpack.c.h.b16 %v1299
    %v2065 = vunpack.c.l.b16 %v1300
    %v2066 = vunpack.c.h.b16 %v1300
    %v2067 = vunpack.c.l.b16 %v1301
    %v2068 = vunpack.c.h.b16 %v1301
    %v2069 = vunpack.c.l.b16 %v1302
    %v2070 = vunpack.c.h.b16 %v1302
    %v2071 = vunpack.c.l.b16 %v1303
    %v2072 = vunpack.c.h.b16 %v1303
    %v2073 = vunpack.c.l.b16 %v1304
    %v2074 = vunpack.c.h.b16 %v1304
    %v2075 = vunpack.c.l.b16 %v1305
    %v2076 = vunpack.c.h.b16 %v1305
    %v2077 = vunpack.c.l.b16 %v1306
    %v2078 = vunpack.c.h.b16 %v1306
    %v2079 = vunpack.c.l.b16 %v1307
    %v2080 = vunpack.c.h.b16 %v1307
    %v2081 = vunpack.c.l.b16 %v1308
    %v2082 = vunpack.c.h.b16 %v1308
    %v2083 = vunpack.c.l.b16 %v1309
    %v2084 = vunpack.c.h.b16 %v1309
    %v2085 = vunpack.c.l.b16 %v1310
    %v2086 = vunpack.c.h.b16 %v1310
    %v2087 = vunpack.c.l.b16 %v1311
    %v2088 = vunpack.c.h.b16 %v1311
    %v2089 = vunpack.c.l.b16 %v1312
    %v2090 = vunpack.c.h.b16 %v1312
    %v2091 = vunpack.c.l.b16 %v1313
    %v2092 = vunpack.c.h.b16 %v1313
    %v2093 = vunpack.c.l.b16 %v1314
    %v2094 = vunpack.c.h.b16 %v1314
    %v2095 = vunpack.c.l.b16 %v1315
    %v2096 = vunpack.c.h.b16 %v1315
    %v2097 = vunpack.c.l.b16 %v1316
    %v2098 = vunpack.c.h.b16 %v1316
    %v2099 = vunpack.c.l.b16 %v1317
    %v2100 = vunpack.c.h.b16 %v1317
    %v2101 = vunpack.c.l.b16 %v1318
    %v2102 = vunpack.c.h.b16 %v1318
    %v2103 = vunpack.c.l.b16 %v1319
    %v2104 = vunpack.c.h.b16 %v1319
    %v2105 = vunpack.c.l.b16 %v1320
    %v2106 = vunpack.c.h.b16 %v1320
    %v2107 = vunpack.c.l.b16 %v1321
    %v2108 = vunpack.c.h.b16 %v1321
    %v2109 = vunpack.c.l.b16 %v1322
    %v2110 = vunpack.c.h.b16 %v1322
    %v2111 = vunpack.c.l.b16 %v1323
    %v2112 = vunpack.c.h.b16 %v1323
    %v2113 = vunpack.c.l.b16 %v1324
    %v2114 = vunpack.c.h.b16 %v1324
    %v2115 = vunpack.c.l.b16 %v1325
    %v2116 = vunpack.c.h.b16 %v1325
    %v2117 = vunpack.c.l.b16 %v1326
    %v2118 = vunpack.c.h.b16 %v1326
    %v2119 = vunpack.c.l.b16 %v1327
    %v2120 = vunpack.c.h.b16 %v1327
    %v2121 = vunpack.c.l.b16 %v1328
    %v2122 = vunpack.c.h.b16 %v1328
    %v2123 = vunpack.c.l.b16 %v1329
    %v2124 = vunpack.c.h.b16 %v1329
    %v2125 = vunpack.c.l.b16 %v1330
    %v2126 = vunpack.c.h.b16 %v1330
    %v2127 = vunpack.c.l.b16 %v1331
    %v2128 = vunpack.c.h.b16 %v1331
    %v2129 = vunpack.c.l.b16 %v1332
    %v2130 = vunpack.c.h.b16 %v1332
    %v2131 = vunpack.c.l.b16 %v1333
    %v2132 = vunpack.c.h.b16 %v1333
    %v2133 = vunpack.c.l.b16 %v1334
    %v2134 = vunpack.c.h.b16 %v1334
    %v2135 = vunpack.c.l.b16 %v1335
    %v2136 = vunpack.c.h.b16 %v1335
    %v2137 = vunpack.c.l.b16 %v1336
    %v2138 = vunpack.c.h.b16 %v1336
    %v2139 = vunpack.c.l.b16 %v1337
    %v2140 = vunpack.c.h.b16 %v1337
    %v2141 = vunpack.c.l.b16 %v1338
    %v2142 = vunpack.c.h.b16 %v1338
    %v2143 = vunpack.c.l.b16 %v1339
    %v2144 = vunpack.c.h.b16 %v1339
    %v2145 = vunpack.c.l.b16 %v1340
    %v2146 = vunpack.c.h.b16 %v1340
    %v2147 = vunpack.c.l.b16 %v1341
    %v2148 = vunpack.c.h.b16 %v1341
    %v2149 = vunpack.c.l.b16 %v1342
    %v2150 = vunpack.c.h.b16 %v1342
    %v2151 = vunpack.c.l.b16 %v1343
    %v2152 = vunpack.c.h.b16 %v1343
    %v2153 = vunpack.c.l.b16 %v1344
    %v2154 = vunpack.c.h.b16 %v1344
    %v2155 = vunpack.c.l.b16 %v1345
    %v2156 = vunpack.c.h.b16 %v1345
    %v2157 = vunpack.c.l.b16 %v1346
    %v2158 = vunpack.c.h.b16 %v1346
    %v2159 = vunpack.c.l.b16 %v1347
    %v2160 = vunpack.c.h.b16 %v1347
    %v2161 = vunpack.c.l.b16 %v1348
    %v2162 = vunpack.c.h.b16 %v1348
    %v2163 = vunpack.c.l.b16 %v1349
    %v2164 = vunpack.c.h.b16 %v1349
    %v2165 = vunpack.c.l.b16 %v1350
    %v2166 = vunpack.c.h.b16 %v1350
    %v2167 = vunpack.c.l.b16 %v1351
    %v2168 = vunpack.c.h.b16 %v1351
    %v2169 = vunpack.c.l.b16 %v1352
    %v2170 = vunpack.c.h.b16 %v1352
    %v2171 = vunpack.c.l.b16 %v1353
    %v2172 = vunpack.c.h.b16 %v1353
    %v2173 = vunpack.c.l.b16 %v1354
    %v2174 = vunpack.c.h.b16 %v1354
    %v2175 = vunpack.c.l.b16 %v1355
    %v2176 = vunpack.c.h.b16 %v1355
    %v2177 = vunpack.c.l.b16 %v1356
    %v2178 = vunpack.c.h.b16 %v1356
    %v2179 = vunpack.c.l.b16 %v1357
    %v2180 = vunpack.c.h.b16 %v1357
    %v2181 = vunpack.c.l.b16 %v1358
    %v2182 = vunpack.c.h.b16 %v1358
    %v2183 = vunpack.c.l.b16 %v1359
    %v2184 = vunpack.c.h.b16 %v1359
    %v2185 = vunpack.c.l.b16 %v1360
    %v2186 = vunpack.c.h.b16 %v1360
    %v2187 = vunpack.c.l.b16 %v1361
    %v2188 = vunpack.c.h.b16 %v1361
    %v2189 = vunpack.c.l.b16 %v1362
    %v2190 = vunpack.c.h.b16 %v1362
    %v2191 = vunpack.c.l.b16 %v1363
    %v2192 = vunpack.c.h.b16 %v1363
    %v2193 = vunpack.c.l.b16 %v1364
    %v2194 = vunpack.c.h.b16 %v1364
    %v2195 = vunpack.c.l.b16 %v1365
    %v2196 = vunpack.c.h.b16 %v1365
    %v2197 = vunpack.c.l.b16 %v1366
    %v2198 = vunpack.c.h.b16 %v1366
    %v2199 = vunpack.c.l.b16 %v1367
    %v2200 = vunpack.c.h.b16 %v1367
    %v2201 = vunpack.c.l.b16 %v1368
    %v2202 = vunpack.c.h.b16 %v1368
    %v2203 = vunpack.c.l.b16 %v1369
    %v2204 = vunpack.c.h.b16 %v1369
    %v2205 = vunpack.c.l.b16 %v1370
    %v2206 = vunpack.c.h.b16 %v1370
    %v2207 = vunpack.c.l.b16 %v1371
    %v2208 = vunpack.c.h.b16 %v1371
    %v2209 = vunpack.c.l.b16 %v1372
    %v2210 = vunpack.c.h.b16 %v1372
    %v2211 = vunpack.c.l.b16 %v1373
    %v2212 = vunpack.c.h.b16 %v1373
    %v2213 = vunpack.c.l.b16 %v1374
    %v2214 = vunpack.c.h.b16 %v1374
    %v2215 = vunpack.c.l.b16 %v1375
    %v2216 = vunpack.c.h.b16 %v1375
    %v2217 = vunpack.c.l.b16 %v1376
    %v2218 = vunpack.c.h.b16 %v1376
    %v2219 = vunpack.c.l.b16 %v1377
    %v2220 = vunpack.c.h.b16 %v1377
    %v2221 = vunpack.c.l.b16 %v1378
    %v2222 = vunpack.c.h.b16 %v1378
    %v2223 = vpack.c.b16 %v1719, %v1711
    %v2224 = vpack.c.b16 %v1720, %v1712
    %v2225 = vpack.c.b16 %v1721, %v1713
    %v2226 = vpack.c.b16 %v1722, %v1714
    %v2227 = vpack.c.b16 %v1723, %v1715
    %v2228 = vpack.c.b16 %v1724, %v1716
    %v2229 = vpack.c.b16 %v1725, %v1717
    %v2230 = vpack.c.b16 %v1726, %v1718
    %v2231 = vpack.c.b16 %v1735, %v1727
    %v2232 = vpack.c.b16 %v1736, %v1728
    %v2233 = vpack.c.b16 %v1737, %v1729
    %v2234 = vpack.c.b16 %v1738, %v1730
    %v2235 = vpack.c.b16 %v1739, %v1731
    %v2236 = vpack.c.b16 %v1740, %v1732
    %v2237 = vpack.c.b16 %v1741, %v1733
    %v2238 = vpack.c.b16 %v1742, %v1734
    %v2239 = vpack.c.b16 %v1751, %v1743
    %v2240 = vpack.c.b16 %v1752, %v1744
    %v2241 = vpack.c.b16 %v1753, %v1745
    %v2242 = vpack.c.b16 %v1754, %v1746
    %v2243 = vpack.c.b16 %v1755, %v1747
    %v2244 = vpack.c.b16 %v1756, %v1748
    %v2245 = vpack.c.b16 %v1757, %v1749
    %v2246 = vpack.c.b16 %v1758, %v1750
    %v2247 = vpack.c.b16 %v1767, %v1759
    %v2248 = vpack.c.b16 %v1768, %v1760
    %v2249 = vpack.c.b16 %v1769, %v1761
    %v2250 = vpack.c.b16 %v1770, %v1762
    %v2251 = vpack.c.b16 %v1771, %v1763
    %v2252 = vpack.c.b16 %v1772, %v1764
    %v2253 = vpack.c.b16 %v1773, %v1765
    %v2254 = vpack.c.b16 %v1774, %v1766
    %v2255 = vpack.c.b16 %v1783, %v1775
    %v2256 = vpack.c.b16 %v1784, %v1776
    %v2257 = vpack.c.b16 %v1785, %v1777
    %v2258 = vpack.c.b16 %v1786, %v1778
    %v2259 = vpack.c.b16 %v1787, %v1779
    %v2260 = vpack.c.b16 %v1788, %v1780
    %v2261 = vpack.c.b16 %v1789, %v1781
    %v2262 = vpack.c.b16 %v1790, %v1782
    %v2263 = vpack.c.b16 %v1799, %v1791
    %v2264 = vpack.c.b16 %v1800, %v1792
    %v2265 = vpack.c.b16 %v1801, %v1793
    %v2266 = vpack.c.b16 %v1802, %v1794
    %v2267 = vpack.c.b16 %v1803, %v1795
    %v2268 = vpack.c.b16 %v1804, %v1796
    %v2269 = vpack.c.b16 %v1805, %v1797
    %v2270 = vpack.c.b16 %v1806, %v1798
    %v2271 = vpack.c.b16 %v1815, %v1807
    %v2272 = vpack.c.b16 %v1816, %v1808
    %v2273 = vpack.c.b16 %v1817, %v1809
    %v2274 = vpack.c.b16 %v1818, %v1810
    %v2275 = vpack.c.b16 %v1819, %v1811
    %v2276 = vpack.c.b16 %v1820, %v1812
    %v2277 = vpack.c.b16 %v1821, %v1813
    %v2278 = vpack.c.b16 %v1822, %v1814
    %v2279 = vpack.c.b16 %v1831, %v1823
    %v2280 = vpack.c.b16 %v1832, %v1824
    %v2281 = vpack.c.b16 %v1833, %v1825
    %v2282 = vpack.c.b16 %v1834, %v1826
    %v2283 = vpack.c.b16 %v1835, %v1827
    %v2284 = vpack.c.b16 %v1836, %v1828
    %v2285 = vpack.c.b16 %v1837, %v1829
    %v2286 = vpack.c.b16 %v1838, %v1830
    %v2287 = vpack.c.b16 %v1847, %v1839
    %v2288 = vpack.c.b16 %v1848, %v1840
    %v2289 = vpack.c.b16 %v1849, %v1841
    %v2290 = vpack.c.b16 %v1850, %v1842
    %v2291 = vpack.c.b16 %v1851, %v1843
    %v2292 = vpack.c.b16 %v1852, %v1844
    %v2293 = vpack.c.b16 %v1853, %v1845
    %v2294 = vpack.c.b16 %v1854, %v1846
    %v2295 = vpack.c.b16 %v1863, %v1855
    %v2296 = vpack.c.b16 %v1864, %v1856
    %v2297 = vpack.c.b16 %v1865, %v1857
    %v2298 = vpack.c.b16 %v1866, %v1858
    %v2299 = vpack.c.b16 %v1867, %v1859
    %v2300 = vpack.c.b16 %v1868, %v1860
    %v2301 = vpack.c.b16 %v1869, %v1861
    %v2302 = vpack.c.b16 %v1870, %v1862
    %v2303 = vpack.c.b16 %v1879, %v1871
    %v2304 = vpack.c.b16 %v1880, %v1872
    %v2305 = vpack.c.b16 %v1881, %v1873
    %v2306 = vpack.c.b16 %v1882, %v1874
    %v2307 = vpack.c.b16 %v1883, %v1875
    %v2308 = vpack.c.b16 %v1884, %v1876
    %v2309 = vpack.c.b16 %v1885, %v1877
    %v2310 = vpack.c.b16 %v1886, %v1878
    %v2311 = vpack.c.b16 %v1895, %v1887
    %v2312 = vpack.c.b16 %v1896, %v1888
    %v2313 = vpack.c.b16 %v1897, %v1889
    %v2314 = vpack.c.b16 %v1898, %v1890
    %v2315 = vpack.c.b16 %v1899, %v1891
    %v2316 = vpack.c.b16 %v1900, %v1892
    %v2317 = vpack.c.b16 %v1901, %v1893
    %v2318 = vpack.c.b16 %v1902, %v1894
    %v2319 = vpack.c.b16 %v1911, %v1903
    %v2320 = vpack.c.b16 %v1912, %v1904
    %v2321 = vpack.c.b16 %v1913, %v1905
    %v2322 = vpack.c.b16 %v1914, %v1906
    %v2323 = vpack.c.b16 %v1915, %v1907
    %v2324 = vpack.c.b16 %v1916, %v1908
    %v2325 = vpack.c.b16 %v1917, %v1909
    %v2326 = vpack.c.b16 %v1918, %v1910
    %v2327 = vpack.c.b16 %v1927, %v1919
    %v2328 = vpack.c.b16 %v1928, %v1920
    %v2329 = vpack.c.b16 %v1929, %v1921
    %v2330 = vpack.c.b16 %v1930, %v1922
    %v2331 = vpack.c.b16 %v1931, %v1923
    %v2332 = vpack.c.b16 %v1932, %v1924
    %v2333 = vpack.c.b16 %v1933, %v1925
    %v2334 = vpack.c.b16 %v1934, %v1926
    %v2335 = vpack.c.b16 %v1943, %v1935
    %v2336 = vpack.c.b16 %v1944, %v1936
    %v2337 = vpack.c.b16 %v1945, %v1937
    %v2338 = vpack.c.b16 %v1946, %v1938
    %v2339 = vpack.c.b16 %v1947, %v1939
    %v2340 = vpack.c.b16 %v1948, %v1940
    %v2341 = vpack.c.b16 %v1949, %v1941
    %v2342 = vpack.c.b16 %v1950, %v1942
    %v2343 = vpack.c.b16 %v1959, %v1951
    %v2344 = vpack.c.b16 %v1960, %v1952
    %v2345 = vpack.c.b16 %v1961, %v1953
    %v2346 = vpack.c.b16 %v1962, %v1954
    %v2347 = vpack.c.b16 %v1963, %v1955
    %v2348 = vpack.c.b16 %v1964, %v1956
    %v2349 = vpack.c.b16 %v1965, %v1957
    %v2350 = vpack.c.b16 %v1966, %v1958
    %v2351 = vpack.c.b16 %v1975, %v1967
    %v2352 = vpack.c.b16 %v1976, %v1968
    %v2353 = vpack.c.b16 %v1977, %v1969
    %v2354 = vpack.c.b16 %v1978, %v1970
    %v2355 = vpack.c.b16 %v1979, %v1971
    %v2356 = vpack.c.b16 %v1980, %v1972
    %v2357 = vpack.c.b16 %v1981, %v1973
    %v2358 = vpack.c.b16 %v1982, %v1974
    %v2359 = vpack.c.b16 %v1991, %v1983
    %v2360 = vpack.c.b16 %v1992, %v1984
    %v2361 = vpack.c.b16 %v1993, %v1985
    %v2362 = vpack.c.b16 %v1994, %v1986
    %v2363 = vpack.c.b16 %v1995, %v1987
    %v2364 = vpack.c.b16 %v1996, %v1988
    %v2365 = vpack.c.b16 %v1997, %v1989
    %v2366 = vpack.c.b16 %v1998, %v1990
    %v2367 = vpack.c.b16 %v2007, %v1999
    %v2368 = vpack.c.b16 %v2008, %v2000
    %v2369 = vpack.c.b16 %v2009, %v2001
    %v2370 = vpack.c.b16 %v2010, %v2002
    %v2371 = vpack.c.b16 %v2011, %v2003
    %v2372 = vpack.c.b16 %v2012, %v2004
    %v2373 = vpack.c.b16 %v2013, %v2005
    %v2374 = vpack.c.b16 %v2014, %v2006
    %v2375 = vpack.c.b16 %v2023, %v2015
    %v2376 = vpack.c.b16 %v2024, %v2016
    %v2377 = vpack.c.b16 %v2025, %v2017
    %v2378 = vpack.c.b16 %v2026, %v2018
    %v2379 = vpack.c.b16 %v2027, %v2019
    %v2380 = vpack.c.b16 %v2028, %v2020
    %v2381 = vpack.c.b16 %v2029, %v2021
    %v2382 = vpack.c.b16 %v2030, %v2022
    %v2383 = vpack.c.b16 %v2039, %v2031
    %v2384 = vpack.c.b16 %v2040, %v2032
    %v2385 = vpack.c.b16 %v2041, %v2033
    %v2386 = vpack.c.b16 %v2042, %v2034
    %v2387 = vpack.c.b16 %v2043, %v2035
    %v2388 = vpack.c.b16 %v2044, %v2036
    %v2389 = vpack.c.b16 %v2045, %v2037
    %v2390 = vpack.c.b16 %v2046, %v2038
    %v2391 = vpack.c.b16 %v2055, %v2047
    %v2392 = vpack.c.b16 %v2056, %v2048
    %v2393 = vpack.c.b16 %v2057, %v2049
    %v2394 = vpack.c.b16 %v2058, %v2050
    %v2395 = vpack.c.b16 %v2059, %v2051
    %v2396 = vpack.c.b16 %v2060, %v2052
    %v2397 = vpack.c.b16 %v2061, %v2053
    %v2398 = vpack.c.b16 %v2062, %v2054
    %v2399 = vpack.c.b16 %v2071, %v2063
    %v2400 = vpack.c.b16 %v2072, %v2064
    %v2401 = vpack.c.b16 %v2073, %v2065
    %v2402 = vpack.c.b16 %v2074, %v2066
    %v2403 = vpack.c.b16 %v2075, %v2067
    %v2404 = vpack.c.b16 %v2076, %v2068
    %v2405 = vpack.c.b16 %v2077, %v2069
    %v2406 = vpack.c.b16 %v2078, %v2070
    %v2407 = vpack.c.b16 %v2087, %v2079
    %v2408 = vpack.c.b16 %v2088, %v2080
    %v2409 = vpack.c.b16 %v2089, %v2081
    %v2410 = vpack.c.b16 %v2090, %v2082
    %v2411 = vpack.c.b16 %v2091, %v2083
    %v2412 = vpack.c.b16 %v2092, %v2084
    %v2413 = vpack.c.b16 %v2093, %v2085
    %v2414 = vpack.c.b16 %v2094, %v2086
    %v2415 = vpack.c.b16 %v2103, %v2095
    %v2416 = vpack.c.b16 %v2104, %v2096
    %v2417 = vpack.c.b16 %v2105, %v2097
    %v2418 = vpack.c.b16 %v2106, %v2098
    %v2419 = vpack.c.b16 %v2107, %v2099
    %v2420 = vpack.c.b16 %v2108, %v2100
    %v2421 = vpack.c.b16 %v2109, %v2101
    %v2422 = vpack.c.b16 %v2110, %v2102
    %v2423 = vpack.c.b16 %v2119, %v2111
    %v2424 = vpack.c.b16 %v2120, %v2112
    %v2425 = vpack.c.b16 %v2121, %v2113
    %v2426 = vpack.c.b16 %v2122, %v2114
    %v2427 = vpack.c.b16 %v2123, %v2115
    %v2428 = vpack.c.b16 %v2124, %v2116
    %v2429 = vpack.c.b16 %v2125, %v2117
    %v2430 = vpack.c.b16 %v2126, %v2118
    %v2431 = vpack.c.b16 %v2135, %v2127
    %v2432 = vpack.c.b16 %v2136, %v2128
    %v2433 = vpack.c.b16 %v2137, %v2129
    %v2434 = vpack.c.b16 %v2138, %v2130
    %v2435 = vpack.c.b16 %v2139, %v2131
    %v2436 = vpack.c.b16 %v2140, %v2132
    %v2437 = vpack.c.b16 %v2141, %v2133
    %v2438 = vpack.c.b16 %v2142, %v2134
    %v2439 = vpack.c.b16 %v2151, %v2143
    %v2440 = vpack.c.b16 %v2152, %v2144
    %v2441 = vpack.c.b16 %v2153, %v2145
    %v2442 = vpack.c.b16 %v2154, %v2146
    %v2443 = vpack.c.b16 %v2155, %v2147
    %v2444 = vpack.c.b16 %v2156, %v2148
    %v2445 = vpack.c.b16 %v2157, %v2149
    %v2446 = vpack.c.b16 %v2158, %v2150
    %v2447 = vpack.c.b16 %v2167, %v2159
    %v2448 = vpack.c.b16 %v2168, %v2160
    %v2449 = vpack.c.b16 %v2169, %v2161
    %v2450 = vpack.c.b16 %v2170, %v2162
    %v2451 = vpack.c.b16 %v2171, %v2163
    %v2452 = vpack.c.b16 %v2172, %v2164
    %v2453 = vpack.c.b16 %v2173, %v2165
    %v2454 = vpack.c.b16 %v2174, %v2166
    %v2455 = vpack.c.b16 %v2183, %v2175
    %v2456 = vpack.c.b16 %v2184, %v2176
    %v2457 = vpack.c.b16 %v2185, %v2177
    %v2458 = vpack.c.b16 %v2186, %v2178
    %v2459 = vpack.c.b16 %v2187, %v2179
    %v2460 = vpack.c.b16 %v2188, %v2180
    %v2461 = vpack.c.b16 %v2189, %v2181
    %v2462 = vpack.c.b16 %v2190, %v2182
    %v2463 = vpack.c.b16 %v2199, %v2191
    %v2464 = vpack.c.b16 %v2200, %v2192
    %v2465 = vpack.c.b16 %v2201, %v2193
    %v2466 = vpack.c.b16 %v2202, %v2194
    %v2467 = vpack.c.b16 %v2203, %v2195
    %v2468 = vpack.c.b16 %v2204, %v2196
    %v2469 = vpack.c.b16 %v2205, %v2197
    %v2470 = vpack.c.b16 %v2206, %v2198
    %v2471 = vpack.c.b16 %v2215, %v2207
    %v2472 = vpack.c.b16 %v2216, %v2208
    %v2473 = vpack.c.b16 %v2217, %v2209
    %v2474 = vpack.c.b16 %v2218, %v2210
    %v2475 = vpack.c.b16 %v2219, %v2211
    %v2476 = vpack.c.b16 %v2220, %v2212
    %v2477 = vpack.c.b16 %v2221, %v2213
    %v2478 = vpack.c.b16 %v2222, %v2214
    %2735 = vmatprep.subr.bf16.mxu0 %v2224
    %2736 = vmatpush1.bf16.msra.mxu0 %v2223
    %2737 = vmatprep.subr.bf16.mxu0 %v2232
    %2738 = vmatpush1.bf16.msra.mxu0 %v2231
    %2739 = vmatprep.subr.bf16.mxu0 %v2240
    %2740 = vmatpush1.bf16.msra.mxu0 %v2239
    %2741 = vmatprep.subr.bf16.mxu0 %v2248
    %2742 = vmatpush1.bf16.msra.mxu0 %v2247
    %2743 = vmatprep.subr.bf16.mxu0 %v2256
    %2744 = vmatpush1.bf16.msra.mxu0 %v2255
    %2745 = vmatprep.subr.bf16.mxu0 %v2264
    %2746 = vmatpush1.bf16.msra.mxu0 %v2263
    %2747 = vmatprep.subr.bf16.mxu0 %v2272
    %2748 = vmatpush1.bf16.msra.mxu0 %v2271
    %2749 = vmatprep.subr.bf16.mxu0 %v2280
    %2750 = vmatpush1.bf16.msra.mxu0 %v2279
    %2751 = vmatprep.subr.bf16.mxu0 %v2288
    %2752 = vmatpush1.bf16.msra.mxu0 %v2287
    %2753 = vmatprep.subr.bf16.mxu0 %v2296
    %2754 = vmatpush1.bf16.msra.mxu0 %v2295
    %2755 = vmatprep.subr.bf16.mxu0 %v2304
    %2756 = vmatpush1.bf16.msra.mxu0 %v2303
    %2757 = vmatprep.subr.bf16.mxu0 %v2312
    %2758 = vmatpush1.bf16.msra.mxu0 %v2311
    %2759 = vmatprep.subr.bf16.mxu0 %v2320
    %2760 = vmatpush1.bf16.msra.mxu0 %v2319
    %2761 = vmatprep.subr.bf16.mxu0 %v2328
    %2762 = vmatpush1.bf16.msra.mxu0 %v2327
    %2763 = vmatprep.subr.bf16.mxu0 %v2336
    %2764 = vmatpush1.bf16.msra.mxu0 %v2335
    %2765 = vmatprep.subr.bf16.mxu0 %v2344
    %2766 = vmatpush1.bf16.msra.mxu0 %v2343
    %2767 = vmatprep.mubr.bf16.mxu0 %v1116
    %2768 = vmatmul.mubr.bf16.gmra.mrb[0].mxu0 %v1115
    %v2769 = vpop.f32.mrb[0].mxu0
    %v2770 = vadd.f32 %v1426, %v2769
    %v2771 = vpop.f32.mrb[0].mxu0
    %v2772 = vadd.f32 %v1430, %v2771
    %v2773 = vpop.f32.mrb[0].mxu0
    %v2774 = vpop.f32.mrb[0].mxu0
    %2775 = vdwg.mxu0
    %2776 = vmatprep.subr.bf16.mxu0 %v2352
    %2777 = vmatpush1.bf16.msra.mxu0 %v2351
    %2778 = vmatprep.subr.bf16.mxu0 %v2360
    %2779 = vmatpush1.bf16.msra.mxu0 %v2359
    %2780 = vmatprep.subr.bf16.mxu0 %v2368
    %2781 = vmatpush1.bf16.msra.mxu0 %v2367
    %2782 = vmatprep.subr.bf16.mxu0 %v2376
    %2783 = vmatpush1.bf16.msra.mxu0 %v2375
    %2784 = vmatprep.subr.bf16.mxu0 %v2384
    %2785 = vmatpush1.bf16.msra.mxu0 %v2383
    %2786 = vmatprep.subr.bf16.mxu0 %v2392
    %2787 = vmatpush1.bf16.msra.mxu0 %v2391
    %2788 = vmatprep.subr.bf16.mxu0 %v2400
    %2789 = vmatpush1.bf16.msra.mxu0 %v2399
    %2790 = vmatprep.subr.bf16.mxu0 %v2408
    %2791 = vmatpush1.bf16.msra.mxu0 %v2407
    %2792 = vmatprep.subr.bf16.mxu0 %v2416
    %2793 = vmatpush1.bf16.msra.mxu0 %v2415
    %2794 = vmatprep.subr.bf16.mxu0 %v2424
    %2795 = vmatpush1.bf16.msra.mxu0 %v2423
    %2796 = vmatprep.subr.bf16.mxu0 %v2432
    %2797 = vmatpush1.bf16.msra.mxu0 %v2431
    %2798 = vmatprep.subr.bf16.mxu0 %v2440
    %2799 = vmatpush1.bf16.msra.mxu0 %v2439
    %2800 = vmatprep.subr.bf16.mxu0 %v2448
    %2801 = vmatpush1.bf16.msra.mxu0 %v2447
    %2802 = vmatprep.subr.bf16.mxu0 %v2456
    %2803 = vmatpush1.bf16.msra.mxu0 %v2455
    %2804 = vmatprep.subr.bf16.mxu0 %v2464
    %2805 = vmatpush1.bf16.msra.mxu0 %v2463
    %2806 = vmatprep.subr.bf16.mxu0 %v2472
    %2807 = vmatpush1.bf16.msra.mxu0 %v2471
    %2808 = vmatprep.mubr.bf16.mxu0 %v1118
    %2809 = vmatmul.mubr.bf16.gmra.mrb[0].mxu0 %v1117
    %v2810 = vpop.f32.mrb[0].mxu0
    %v2811 = vadd.f32 %v2770, %v2810
    %v2812 = vpop.f32.mrb[0].mxu0
    %v2813 = vadd.f32 %v2772, %v2812
    %v2814 = vpop.f32.mrb[0].mxu0
    %v2815 = vpop.f32.mrb[0].mxu0
    %2816 = vdwg.mxu0
    %2817 = vmatprep.subr.bf16.mxu0 %v2226
    %2818 = vmatpush1.bf16.msra.mxu0 %v2225
    %2819 = vmatprep.subr.bf16.mxu0 %v2234
    %2820 = vmatpush1.bf16.msra.mxu0 %v2233
    %2821 = vmatprep.subr.bf16.mxu0 %v2242
    %2822 = vmatpush1.bf16.msra.mxu0 %v2241
    %2823 = vmatprep.subr.bf16.mxu0 %v2250
    %2824 = vmatpush1.bf16.msra.mxu0 %v2249
    %2825 = vmatprep.subr.bf16.mxu0 %v2258
    %2826 = vmatpush1.bf16.msra.mxu0 %v2257
    %2827 = vmatprep.subr.bf16.mxu0 %v2266
    %2828 = vmatpush1.bf16.msra.mxu0 %v2265
    %2829 = vmatprep.subr.bf16.mxu0 %v2274
    %2830 = vmatpush1.bf16.msra.mxu0 %v2273
    %2831 = vmatprep.subr.bf16.mxu0 %v2282
    %2832 = vmatpush1.bf16.msra.mxu0 %v2281
    %2833 = vmatprep.subr.bf16.mxu0 %v2290
    %2834 = vmatpush1.bf16.msra.mxu0 %v2289
    %2835 = vmatprep.subr.bf16.mxu0 %v2298
    %2836 = vmatpush1.bf16.msra.mxu0 %v2297
    %2837 = vmatprep.subr.bf16.mxu0 %v2306
    %2838 = vmatpush1.bf16.msra.mxu0 %v2305
    %2839 = vmatprep.subr.bf16.mxu0 %v2314
    %2840 = vmatpush1.bf16.msra.mxu0 %v2313
    %2841 = vmatprep.subr.bf16.mxu0 %v2322
    %2842 = vmatpush1.bf16.msra.mxu0 %v2321
    %2843 = vmatprep.subr.bf16.mxu0 %v2330
    %2844 = vmatpush1.bf16.msra.mxu0 %v2329
    %2845 = vmatprep.subr.bf16.mxu0 %v2338
    %2846 = vmatpush1.bf16.msra.mxu0 %v2337
    %2847 = vmatprep.subr.bf16.mxu0 %v2346
    %2848 = vmatpush1.bf16.msra.mxu0 %v2345
    %2849 = vmatprep.mubr.bf16.mxu0 %v1116
    %2850 = vmatmul.mubr.bf16.gmra.mrb[0].mxu0 %v1115
    %v2851 = vpop.f32.mrb[0].mxu0
    %v2852 = vadd.f32 %v1434, %v2851
    %v2853 = vpop.f32.mrb[0].mxu0
    %v2854 = vadd.f32 %v1438, %v2853
    %v2855 = vpop.f32.mrb[0].mxu0
    %v2856 = vpop.f32.mrb[0].mxu0
    %2857 = vdwg.mxu0
    %2858 = vmatprep.subr.bf16.mxu0 %v2354
    %2859 = vmatpush1.bf16.msra.mxu0 %v2353
    %2860 = vmatprep.subr.bf16.mxu0 %v2362
    %2861 = vmatpush1.bf16.msra.mxu0 %v2361
    %2862 = vmatprep.subr.bf16.mxu0 %v2370
    %2863 = vmatpush1.bf16.msra.mxu0 %v2369
    %2864 = vmatprep.subr.bf16.mxu0 %v2378
    %2865 = vmatpush1.bf16.msra.mxu0 %v2377
    %2866 = vmatprep.subr.bf16.mxu0 %v2386
    %2867 = vmatpush1.bf16.msra.mxu0 %v2385
    %2868 = vmatprep.subr.bf16.mxu0 %v2394
    %2869 = vmatpush1.bf16.msra.mxu0 %v2393
    %2870 = vmatprep.subr.bf16.mxu0 %v2402
    %2871 = vmatpush1.bf16.msra.mxu0 %v2401
    %2872 = vmatprep.subr.bf16.mxu0 %v2410
    %2873 = vmatpush1.bf16.msra.mxu0 %v2409
    %2874 = vmatprep.subr.bf16.mxu0 %v2418
    %2875 = vmatpush1.bf16.msra.mxu0 %v2417
    %2876 = vmatprep.subr.bf16.mxu0 %v2426
    %2877 = vmatpush1.bf16.msra.mxu0 %v2425
    %2878 = vmatprep.subr.bf16.mxu0 %v2434
    %2879 = vmatpush1.bf16.msra.mxu0 %v2433
    %2880 = vmatprep.subr.bf16.mxu0 %v2442
    %2881 = vmatpush1.bf16.msra.mxu0 %v2441
    %2882 = vmatprep.subr.bf16.mxu0 %v2450
    %2883 = vmatpush1.bf16.msra.mxu0 %v2449
    %2884 = vmatprep.subr.bf16.mxu0 %v2458
    %2885 = vmatpush1.bf16.msra.mxu0 %v2457
    %2886 = vmatprep.subr.bf16.mxu0 %v2466
    %2887 = vmatpush1.bf16.msra.mxu0 %v2465
    %2888 = vmatprep.subr.bf16.mxu0 %v2474
    %2889 = vmatpush1.bf16.msra.mxu0 %v2473
    %2890 = vmatprep.mubr.bf16.mxu0 %v1118
    %2891 = vmatmul.mubr.bf16.gmra.mrb[0].mxu0 %v1117
    %v2892 = vpop.f32.mrb[0].mxu0
    %v2893 = vadd.f32 %v2852, %v2892
    %v2894 = vpop.f32.mrb[0].mxu0
    %v2895 = vadd.f32 %v2854, %v2894
    %v2896 = vpop.f32.mrb[0].mxu0
    %v2897 = vpop.f32.mrb[0].mxu0
    %2898 = vdwg.mxu0
    %2899 = vmatprep.subr.bf16.mxu0 %v2228
    %2900 = vmatpush1.bf16.msra.mxu0 %v2227
    %2901 = vmatprep.subr.bf16.mxu0 %v2236
    %2902 = vmatpush1.bf16.msra.mxu0 %v2235
    %2903 = vmatprep.subr.bf16.mxu0 %v2244
    %2904 = vmatpush1.bf16.msra.mxu0 %v2243
    %2905 = vmatprep.subr.bf16.mxu0 %v2252
    %2906 = vmatpush1.bf16.msra.mxu0 %v2251
    %2907 = vmatprep.subr.bf16.mxu0 %v2260
    %2908 = vmatpush1.bf16.msra.mxu0 %v2259
    %2909 = vmatprep.subr.bf16.mxu0 %v2268
    %2910 = vmatpush1.bf16.msra.mxu0 %v2267
    %2911 = vmatprep.subr.bf16.mxu0 %v2276
    %2912 = vmatpush1.bf16.msra.mxu0 %v2275
    %2913 = vmatprep.subr.bf16.mxu0 %v2284
    %2914 = vmatpush1.bf16.msra.mxu0 %v2283
    %2915 = vmatprep.subr.bf16.mxu0 %v2292
    %2916 = vmatpush1.bf16.msra.mxu0 %v2291
    %2917 = vmatprep.subr.bf16.mxu0 %v2300
    %2918 = vmatpush1.bf16.msra.mxu0 %v2299
    %2919 = vmatprep.subr.bf16.mxu0 %v2308
    %2920 = vmatpush1.bf16.msra.mxu0 %v2307
    %2921 = vmatprep.subr.bf16.mxu0 %v2316
    %2922 = vmatpush1.bf16.msra.mxu0 %v2315
    %2923 = vmatprep.subr.bf16.mxu0 %v2324
    %2924 = vmatpush1.bf16.msra.mxu0 %v2323
    %2925 = vmatprep.subr.bf16.mxu0 %v2332
    %2926 = vmatpush1.bf16.msra.mxu0 %v2331
    %2927 = vmatprep.subr.bf16.mxu0 %v2340
    %2928 = vmatpush1.bf16.msra.mxu0 %v2339
    %2929 = vmatprep.subr.bf16.mxu0 %v2348
    %2930 = vmatpush1.bf16.msra.mxu0 %v2347
    %2931 = vmatprep.mubr.bf16.mxu0 %v1116
    %2932 = vmatmul.mubr.bf16.gmra.mrb[0].mxu0 %v1115
    %v2933 = vpop.f32.mrb[0].mxu0
    %v2934 = vadd.f32 %v1442, %v2933
    %v2935 = vpop.f32.mrb[0].mxu0
    %v2936 = vadd.f32 %v1446, %v2935
    %v2937 = vpop.f32.mrb[0].mxu0
    %v2938 = vpop.f32.mrb[0].mxu0
    %2939 = vdwg.mxu0
    %2940 = vmatprep.subr.bf16.mxu0 %v2356
    %2941 = vmatpush1.bf16.msra.mxu0 %v2355
    %2942 = vmatprep.subr.bf16.mxu0 %v2364
    %2943 = vmatpush1.bf16.msra.mxu0 %v2363
    %2944 = vmatprep.subr.bf16.mxu0 %v2372
    %2945 = vmatpush1.bf16.msra.mxu0 %v2371
    %2946 = vmatprep.subr.bf16.mxu0 %v2380
    %2947 = vmatpush1.bf16.msra.mxu0 %v2379
    %2948 = vmatprep.subr.bf16.mxu0 %v2388
    %2949 = vmatpush1.bf16.msra.mxu0 %v2387
    %2950 = vmatprep.subr.bf16.mxu0 %v2396
    %2951 = vmatpush1.bf16.msra.mxu0 %v2395
    %2952 = vmatprep.subr.bf16.mxu0 %v2404
    %2953 = vmatpush1.bf16.msra.mxu0 %v2403
    %2954 = vmatprep.subr.bf16.mxu0 %v2412
    %2955 = vmatpush1.bf16.msra.mxu0 %v2411
    %2956 = vmatprep.subr.bf16.mxu0 %v2420
    %2957 = vmatpush1.bf16.msra.mxu0 %v2419
    %2958 = vmatprep.subr.bf16.mxu0 %v2428
    %2959 = vmatpush1.bf16.msra.mxu0 %v2427
    %2960 = vmatprep.subr.bf16.mxu0 %v2436
    %2961 = vmatpush1.bf16.msra.mxu0 %v2435
    %2962 = vmatprep.subr.bf16.mxu0 %v2444
    %2963 = vmatpush1.bf16.msra.mxu0 %v2443
    %2964 = vmatprep.subr.bf16.mxu0 %v2452
    %2965 = vmatpush1.bf16.msra.mxu0 %v2451
    %2966 = vmatprep.subr.bf16.mxu0 %v2460
    %2967 = vmatpush1.bf16.msra.mxu0 %v2459
    %2968 = vmatprep.subr.bf16.mxu0 %v2468
    %2969 = vmatpush1.bf16.msra.mxu0 %v2467
    %2970 = vmatprep.subr.bf16.mxu0 %v2476
    %2971 = vmatpush1.bf16.msra.mxu0 %v2475
    %2972 = vmatprep.mubr.bf16.mxu0 %v1118
    %2973 = vmatmul.mubr.bf16.gmra.mrb[0].mxu0 %v1117
    %v2974 = vpop.f32.mrb[0].mxu0
    %v2975 = vadd.f32 %v2934, %v2974
    %v2976 = vpop.f32.mrb[0].mxu0
    %v2977 = vadd.f32 %v2936, %v2976
    %v2978 = vpop.f32.mrb[0].mxu0
    %v2979 = vpop.f32.mrb[0].mxu0
    %2980 = vdwg.mxu0
    %2981 = vmatprep.subr.bf16.mxu0 %v2230
    %2982 = vmatpush1.bf16.msra.mxu0 %v2229
    %2983 = vmatprep.subr.bf16.mxu0 %v2238
    %2984 = vmatpush1.bf16.msra.mxu0 %v2237
    %2985 = vmatprep.subr.bf16.mxu0 %v2246
    %2986 = vmatpush1.bf16.msra.mxu0 %v2245
    %2987 = vmatprep.subr.bf16.mxu0 %v2254
    %2988 = vmatpush1.bf16.msra.mxu0 %v2253
    %2989 = vmatprep.subr.bf16.mxu0 %v2262
    %2990 = vmatpush1.bf16.msra.mxu0 %v2261
    %2991 = vmatprep.subr.bf16.mxu0 %v2270
    %2992 = vmatpush1.bf16.msra.mxu0 %v2269
    %2993 = vmatprep.subr.bf16.mxu0 %v2278
    %2994 = vmatpush1.bf16.msra.mxu0 %v2277
    %2995 = vmatprep.subr.bf16.mxu0 %v2286
    %2996 = vmatpush1.bf16.msra.mxu0 %v2285
    %2997 = vmatprep.subr.bf16.mxu0 %v2294
    %2998 = vmatpush1.bf16.msra.mxu0 %v2293
    %2999 = vmatprep.subr.bf16.mxu0 %v2302
    %3000 = vmatpush1.bf16.msra.mxu0 %v2301
    %3001 = vmatprep.subr.bf16.mxu0 %v2310
    %3002 = vmatpush1.bf16.msra.mxu0 %v2309
    %3003 = vmatprep.subr.bf16.mxu0 %v2318
    %3004 = vmatpush1.bf16.msra.mxu0 %v2317
    %3005 = vmatprep.subr.bf16.mxu0 %v2326
    %3006 = vmatpush1.bf16.msra.mxu0 %v2325
    %3007 = vmatprep.subr.bf16.mxu0 %v2334
    %3008 = vmatpush1.bf16.msra.mxu0 %v2333
    %3009 = vmatprep.subr.bf16.mxu0 %v2342
    %3010 = vmatpush1.bf16.msra.mxu0 %v2341
    %3011 = vmatprep.subr.bf16.mxu0 %v2350
    %3012 = vmatpush1.bf16.msra.mxu0 %v2349
    %3013 = vmatprep.mubr.bf16.mxu0 %v1116
    %3014 = vmatmul.mubr.bf16.gmra.mrb[0].mxu0 %v1115
    %v3015 = vpop.f32.mrb[0].mxu0
    %v3016 = vadd.f32 %v1450, %v3015
    %v3017 = vpop.f32.mrb[0].mxu0
    %v3018 = vadd.f32 %v1454, %v3017
    %v3019 = vpop.f32.mrb[0].mxu0
    %v3020 = vpop.f32.mrb[0].mxu0
    %3021 = vdwg.mxu0
    %3022 = vmatprep.subr.bf16.mxu0 %v2358
    %3023 = vmatpush1.bf16.msra.mxu0 %v2357
    %3024 = vmatprep.subr.bf16.mxu0 %v2366
    %3025 = vmatpush1.bf16.msra.mxu0 %v2365
    %3026 = vmatprep.subr.bf16.mxu0 %v2374
    %3027 = vmatpush1.bf16.msra.mxu0 %v2373
    %3028 = vmatprep.subr.bf16.mxu0 %v2382
    %3029 = vmatpush1.bf16.msra.mxu0 %v2381
    %3030 = vmatprep.subr.bf16.mxu0 %v2390
    %3031 = vmatpush1.bf16.msra.mxu0 %v2389
    %3032 = vmatprep.subr.bf16.mxu0 %v2398
    %3033 = vmatpush1.bf16.msra.mxu0 %v2397
    %3034 = vmatprep.subr.bf16.mxu0 %v2406
    %3035 = vmatpush1.bf16.msra.mxu0 %v2405
    %3036 = vmatprep.subr.bf16.mxu0 %v2414
    %3037 = vmatpush1.bf16.msra.mxu0 %v2413
    %3038 = vmatprep.subr.bf16.mxu0 %v2422
    %3039 = vmatpush1.bf16.msra.mxu0 %v2421
    %3040 = vmatprep.subr.bf16.mxu0 %v2430
    %3041 = vmatpush1.bf16.msra.mxu0 %v2429
    %3042 = vmatprep.subr.bf16.mxu0 %v2438
    %3043 = vmatpush1.bf16.msra.mxu0 %v2437
    %3044 = vmatprep.subr.bf16.mxu0 %v2446
    %3045 = vmatpush1.bf16.msra.mxu0 %v2445
    %3046 = vmatprep.subr.bf16.mxu0 %v2454
    %3047 = vmatpush1.bf16.msra.mxu0 %v2453
    %3048 = vmatprep.subr.bf16.mxu0 %v2462
    %3049 = vmatpush1.bf16.msra.mxu0 %v2461
    %3050 = vmatprep.subr.bf16.mxu0 %v2470
    %3051 = vmatpush1.bf16.msra.mxu0 %v2469
    %3052 = vmatprep.subr.bf16.mxu0 %v2478
    %3053 = vmatpush1.bf16.msra.mxu0 %v2477
    %3054 = vmatprep.mubr.bf16.mxu0 %v1118
    %3055 = vmatmul.mubr.bf16.gmra.mrb[0].mxu0 %v1117
    %v3056 = vpop.f32.mrb[0].mxu0
    %v3057 = vadd.f32 %v3016, %v3056
    %v3058 = vpop.f32.mrb[0].mxu0
    %v3059 = vadd.f32 %v3018, %v3058
    %v3060 = vpop.f32.mrb[0].mxu0
    %v3061 = vpop.f32.mrb[0].mxu0
    %3062 = vdwg.mxu0
    %v3063 = vadd.f32 %v2811, %v2813
    %v3064 = vadd.f32 %v3063, %v2893
    %v3065 = vadd.f32 %v3064, %v2895
    %v3066 = vadd.f32 %v3065, %v2975
    %v3067 = vadd.f32 %v3066, %v2977
    %v3068 = vadd.f32 %v3067, %v3057
    %v3069 = vadd.f32 %v3068, %v3059
    %3070 = vadd.xlane.f32.xlu0 %v3069
    %v3071 = vpop.xlane.xlu0 %3070
    %v3072 = vmul.f32 %v2811, %v2811
    %v3073 = vmul.f32 %v2813, %v2813
    %v3074 = vmul.f32 %v2893, %v2893
    %v3075 = vmul.f32 %v2895, %v2895
    %v3076 = vmul.f32 %v2975, %v2975
    %v3077 = vmul.f32 %v2977, %v2977
    %v3078 = vmul.f32 %v3057, %v3057
    %v3079 = vmul.f32 %v3059, %v3059
    %v3080 = vadd.f32 %v3072, %v3073
    %v3081 = vadd.f32 %v3080, %v3074
    %v3082 = vadd.f32 %v3081, %v3075
    %v3083 = vadd.f32 %v3082, %v3076
    %v3084 = vadd.f32 %v3083, %v3077
    %v3085 = vadd.f32 %v3084, %v3078
    %v3086 = vadd.f32 %v3085, %v3079
    %3087 = vadd.xlane.f32.xlu0 %v3086
    %v3088 = vpop.xlane.xlu0 %3087
    %v3089 = vmul.f32 %v3071, 0.0009765625
    %v3090 = vmul.f32 %v3088, 0.0009765625
    %v3091 = vmul.f32 %v3089, %v3089
    %v3092 = vsub.f32 %v3090, %v3091
    %v3093 = vadd.f32 %v3092, 1e-05
    %v3094 = vrsqrt.pop %v3093
    %v3095 = vsub.f32 %v2811, %v3089
    %v3096 = vsub.f32 %v2813, %v3089
    %v3097 = vsub.f32 %v2893, %v3089
    %v3098 = vsub.f32 %v2895, %v3089
    %v3099 = vsub.f32 %v2975, %v3089
    %v3100 = vsub.f32 %v2977, %v3089
    %v3101 = vsub.f32 %v3057, %v3089
    %v3102 = vsub.f32 %v3059, %v3089
    %v3103 = vmul.f32 %v3095, %v3094
    %v3104 = vmul.f32 %v3096, %v3094
    %v3105 = vmul.f32 %v3097, %v3094
    %v3106 = vmul.f32 %v3098, %v3094
    %v3107 = vmul.f32 %v3099, %v3094
    %v3108 = vmul.f32 %v3100, %v3094
    %v3109 = vmul.f32 %v3101, %v3094
    %v3110 = vmul.f32 %v3102, %v3094
    %v3111 = vlaneseq
    %v3112 = vshrl.u32 %v3111, 7
    %v3113 = vsub.s32 1, %v3112
    %v3114 = vrot.slane %v1119, %v3113
    %v3115 = vlaneseq
    %v3116 = vshrl.u32 %v3115, 7
    %v3117 = vsub.s32 5, %v3116
    %v3118 = vrot.slane %v1119, %v3117
    %v3119 = vlaneseq
    %v3120 = vshrl.u32 %v3119, 7
    %v3121 = vsub.s32 1, %v3120
    %v3122 = vrot.slane %v1120, %v3121
    %v3123 = vlaneseq
    %v3124 = vshrl.u32 %v3123, 7
    %v3125 = vsub.s32 5, %v3124
    %v3126 = vrot.slane %v1120, %v3125
    %v3127 = vlaneseq
    %v3128 = vshrl.u32 %v3127, 7
    %v3129 = vsub.s32 1, %v3128
    %v3130 = vrot.slane %v1121, %v3129
    %v3131 = vlaneseq
    %v3132 = vshrl.u32 %v3131, 7
    %v3133 = vsub.s32 5, %v3132
    %v3134 = vrot.slane %v1121, %v3133
    %v3135 = vlaneseq
    %v3136 = vshrl.u32 %v3135, 7
    %v3137 = vsub.s32 1, %v3136
    %v3138 = vrot.slane %v1122, %v3137
    %v3139 = vlaneseq
    %v3140 = vshrl.u32 %v3139, 7
    %v3141 = vsub.s32 5, %v3140
    %v3142 = vrot.slane %v1122, %v3141
    %v3151 = vlaneseq
    %v3152 = vshrl.u32 %v3151, 7
    %v3153 = vsub.s32 1, %v3152
    %v3154 = vrot.slane %v3114, %v3153
    %v3155 = vlaneseq
    %v3156 = vshrl.u32 %v3155, 7
    %v3157 = vsub.s32 1, %v3156
    %v3158 = vrot.slane %v3118, %v3157
    %v3159 = vlaneseq
    %v3160 = vshrl.u32 %v3159, 7
    %v3161 = vsub.s32 1, %v3160
    %v3162 = vrot.slane %v3122, %v3161
    %v3163 = vlaneseq
    %v3164 = vshrl.u32 %v3163, 7
    %v3165 = vsub.s32 1, %v3164
    %v3166 = vrot.slane %v3126, %v3165
    %v3167 = vlaneseq
    %v3168 = vshrl.u32 %v3167, 7
    %v3169 = vsub.s32 1, %v3168
    %v3170 = vrot.slane %v3130, %v3169
    %v3171 = vlaneseq
    %v3172 = vshrl.u32 %v3171, 7
    %v3173 = vsub.s32 1, %v3172
    %v3174 = vrot.slane %v3134, %v3173
    %v3175 = vlaneseq
    %v3176 = vshrl.u32 %v3175, 7
    %v3177 = vsub.s32 1, %v3176
    %v3178 = vrot.slane %v3138, %v3177
    %v3179 = vlaneseq
    %v3180 = vshrl.u32 %v3179, 7
    %v3181 = vsub.s32 1, %v3180
    %v3182 = vrot.slane %v3142, %v3181
    %v3183 = vmul.f32 %v3103, %v3154
    %v3184 = vmul.f32 %v3104, %v3158
    %v3185 = vmul.f32 %v3105, %v3162
    %v3186 = vmul.f32 %v3106, %v3166
    %v3187 = vmul.f32 %v3107, %v3170
    %v3188 = vmul.f32 %v3108, %v3174
    %v3189 = vmul.f32 %v3109, %v3178
    %v3190 = vmul.f32 %v3110, %v3182
    %v3191 = vlaneseq
    %v3192 = vshrl.u32 %v3191, 7
    %v3193 = vsub.s32 2, %v3192
    %v3194 = vrot.slane %v1119, %v3193
    %v3195 = vlaneseq
    %v3196 = vshrl.u32 %v3195, 7
    %v3197 = vsub.s32 6, %v3196
    %v3198 = vrot.slane %v1119, %v3197
    %v3199 = vlaneseq
    %v3200 = vshrl.u32 %v3199, 7
    %v3201 = vsub.s32 2, %v3200
    %v3202 = vrot.slane %v1120, %v3201
    %v3203 = vlaneseq
    %v3204 = vshrl.u32 %v3203, 7
    %v3205 = vsub.s32 6, %v3204
    %v3206 = vrot.slane %v1120, %v3205
    %v3207 = vlaneseq
    %v3208 = vshrl.u32 %v3207, 7
    %v3209 = vsub.s32 2, %v3208
    %v3210 = vrot.slane %v1121, %v3209
    %v3211 = vlaneseq
    %v3212 = vshrl.u32 %v3211, 7
    %v3213 = vsub.s32 6, %v3212
    %v3214 = vrot.slane %v1121, %v3213
    %v3215 = vlaneseq
    %v3216 = vshrl.u32 %v3215, 7
    %v3217 = vsub.s32 2, %v3216
    %v3218 = vrot.slane %v1122, %v3217
    %v3219 = vlaneseq
    %v3220 = vshrl.u32 %v3219, 7
    %v3221 = vsub.s32 6, %v3220
    %v3222 = vrot.slane %v1122, %v3221
    %v3231 = vlaneseq
    %v3232 = vshrl.u32 %v3231, 7
    %v3233 = vsub.s32 2, %v3232
    %v3234 = vrot.slane %v3194, %v3233
    %v3235 = vlaneseq
    %v3236 = vshrl.u32 %v3235, 7
    %v3237 = vsub.s32 2, %v3236
    %v3238 = vrot.slane %v3198, %v3237
    %v3239 = vlaneseq
    %v3240 = vshrl.u32 %v3239, 7
    %v3241 = vsub.s32 2, %v3240
    %v3242 = vrot.slane %v3202, %v3241
    %v3243 = vlaneseq
    %v3244 = vshrl.u32 %v3243, 7
    %v3245 = vsub.s32 2, %v3244
    %v3246 = vrot.slane %v3206, %v3245
    %v3247 = vlaneseq
    %v3248 = vshrl.u32 %v3247, 7
    %v3249 = vsub.s32 2, %v3248
    %v3250 = vrot.slane %v3210, %v3249
    %v3251 = vlaneseq
    %v3252 = vshrl.u32 %v3251, 7
    %v3253 = vsub.s32 2, %v3252
    %v3254 = vrot.slane %v3214, %v3253
    %v3255 = vlaneseq
    %v3256 = vshrl.u32 %v3255, 7
    %v3257 = vsub.s32 2, %v3256
    %v3258 = vrot.slane %v3218, %v3257
    %v3259 = vlaneseq
    %v3260 = vshrl.u32 %v3259, 7
    %v3261 = vsub.s32 2, %v3260
    %v3262 = vrot.slane %v3222, %v3261
    %v3263 = vadd.f32 %v3183, %v3234
    %v3264 = vadd.f32 %v3184, %v3238
    %v3265 = vadd.f32 %v3185, %v3242
    %v3266 = vadd.f32 %v3186, %v3246
    %v3267 = vadd.f32 %v3187, %v3250
    %v3268 = vadd.f32 %v3188, %v3254
    %v3269 = vadd.f32 %v3189, %v3258
    %v3270 = vadd.f32 %v3190, %v3262
    %v3271 = vmax.f32 %v3263, 0.0
    %v3272 = vmax.f32 %v3264, 0.0
    %v3273 = vmax.f32 %v3265, 0.0
    %v3274 = vmax.f32 %v3266, 0.0
    %v3275 = vmax.f32 %v3267, 0.0
    %v3276 = vmax.f32 %v3268, 0.0
    %v3277 = vmax.f32 %v3269, 0.0
    %v3278 = vmax.f32 %v3270, 0.0
    %v3279 = vpack.c.bf16 %v3271, %v3271
    %v3280 = vpack.c.bf16 %v3272, %v3272
    %v3281 = vpack.c.bf16 %v3273, %v3273
    %v3282 = vpack.c.bf16 %v3274, %v3274
    %v3283 = vpack.c.bf16 %v3275, %v3275
    %v3284 = vpack.c.bf16 %v3276, %v3276
    %v3285 = vpack.c.bf16 %v3277, %v3277
    %v3286 = vpack.c.bf16 %v3278, %v3278
    %v3287 = vld [vmem:[#allocation13] sm:$0xff]
    %v3288 = vld [vmem:[#allocation13 + $0x8] sm:$0xf]
    %v3289 = vld [vmem:[#allocation13 + $0xc] sm:$0xff]
    %v3290 = vld [vmem:[#allocation13 + $0x14] sm:$0xf]
    %v3291 = vld [vmem:[#allocation13 + $0x18] sm:$0xff]
    %v3292 = vld [vmem:[#allocation13 + $0x20] sm:$0xf]
    %v3293 = vld [vmem:[#allocation13 + $0x24] sm:$0xff]
    %v3294 = vld [vmem:[#allocation13 + $0x2c] sm:$0xf]
    %v3295 = vld [vmem:[#allocation13 + $0x30] sm:$0xff]
    %v3296 = vld [vmem:[#allocation13 + $0x38] sm:$0xf]
    %v3297 = vld [vmem:[#allocation13 + $0x3c] sm:$0xff]
    %v3298 = vld [vmem:[#allocation13 + $0x44] sm:$0xf]
    %v3299 = vld [vmem:[#allocation13 + $0x48] sm:$0xff]
    %v3300 = vld [vmem:[#allocation13 + $0x50] sm:$0xf]
    %v3301 = vld [vmem:[#allocation13 + $0x54] sm:$0xff]
    %v3302 = vld [vmem:[#allocation13 + $0x5c] sm:$0xf]
    %v3303 = vld [vmem:[#allocation13 + $0x60] sm:$0xff]
    %v3304 = vld [vmem:[#allocation13 + $0x68] sm:$0xf]
    %v3305 = vld [vmem:[#allocation13 + $0x6c] sm:$0xff]
    %v3306 = vld [vmem:[#allocation13 + $0x74] sm:$0xf]
    %v3307 = vld [vmem:[#allocation13 + $0x78] sm:$0xff]
    %v3308 = vld [vmem:[#allocation13 + $0x80] sm:$0xf]
    %v3309 = vld [vmem:[#allocation13 + $0x84] sm:$0xff]
    %v3310 = vld [vmem:[#allocation13 + $0x8c] sm:$0xf]
    %v3311 = vld [vmem:[#allocation13 + $0x90] sm:$0xff]
    %v3312 = vld [vmem:[#allocation13 + $0x98] sm:$0xf]
    %v3313 = vld [vmem:[#allocation13 + $0x9c] sm:$0xff]
    %v3314 = vld [vmem:[#allocation13 + $0xa4] sm:$0xf]
    %v3315 = vld [vmem:[#allocation13 + $0xa8] sm:$0xff]
    %v3316 = vld [vmem:[#allocation13 + $0xb0] sm:$0xf]
    %v3317 = vld [vmem:[#allocation13 + $0xb4] sm:$0xff]
    %v3318 = vld [vmem:[#allocation13 + $0xbc] sm:$0xf]
    %v3319 = vld [vmem:[#allocation13 + $0xc0] sm:$0xff]
    %v3320 = vld [vmem:[#allocation13 + $0xc8] sm:$0xf]
    %v3321 = vld [vmem:[#allocation13 + $0xcc] sm:$0xff]
    %v3322 = vld [vmem:[#allocation13 + $0xd4] sm:$0xf]
    %v3323 = vld [vmem:[#allocation13 + $0xd8] sm:$0xff]
    %v3324 = vld [vmem:[#allocation13 + $0xe0] sm:$0xf]
    %v3325 = vld [vmem:[#allocation13 + $0xe4] sm:$0xff]
    %v3326 = vld [vmem:[#allocation13 + $0xec] sm:$0xf]
    %v3327 = vld [vmem:[#allocation13 + $0xf0] sm:$0xff]
    %v3328 = vld [vmem:[#allocation13 + $0xf8] sm:$0xf]
    %v3329 = vld [vmem:[#allocation13 + $0xfc] sm:$0xff]
    %v3330 = vld [vmem:[#allocation13 + $0x104] sm:$0xf]
    %v3331 = vld [vmem:[#allocation13 + $0x108] sm:$0xff]
    %v3332 = vld [vmem:[#allocation13 + $0x110] sm:$0xf]
    %v3333 = vld [vmem:[#allocation13 + $0x114] sm:$0xff]
    %v3334 = vld [vmem:[#allocation13 + $0x11c] sm:$0xf]
    %v3335 = vld [vmem:[#allocation13 + $0x120] sm:$0xff]
    %v3336 = vld [vmem:[#allocation13 + $0x128] sm:$0xf]
    %v3337 = vld [vmem:[#allocation13 + $0x12c] sm:$0xff]
    %v3338 = vld [vmem:[#allocation13 + $0x134] sm:$0xf]
    %v3339 = vld [vmem:[#allocation13 + $0x138] sm:$0xff]
    %v3340 = vld [vmem:[#allocation13 + $0x140] sm:$0xf]
    %v3341 = vld [vmem:[#allocation13 + $0x144] sm:$0xff]
    %v3342 = vld [vmem:[#allocation13 + $0x14c] sm:$0xf]
    %v3343 = vld [vmem:[#allocation13 + $0x150] sm:$0xff]
    %v3344 = vld [vmem:[#allocation13 + $0x158] sm:$0xf]
    %v3345 = vld [vmem:[#allocation13 + $0x15c] sm:$0xff]
    %v3346 = vld [vmem:[#allocation13 + $0x164] sm:$0xf]
    %v3347 = vld [vmem:[#allocation13 + $0x168] sm:$0xff]
    %v3348 = vld [vmem:[#allocation13 + $0x170] sm:$0xf]
    %v3349 = vld [vmem:[#allocation13 + $0x174] sm:$0xff]
    %v3350 = vld [vmem:[#allocation13 + $0x17c] sm:$0xf]
    %v3351 = vld [vmem:[#allocation13 + $0x180] sm:$0xff]
    %v3352 = vld [vmem:[#allocation13 + $0x188] sm:$0xf]
    %v3353 = vld [vmem:[#allocation13 + $0x18c] sm:$0xff]
    %v3354 = vld [vmem:[#allocation13 + $0x194] sm:$0xf]
    %v3355 = vld [vmem:[#allocation13 + $0x198] sm:$0xff]
    %v3356 = vld [vmem:[#allocation13 + $0x1a0] sm:$0xf]
    %v3357 = vld [vmem:[#allocation13 + $0x1a4] sm:$0xff]
    %v3358 = vld [vmem:[#allocation13 + $0x1ac] sm:$0xf]
    %v3359 = vld [vmem:[#allocation13 + $0x1b0] sm:$0xff]
    %v3360 = vld [vmem:[#allocation13 + $0x1b8] sm:$0xf]
    %v3361 = vld [vmem:[#allocation13 + $0x1bc] sm:$0xff]
    %v3362 = vld [vmem:[#allocation13 + $0x1c4] sm:$0xf]
    %v3363 = vld [vmem:[#allocation13 + $0x1c8] sm:$0xff]
    %v3364 = vld [vmem:[#allocation13 + $0x1d0] sm:$0xf]
    %v3365 = vld [vmem:[#allocation13 + $0x1d4] sm:$0xff]
    %v3366 = vld [vmem:[#allocation13 + $0x1dc] sm:$0xf]
    %v3367 = vld [vmem:[#allocation13 + $0x1e0] sm:$0xff]
    %v3368 = vld [vmem:[#allocation13 + $0x1e8] sm:$0xf]
    %v3369 = vld [vmem:[#allocation13 + $0x1ec] sm:$0xff]
    %v3370 = vld [vmem:[#allocation13 + $0x1f4] sm:$0xf]
    %v3371 = vld [vmem:[#allocation13 + $0x1f8] sm:$0xff]
    %v3372 = vld [vmem:[#allocation13 + $0x200] sm:$0xf]
    %v3373 = vld [vmem:[#allocation13 + $0x204] sm:$0xff]
    %v3374 = vld [vmem:[#allocation13 + $0x20c] sm:$0xf]
    %v3375 = vld [vmem:[#allocation13 + $0x210] sm:$0xff]
    %v3376 = vld [vmem:[#allocation13 + $0x218] sm:$0xf]
    %v3377 = vld [vmem:[#allocation13 + $0x21c] sm:$0xff]
    %v3378 = vld [vmem:[#allocation13 + $0x224] sm:$0xf]
    %v3379 = vld [vmem:[#allocation13 + $0x228] sm:$0xff]
    %v3380 = vld [vmem:[#allocation13 + $0x230] sm:$0xf]
    %v3381 = vld [vmem:[#allocation13 + $0x234] sm:$0xff]
    %v3382 = vld [vmem:[#allocation13 + $0x23c] sm:$0xf]
    %v3383 = vld [vmem:[#allocation13 + $0x240] sm:$0xff]
    %v3384 = vld [vmem:[#allocation13 + $0x248] sm:$0xf]
    %v3385 = vld [vmem:[#allocation13 + $0x24c] sm:$0xff]
    %v3386 = vld [vmem:[#allocation13 + $0x254] sm:$0xf]
    %v3387 = vld [vmem:[#allocation13 + $0x258] sm:$0xff]
    %v3388 = vld [vmem:[#allocation13 + $0x260] sm:$0xf]
    %v3389 = vld [vmem:[#allocation13 + $0x264] sm:$0xff]
    %v3390 = vld [vmem:[#allocation13 + $0x26c] sm:$0xf]
    %v3391 = vld [vmem:[#allocation13 + $0x270] sm:$0xff]
    %v3392 = vld [vmem:[#allocation13 + $0x278] sm:$0xf]
    %v3393 = vld [vmem:[#allocation13 + $0x27c] sm:$0xff]
    %v3394 = vld [vmem:[#allocation13 + $0x284] sm:$0xf]
    %v3395 = vld [vmem:[#allocation13 + $0x288] sm:$0xff]
    %v3396 = vld [vmem:[#allocation13 + $0x290] sm:$0xf]
    %v3397 = vld [vmem:[#allocation13 + $0x294] sm:$0xff]
    %v3398 = vld [vmem:[#allocation13 + $0x29c] sm:$0xf]
    %v3399 = vld [vmem:[#allocation13 + $0x2a0] sm:$0xff]
    %v3400 = vld [vmem:[#allocation13 + $0x2a8] sm:$0xf]
    %v3401 = vld [vmem:[#allocation13 + $0x2ac] sm:$0xff]
    %v3402 = vld [vmem:[#allocation13 + $0x2b4] sm:$0xf]
    %v3403 = vld [vmem:[#allocation13 + $0x2b8] sm:$0xff]
    %v3404 = vld [vmem:[#allocation13 + $0x2c0] sm:$0xf]
    %v3405 = vld [vmem:[#allocation13 + $0x2c4] sm:$0xff]
    %v3406 = vld [vmem:[#allocation13 + $0x2cc] sm:$0xf]
    %v3407 = vld [vmem:[#allocation13 + $0x2d0] sm:$0xff]
    %v3408 = vld [vmem:[#allocation13 + $0x2d8] sm:$0xf]
    %v3409 = vld [vmem:[#allocation13 + $0x2dc] sm:$0xff]
    %v3410 = vld [vmem:[#allocation13 + $0x2e4] sm:$0xf]
    %v3411 = vld [vmem:[#allocation13 + $0x2e8] sm:$0xff]
    %v3412 = vld [vmem:[#allocation13 + $0x2f0] sm:$0xf]
    %v3413 = vld [vmem:[#allocation13 + $0x2f4] sm:$0xff]
    %v3414 = vld [vmem:[#allocation13 + $0x2fc] sm:$0xf]
    %v3415 = vld [vmem:[#allocation13 + $0x300] sm:$0xff]
    %v3416 = vld [vmem:[#allocation13 + $0x308] sm:$0xf]
    %v3417 = vld [vmem:[#allocation13 + $0x30c] sm:$0xff]
    %v3418 = vld [vmem:[#allocation13 + $0x314] sm:$0xf]
    %v3419 = vld [vmem:[#allocation13 + $0x318] sm:$0xff]
    %v3420 = vld [vmem:[#allocation13 + $0x320] sm:$0xf]
    %v3421 = vld [vmem:[#allocation13 + $0x324] sm:$0xff]
    %v3422 = vld [vmem:[#allocation13 + $0x32c] sm:$0xf]
    %v3423 = vld [vmem:[#allocation13 + $0x330] sm:$0xff]
    %v3424 = vld [vmem:[#allocation13 + $0x338] sm:$0xf]
    %v3425 = vld [vmem:[#allocation13 + $0x33c] sm:$0xff]
    %v3426 = vld [vmem:[#allocation13 + $0x344] sm:$0xf]
    %v3427 = vld [vmem:[#allocation13 + $0x348] sm:$0xff]
    %v3428 = vld [vmem:[#allocation13 + $0x350] sm:$0xf]
    %v3429 = vld [vmem:[#allocation13 + $0x354] sm:$0xff]
    %v3430 = vld [vmem:[#allocation13 + $0x35c] sm:$0xf]
    %v3431 = vld [vmem:[#allocation13 + $0x360] sm:$0xff]
    %v3432 = vld [vmem:[#allocation13 + $0x368] sm:$0xf]
    %v3433 = vld [vmem:[#allocation13 + $0x36c] sm:$0xff]
    %v3434 = vld [vmem:[#allocation13 + $0x374] sm:$0xf]
    %v3435 = vld [vmem:[#allocation13 + $0x378] sm:$0xff]
    %v3436 = vld [vmem:[#allocation13 + $0x380] sm:$0xf]
    %v3437 = vld [vmem:[#allocation13 + $0x384] sm:$0xff]
    %v3438 = vld [vmem:[#allocation13 + $0x38c] sm:$0xf]
    %v3439 = vld [vmem:[#allocation13 + $0x390] sm:$0xff]
    %v3440 = vld [vmem:[#allocation13 + $0x398] sm:$0xf]
    %v3441 = vld [vmem:[#allocation13 + $0x39c] sm:$0xff]
    %v3442 = vld [vmem:[#allocation13 + $0x3a4] sm:$0xf]
    %v3443 = vld [vmem:[#allocation13 + $0x3a8] sm:$0xff]
    %v3444 = vld [vmem:[#allocation13 + $0x3b0] sm:$0xf]
    %v3445 = vld [vmem:[#allocation13 + $0x3b4] sm:$0xff]
    %v3446 = vld [vmem:[#allocation13 + $0x3bc] sm:$0xf]
    %v3447 = vld [vmem:[#allocation13 + $0x3c0] sm:$0xff]
    %v3448 = vld [vmem:[#allocation13 + $0x3c8] sm:$0xf]
    %v3449 = vld [vmem:[#allocation13 + $0x3cc] sm:$0xff]
    %v3450 = vld [vmem:[#allocation13 + $0x3d4] sm:$0xf]
    %v3451 = vld [vmem:[#allocation13 + $0x3d8] sm:$0xff]
    %v3452 = vld [vmem:[#allocation13 + $0x3e0] sm:$0xf]
    %v3453 = vld [vmem:[#allocation13 + $0x3e4] sm:$0xff]
    %v3454 = vld [vmem:[#allocation13 + $0x3ec] sm:$0xf]
    %v3455 = vld [vmem:[#allocation13 + $0x3f0] sm:$0xff]
    %v3456 = vld [vmem:[#allocation13 + $0x3f8] sm:$0xf]
    %v3457 = vld [vmem:[#allocation13 + $0x3fc] sm:$0xff]
    %v3458 = vld [vmem:[#allocation13 + $0x404] sm:$0xf]
    %v3459 = vld [vmem:[#allocation13 + $0x408] sm:$0xff]
    %v3460 = vld [vmem:[#allocation13 + $0x410] sm:$0xf]
    %v3461 = vld [vmem:[#allocation13 + $0x414] sm:$0xff]
    %v3462 = vld [vmem:[#allocation13 + $0x41c] sm:$0xf]
    %v3463 = vld [vmem:[#allocation13 + $0x420] sm:$0xff]
    %v3464 = vld [vmem:[#allocation13 + $0x428] sm:$0xf]
    %v3465 = vld [vmem:[#allocation13 + $0x42c] sm:$0xff]
    %v3466 = vld [vmem:[#allocation13 + $0x434] sm:$0xf]
    %v3467 = vld [vmem:[#allocation13 + $0x438] sm:$0xff]
    %v3468 = vld [vmem:[#allocation13 + $0x440] sm:$0xf]
    %v3469 = vld [vmem:[#allocation13 + $0x444] sm:$0xff]
    %v3470 = vld [vmem:[#allocation13 + $0x44c] sm:$0xf]
    %v3471 = vld [vmem:[#allocation13 + $0x450] sm:$0xff]
    %v3472 = vld [vmem:[#allocation13 + $0x458] sm:$0xf]
    %v3473 = vld [vmem:[#allocation13 + $0x45c] sm:$0xff]
    %v3474 = vld [vmem:[#allocation13 + $0x464] sm:$0xf]
    %v3475 = vld [vmem:[#allocation13 + $0x468] sm:$0xff]
    %v3476 = vld [vmem:[#allocation13 + $0x470] sm:$0xf]
    %v3477 = vld [vmem:[#allocation13 + $0x474] sm:$0xff]
    %v3478 = vld [vmem:[#allocation13 + $0x47c] sm:$0xf]
    %v3479 = vld [vmem:[#allocation13 + $0x480] sm:$0xff]
    %v3480 = vld [vmem:[#allocation13 + $0x488] sm:$0xf]
    %v3481 = vld [vmem:[#allocation13 + $0x48c] sm:$0xff]
    %v3482 = vld [vmem:[#allocation13 + $0x494] sm:$0xf]
    %v3483 = vld [vmem:[#allocation13 + $0x498] sm:$0xff]
    %v3484 = vld [vmem:[#allocation13 + $0x4a0] sm:$0xf]
    %v3485 = vld [vmem:[#allocation13 + $0x4a4] sm:$0xff]
    %v3486 = vld [vmem:[#allocation13 + $0x4ac] sm:$0xf]
    %v3487 = vld [vmem:[#allocation13 + $0x4b0] sm:$0xff]
    %v3488 = vld [vmem:[#allocation13 + $0x4b8] sm:$0xf]
    %v3489 = vld [vmem:[#allocation13 + $0x4bc] sm:$0xff]
    %v3490 = vld [vmem:[#allocation13 + $0x4c4] sm:$0xf]
    %v3491 = vld [vmem:[#allocation13 + $0x4c8] sm:$0xff]
    %v3492 = vld [vmem:[#allocation13 + $0x4d0] sm:$0xf]
    %v3493 = vld [vmem:[#allocation13 + $0x4d4] sm:$0xff]
    %v3494 = vld [vmem:[#allocation13 + $0x4dc] sm:$0xf]
    %v3495 = vld [vmem:[#allocation13 + $0x4e0] sm:$0xff]
    %v3496 = vld [vmem:[#allocation13 + $0x4e8] sm:$0xf]
    %v3497 = vld [vmem:[#allocation13 + $0x4ec] sm:$0xff]
    %v3498 = vld [vmem:[#allocation13 + $0x4f4] sm:$0xf]
    %v3499 = vld [vmem:[#allocation13 + $0x4f8] sm:$0xff]
    %v3500 = vld [vmem:[#allocation13 + $0x500] sm:$0xf]
    %v3501 = vld [vmem:[#allocation13 + $0x504] sm:$0xff]
    %v3502 = vld [vmem:[#allocation13 + $0x50c] sm:$0xf]
    %v3503 = vld [vmem:[#allocation13 + $0x510] sm:$0xff]
    %v3504 = vld [vmem:[#allocation13 + $0x518] sm:$0xf]
    %v3505 = vld [vmem:[#allocation13 + $0x51c] sm:$0xff]
    %v3506 = vld [vmem:[#allocation13 + $0x524] sm:$0xf]
    %v3507 = vld [vmem:[#allocation13 + $0x528] sm:$0xff]
    %v3508 = vld [vmem:[#allocation13 + $0x530] sm:$0xf]
    %v3509 = vld [vmem:[#allocation13 + $0x534] sm:$0xff]
    %v3510 = vld [vmem:[#allocation13 + $0x53c] sm:$0xf]
    %v3511 = vld [vmem:[#allocation13 + $0x540] sm:$0xff]
    %v3512 = vld [vmem:[#allocation13 + $0x548] sm:$0xf]
    %v3513 = vld [vmem:[#allocation13 + $0x54c] sm:$0xff]
    %v3514 = vld [vmem:[#allocation13 + $0x554] sm:$0xf]
    %v3515 = vld [vmem:[#allocation13 + $0x558] sm:$0xff]
    %v3516 = vld [vmem:[#allocation13 + $0x560] sm:$0xf]
    %v3517 = vld [vmem:[#allocation13 + $0x564] sm:$0xff]
    %v3518 = vld [vmem:[#allocation13 + $0x56c] sm:$0xf]
    %v3519 = vld [vmem:[#allocation13 + $0x570] sm:$0xff]
    %v3520 = vld [vmem:[#allocation13 + $0x578] sm:$0xf]
    %v3521 = vld [vmem:[#allocation13 + $0x57c] sm:$0xff]
    %v3522 = vld [vmem:[#allocation13 + $0x584] sm:$0xf]
    %v3523 = vld [vmem:[#allocation13 + $0x588] sm:$0xff]
    %v3524 = vld [vmem:[#allocation13 + $0x590] sm:$0xf]
    %v3525 = vld [vmem:[#allocation13 + $0x594] sm:$0xff]
    %v3526 = vld [vmem:[#allocation13 + $0x59c] sm:$0xf]
    %v3527 = vld [vmem:[#allocation13 + $0x5a0] sm:$0xff]
    %v3528 = vld [vmem:[#allocation13 + $0x5a8] sm:$0xf]
    %v3529 = vld [vmem:[#allocation13 + $0x5ac] sm:$0xff]
    %v3530 = vld [vmem:[#allocation13 + $0x5b4] sm:$0xf]
    %v3531 = vld [vmem:[#allocation13 + $0x5b8] sm:$0xff]
    %v3532 = vld [vmem:[#allocation13 + $0x5c0] sm:$0xf]
    %v3533 = vld [vmem:[#allocation13 + $0x5c4] sm:$0xff]
    %v3534 = vld [vmem:[#allocation13 + $0x5cc] sm:$0xf]
    %v3535 = vld [vmem:[#allocation13 + $0x5d0] sm:$0xff]
    %v3536 = vld [vmem:[#allocation13 + $0x5d8] sm:$0xf]
    %v3537 = vld [vmem:[#allocation13 + $0x5dc] sm:$0xff]
    %v3538 = vld [vmem:[#allocation13 + $0x5e4] sm:$0xf]
    %v3539 = vld [vmem:[#allocation13 + $0x5e8] sm:$0xff]
    %v3540 = vld [vmem:[#allocation13 + $0x5f0] sm:$0xf]
    %v3541 = vld [vmem:[#allocation13 + $0x5f4] sm:$0xff]
    %v3542 = vld [vmem:[#allocation13 + $0x5fc] sm:$0xf]
    %v3543 = vld [vmem:[#allocation14] sm:$0x7]
    %v3545 = vlaneseq
    %v3546 = vshrl.u32 %v3545, 7
    %v3547 = vsub.s32 0, %v3546
    %v3548 = vrot.slane %v3543, %v3547
    %v3549 = vlaneseq
    %v3550 = vshrl.u32 %v3549, 7
    %v3551 = vsub.s32 1, %v3550
    %v3552 = vrot.slane %v3543, %v3551
    %v3553 = vlaneseq
    %v3554 = vshrl.u32 %v3553, 7
    %v3555 = vsub.s32 2, %v3554
    %v3556 = vrot.slane %v3543, %v3555
    %v3816 = vunpack.c.l.b16 %v3287
    %v3817 = vunpack.c.h.b16 %v3287
    %v3818 = vunpack.c.l.b16 %v3288
    %v3819 = vunpack.c.l.b16 %v3289
    %v3820 = vunpack.c.h.b16 %v3289
    %v3821 = vunpack.c.l.b16 %v3290
    %v3822 = vunpack.c.l.b16 %v3291
    %v3823 = vunpack.c.h.b16 %v3291
    %v3824 = vunpack.c.l.b16 %v3292
    %v3825 = vunpack.c.l.b16 %v3293
    %v3826 = vunpack.c.h.b16 %v3293
    %v3827 = vunpack.c.l.b16 %v3294
    %v3828 = vunpack.c.l.b16 %v3295
    %v3829 = vunpack.c.h.b16 %v3295
    %v3830 = vunpack.c.l.b16 %v3296
    %v3831 = vunpack.c.l.b16 %v3297
    %v3832 = vunpack.c.h.b16 %v3297
    %v3833 = vunpack.c.l.b16 %v3298
    %v3834 = vunpack.c.l.b16 %v3299
    %v3835 = vunpack.c.h.b16 %v3299
    %v3836 = vunpack.c.l.b16 %v3300
    %v3837 = vunpack.c.l.b16 %v3301
    %v3838 = vunpack.c.h.b16 %v3301
    %v3839 = vunpack.c.l.b16 %v3302
    %v3840 = vunpack.c.l.b16 %v3303
    %v3841 = vunpack.c.h.b16 %v3303
    %v3842 = vunpack.c.l.b16 %v3304
    %v3843 = vunpack.c.l.b16 %v3305
    %v3844 = vunpack.c.h.b16 %v3305
    %v3845 = vunpack.c.l.b16 %v3306
    %v3846 = vunpack.c.l.b16 %v3307
    %v3847 = vunpack.c.h.b16 %v3307
    %v3848 = vunpack.c.l.b16 %v3308
    %v3849 = vunpack.c.l.b16 %v3309
    %v3850 = vunpack.c.h.b16 %v3309
    %v3851 = vunpack.c.l.b16 %v3310
    %v3852 = vunpack.c.l.b16 %v3311
    %v3853 = vunpack.c.h.b16 %v3311
    %v3854 = vunpack.c.l.b16 %v3312
    %v3855 = vunpack.c.l.b16 %v3313
    %v3856 = vunpack.c.h.b16 %v3313
    %v3857 = vunpack.c.l.b16 %v3314
    %v3858 = vunpack.c.l.b16 %v3315
    %v3859 = vunpack.c.h.b16 %v3315
    %v3860 = vunpack.c.l.b16 %v3316
    %v3861 = vunpack.c.l.b16 %v3317
    %v3862 = vunpack.c.h.b16 %v3317
    %v3863 = vunpack.c.l.b16 %v3318
    %v3864 = vunpack.c.l.b16 %v3319
    %v3865 = vunpack.c.h.b16 %v3319
    %v3866 = vunpack.c.l.b16 %v3320
    %v3867 = vunpack.c.l.b16 %v3321
    %v3868 = vunpack.c.h.b16 %v3321
    %v3869 = vunpack.c.l.b16 %v3322
    %v3870 = vunpack.c.l.b16 %v3323
    %v3871 = vunpack.c.h.b16 %v3323
    %v3872 = vunpack.c.l.b16 %v3324
    %v3873 = vunpack.c.l.b16 %v3325
    %v3874 = vunpack.c.h.b16 %v3325
    %v3875 = vunpack.c.l.b16 %v3326
    %v3876 = vunpack.c.l.b16 %v3327
    %v3877 = vunpack.c.h.b16 %v3327
    %v3878 = vunpack.c.l.b16 %v3328
    %v3879 = vunpack.c.l.b16 %v3329
    %v3880 = vunpack.c.h.b16 %v3329
    %v3881 = vunpack.c.l.b16 %v3330
    %v3882 = vunpack.c.l.b16 %v3331
    %v3883 = vunpack.c.h.b16 %v3331
    %v3884 = vunpack.c.l.b16 %v3332
    %v3885 = vunpack.c.l.b16 %v3333
    %v3886 = vunpack.c.h.b16 %v3333
    %v3887 = vunpack.c.l.b16 %v3334
    %v3888 = vunpack.c.l.b16 %v3335
    %v3889 = vunpack.c.h.b16 %v3335
    %v3890 = vunpack.c.l.b16 %v3336
    %v3891 = vunpack.c.l.b16 %v3337
    %v3892 = vunpack.c.h.b16 %v3337
    %v3893 = vunpack.c.l.b16 %v3338
    %v3894 = vunpack.c.l.b16 %v3339
    %v3895 = vunpack.c.h.b16 %v3339
    %v3896 = vunpack.c.l.b16 %v3340
    %v3897 = vunpack.c.l.b16 %v3341
    %v3898 = vunpack.c.h.b16 %v3341
    %v3899 = vunpack.c.l.b16 %v3342
    %v3900 = vunpack.c.l.b16 %v3343
    %v3901 = vunpack.c.h.b16 %v3343
    %v3902 = vunpack.c.l.b16 %v3344
    %v3903 = vunpack.c.l.b16 %v3345
    %v3904 = vunpack.c.h.b16 %v3345
    %v3905 = vunpack.c.l.b16 %v3346
    %v3906 = vunpack.c.l.b16 %v3347
    %v3907 = vunpack.c.h.b16 %v3347
    %v3908 = vunpack.c.l.b16 %v3348
    %v3909 = vunpack.c.l.b16 %v3349
    %v3910 = vunpack.c.h.b16 %v3349
    %v3911 = vunpack.c.l.b16 %v3350
    %v3912 = vunpack.c.l.b16 %v3351
    %v3913 = vunpack.c.h.b16 %v3351
    %v3914 = vunpack.c.l.b16 %v3352
    %v3915 = vunpack.c.l.b16 %v3353
    %v3916 = vunpack.c.h.b16 %v3353
    %v3917 = vunpack.c.l.b16 %v3354
    %v3918 = vunpack.c.l.b16 %v3355
    %v3919 = vunpack.c.h.b16 %v3355
    %v3920 = vunpack.c.l.b16 %v3356
    %v3921 = vunpack.c.l.b16 %v3357
    %v3922 = vunpack.c.h.b16 %v3357
    %v3923 = vunpack.c.l.b16 %v3358
    %v3924 = vunpack.c.l.b16 %v3359
    %v3925 = vunpack.c.h.b16 %v3359
    %v3926 = vunpack.c.l.b16 %v3360
    %v3927 = vunpack.c.l.b16 %v3361
    %v3928 = vunpack.c.h.b16 %v3361
    %v3929 = vunpack.c.l.b16 %v3362
    %v3930 = vunpack.c.l.b16 %v3363
    %v3931 = vunpack.c.h.b16 %v3363
    %v3932 = vunpack.c.l.b16 %v3364
    %v3933 = vunpack.c.l.b16 %v3365
    %v3934 = vunpack.c.h.b16 %v3365
    %v3935 = vunpack.c.l.b16 %v3366
    %v3936 = vunpack.c.l.b16 %v3367
    %v3937 = vunpack.c.h.b16 %v3367
    %v3938 = vunpack.c.l.b16 %v3368
    %v3939 = vunpack.c.l.b16 %v3369
    %v3940 = vunpack.c.h.b16 %v3369
    %v3941 = vunpack.c.l.b16 %v3370
    %v3942 = vunpack.c.l.b16 %v3371
    %v3943 = vunpack.c.h.b16 %v3371
    %v3944 = vunpack.c.l.b16 %v3372
    %v3945 = vunpack.c.l.b16 %v3373
    %v3946 = vunpack.c.h.b16 %v3373
    %v3947 = vunpack.c.l.b16 %v3374
    %v3948 = vunpack.c.l.b16 %v3375
    %v3949 = vunpack.c.h.b16 %v3375
    %v3950 = vunpack.c.l.b16 %v3376
    %v3951 = vunpack.c.l.b16 %v3377
    %v3952 = vunpack.c.h.b16 %v3377
    %v3953 = vunpack.c.l.b16 %v3378
    %v3954 = vunpack.c.l.b16 %v3379
    %v3955 = vunpack.c.h.b16 %v3379
    %v3956 = vunpack.c.l.b16 %v3380
    %v3957 = vunpack.c.l.b16 %v3381
    %v3958 = vunpack.c.h.b16 %v3381
    %v3959 = vunpack.c.l.b16 %v3382
    %v3960 = vunpack.c.l.b16 %v3383
    %v3961 = vunpack.c.h.b16 %v3383
    %v3962 = vunpack.c.l.b16 %v3384
    %v3963 = vunpack.c.l.b16 %v3385
    %v3964 = vunpack.c.h.b16 %v3385
    %v3965 = vunpack.c.l.b16 %v3386
    %v3966 = vunpack.c.l.b16 %v3387
    %v3967 = vunpack.c.h.b16 %v3387
    %v3968 = vunpack.c.l.b16 %v3388
    %v3969 = vunpack.c.l.b16 %v3389
    %v3970 = vunpack.c.h.b16 %v3389
    %v3971 = vunpack.c.l.b16 %v3390
    %v3972 = vunpack.c.l.b16 %v3391
    %v3973 = vunpack.c.h.b16 %v3391
    %v3974 = vunpack.c.l.b16 %v3392
    %v3975 = vunpack.c.l.b16 %v3393
    %v3976 = vunpack.c.h.b16 %v3393
    %v3977 = vunpack.c.l.b16 %v3394
    %v3978 = vunpack.c.l.b16 %v3395
    %v3979 = vunpack.c.h.b16 %v3395
    %v3980 = vunpack.c.l.b16 %v3396
    %v3981 = vunpack.c.l.b16 %v3397
    %v3982 = vunpack.c.h.b16 %v3397
    %v3983 = vunpack.c.l.b16 %v3398
    %v3984 = vunpack.c.l.b16 %v3399
    %v3985 = vunpack.c.h.b16 %v3399
    %v3986 = vunpack.c.l.b16 %v3400
    %v3987 = vunpack.c.l.b16 %v3401
    %v3988 = vunpack.c.h.b16 %v3401
    %v3989 = vunpack.c.l.b16 %v3402
    %v3990 = vunpack.c.l.b16 %v3403
    %v3991 = vunpack.c.h.b16 %v3403
    %v3992 = vunpack.c.l.b16 %v3404
    %v3993 = vunpack.c.l.b16 %v3405
    %v3994 = vunpack.c.h.b16 %v3405
    %v3995 = vunpack.c.l.b16 %v3406
    %v3996 = vunpack.c.l.b16 %v3407
    %v3997 = vunpack.c.h.b16 %v3407
    %v3998 = vunpack.c.l.b16 %v3408
    %v3999 = vunpack.c.l.b16 %v3409
    %v4000 = vunpack.c.h.b16 %v3409
    %v4001 = vunpack.c.l.b16 %v3410
    %v4002 = vunpack.c.l.b16 %v3411
    %v4003 = vunpack.c.h.b16 %v3411
    %v4004 = vunpack.c.l.b16 %v3412
    %v4005 = vunpack.c.l.b16 %v3413
    %v4006 = vunpack.c.h.b16 %v3413
    %v4007 = vunpack.c.l.b16 %v3414
    %v4008 = vunpack.c.l.b16 %v3415
    %v4009 = vunpack.c.h.b16 %v3415
    %v4010 = vunpack.c.l.b16 %v3416
    %v4011 = vunpack.c.l.b16 %v3417
    %v4012 = vunpack.c.h.b16 %v3417
    %v4013 = vunpack.c.l.b16 %v3418
    %v4014 = vunpack.c.l.b16 %v3419
    %v4015 = vunpack.c.h.b16 %v3419
    %v4016 = vunpack.c.l.b16 %v3420
    %v4017 = vunpack.c.l.b16 %v3421
    %v4018 = vunpack.c.h.b16 %v3421
    %v4019 = vunpack.c.l.b16 %v3422
    %v4020 = vunpack.c.l.b16 %v3423
    %v4021 = vunpack.c.h.b16 %v3423
    %v4022 = vunpack.c.l.b16 %v3424
    %v4023 = vunpack.c.l.b16 %v3425
    %v4024 = vunpack.c.h.b16 %v3425
    %v4025 = vunpack.c.l.b16 %v3426
    %v4026 = vunpack.c.l.b16 %v3427
    %v4027 = vunpack.c.h.b16 %v3427
    %v4028 = vunpack.c.l.b16 %v3428
    %v4029 = vunpack.c.l.b16 %v3429
    %v4030 = vunpack.c.h.b16 %v3429
    %v4031 = vunpack.c.l.b16 %v3430
    %v4032 = vunpack.c.l.b16 %v3431
    %v4033 = vunpack.c.h.b16 %v3431
    %v4034 = vunpack.c.l.b16 %v3432
    %v4035 = vunpack.c.l.b16 %v3433
    %v4036 = vunpack.c.h.b16 %v3433
    %v4037 = vunpack.c.l.b16 %v3434
    %v4038 = vunpack.c.l.b16 %v3435
    %v4039 = vunpack.c.h.b16 %v3435
    %v4040 = vunpack.c.l.b16 %v3436
    %v4041 = vunpack.c.l.b16 %v3437
    %v4042 = vunpack.c.h.b16 %v3437
    %v4043 = vunpack.c.l.b16 %v3438
    %v4044 = vunpack.c.l.b16 %v3439
    %v4045 = vunpack.c.h.b16 %v3439
    %v4046 = vunpack.c.l.b16 %v3440
    %v4047 = vunpack.c.l.b16 %v3441
    %v4048 = vunpack.c.h.b16 %v3441
    %v4049 = vunpack.c.l.b16 %v3442
    %v4050 = vunpack.c.l.b16 %v3443
    %v4051 = vunpack.c.h.b16 %v3443
    %v4052 = vunpack.c.l.b16 %v3444
    %v4053 = vunpack.c.l.b16 %v3445
    %v4054 = vunpack.c.h.b16 %v3445
    %v4055 = vunpack.c.l.b16 %v3446
    %v4056 = vunpack.c.l.b16 %v3447
    %v4057 = vunpack.c.h.b16 %v3447
    %v4058 = vunpack.c.l.b16 %v3448
    %v4059 = vunpack.c.l.b16 %v3449
    %v4060 = vunpack.c.h.b16 %v3449
    %v4061 = vunpack.c.l.b16 %v3450
    %v4062 = vunpack.c.l.b16 %v3451
    %v4063 = vunpack.c.h.b16 %v3451
    %v4064 = vunpack.c.l.b16 %v3452
    %v4065 = vunpack.c.l.b16 %v3453
    %v4066 = vunpack.c.h.b16 %v3453
    %v4067 = vunpack.c.l.b16 %v3454
    %v4068 = vunpack.c.l.b16 %v3455
    %v4069 = vunpack.c.h.b16 %v3455
    %v4070 = vunpack.c.l.b16 %v3456
    %v4071 = vunpack.c.l.b16 %v3457
    %v4072 = vunpack.c.h.b16 %v3457
    %v4073 = vunpack.c.l.b16 %v3458
    %v4074 = vunpack.c.l.b16 %v3459
    %v4075 = vunpack.c.h.b16 %v3459
    %v4076 = vunpack.c.l.b16 %v3460
    %v4077 = vunpack.c.l.b16 %v3461
    %v4078 = vunpack.c.h.b16 %v3461
    %v4079 = vunpack.c.l.b16 %v3462
    %v4080 = vunpack.c.l.b16 %v3463
    %v4081 = vunpack.c.h.b16 %v3463
    %v4082 = vunpack.c.l.b16 %v3464
    %v4083 = vunpack.c.l.b16 %v3465
    %v4084 = vunpack.c.h.b16 %v3465
    %v4085 = vunpack.c.l.b16 %v3466
    %v4086 = vunpack.c.l.b16 %v3467
    %v4087 = vunpack.c.h.b16 %v3467
    %v4088 = vunpack.c.l.b16 %v3468
    %v4089 = vunpack.c.l.b16 %v3469
    %v4090 = vunpack.c.h.b16 %v3469
    %v4091 = vunpack.c.l.b16 %v3470
    %v4092 = vunpack.c.l.b16 %v3471
    %v4093 = vunpack.c.h.b16 %v3471
    %v4094 = vunpack.c.l.b16 %v3472
    %v4095 = vunpack.c.l.b16 %v3473
    %v4096 = vunpack.c.h.b16 %v3473
    %v4097 = vunpack.c.l.b16 %v3474
    %v4098 = vunpack.c.l.b16 %v3475
    %v4099 = vunpack.c.h.b16 %v3475
    %v4100 = vunpack.c.l.b16 %v3476
    %v4101 = vunpack.c.l.b16 %v3477
    %v4102 = vunpack.c.h.b16 %v3477
    %v4103 = vunpack.c.l.b16 %v3478
    %v4104 = vunpack.c.l.b16 %v3479
    %v4105 = vunpack.c.h.b16 %v3479
    %v4106 = vunpack.c.l.b16 %v3480
    %v4107 = vunpack.c.l.b16 %v3481
    %v4108 = vunpack.c.h.b16 %v3481
    %v4109 = vunpack.c.l.b16 %v3482
    %v4110 = vunpack.c.l.b16 %v3483
    %v4111 = vunpack.c.h.b16 %v3483
    %v4112 = vunpack.c.l.b16 %v3484
    %v4113 = vunpack.c.l.b16 %v3485
    %v4114 = vunpack.c.h.b16 %v3485
    %v4115 = vunpack.c.l.b16 %v3486
    %v4116 = vunpack.c.l.b16 %v3487
    %v4117 = vunpack.c.h.b16 %v3487
    %v4118 = vunpack.c.l.b16 %v3488
    %v4119 = vunpack.c.l.b16 %v3489
    %v4120 = vunpack.c.h.b16 %v3489
    %v4121 = vunpack.c.l.b16 %v3490
    %v4122 = vunpack.c.l.b16 %v3491
    %v4123 = vunpack.c.h.b16 %v3491
    %v4124 = vunpack.c.l.b16 %v3492
    %v4125 = vunpack.c.l.b16 %v3493
    %v4126 = vunpack.c.h.b16 %v3493
    %v4127 = vunpack.c.l.b16 %v3494
    %v4128 = vunpack.c.l.b16 %v3495
    %v4129 = vunpack.c.h.b16 %v3495
    %v4130 = vunpack.c.l.b16 %v3496
    %v4131 = vunpack.c.l.b16 %v3497
    %v4132 = vunpack.c.h.b16 %v3497
    %v4133 = vunpack.c.l.b16 %v3498
    %v4134 = vunpack.c.l.b16 %v3499
    %v4135 = vunpack.c.h.b16 %v3499
    %v4136 = vunpack.c.l.b16 %v3500
    %v4137 = vunpack.c.l.b16 %v3501
    %v4138 = vunpack.c.h.b16 %v3501
    %v4139 = vunpack.c.l.b16 %v3502
    %v4140 = vunpack.c.l.b16 %v3503
    %v4141 = vunpack.c.h.b16 %v3503
    %v4142 = vunpack.c.l.b16 %v3504
    %v4143 = vunpack.c.l.b16 %v3505
    %v4144 = vunpack.c.h.b16 %v3505
    %v4145 = vunpack.c.l.b16 %v3506
    %v4146 = vunpack.c.l.b16 %v3507
    %v4147 = vunpack.c.h.b16 %v3507
    %v4148 = vunpack.c.l.b16 %v3508
    %v4149 = vunpack.c.l.b16 %v3509
    %v4150 = vunpack.c.h.b16 %v3509
    %v4151 = vunpack.c.l.b16 %v3510
    %v4152 = vunpack.c.l.b16 %v3511
    %v4153 = vunpack.c.h.b16 %v3511
    %v4154 = vunpack.c.l.b16 %v3512
    %v4155 = vunpack.c.l.b16 %v3513
    %v4156 = vunpack.c.h.b16 %v3513
    %v4157 = vunpack.c.l.b16 %v3514
    %v4158 = vunpack.c.l.b16 %v3515
    %v4159 = vunpack.c.h.b16 %v3515
    %v4160 = vunpack.c.l.b16 %v3516
    %v4161 = vunpack.c.l.b16 %v3517
    %v4162 = vunpack.c.h.b16 %v3517
    %v4163 = vunpack.c.l.b16 %v3518
    %v4164 = vunpack.c.l.b16 %v3519
    %v4165 = vunpack.c.h.b16 %v3519
    %v4166 = vunpack.c.l.b16 %v3520
    %v4167 = vunpack.c.l.b16 %v3521
    %v4168 = vunpack.c.h.b16 %v3521
    %v4169 = vunpack.c.l.b16 %v3522
    %v4170 = vunpack.c.l.b16 %v3523
    %v4171 = vunpack.c.h.b16 %v3523
    %v4172 = vunpack.c.l.b16 %v3524
    %v4173 = vunpack.c.l.b16 %v3525
    %v4174 = vunpack.c.h.b16 %v3525
    %v4175 = vunpack.c.l.b16 %v3526
    %v4176 = vunpack.c.l.b16 %v3527
    %v4177 = vunpack.c.h.b16 %v3527
    %v4178 = vunpack.c.l.b16 %v3528
    %v4179 = vunpack.c.l.b16 %v3529
    %v4180 = vunpack.c.h.b16 %v3529
    %v4181 = vunpack.c.l.b16 %v3530
    %v4182 = vunpack.c.l.b16 %v3531
    %v4183 = vunpack.c.h.b16 %v3531
    %v4184 = vunpack.c.l.b16 %v3532
    %v4185 = vunpack.c.l.b16 %v3533
    %v4186 = vunpack.c.h.b16 %v3533
    %v4187 = vunpack.c.l.b16 %v3534
    %v4188 = vunpack.c.l.b16 %v3535
    %v4189 = vunpack.c.h.b16 %v3535
    %v4190 = vunpack.c.l.b16 %v3536
    %v4191 = vunpack.c.l.b16 %v3537
    %v4192 = vunpack.c.h.b16 %v3537
    %v4193 = vunpack.c.l.b16 %v3538
    %v4194 = vunpack.c.l.b16 %v3539
    %v4195 = vunpack.c.h.b16 %v3539
    %v4196 = vunpack.c.l.b16 %v3540
    %v4197 = vunpack.c.l.b16 %v3541
    %v4198 = vunpack.c.h.b16 %v3541
    %v4199 = vunpack.c.l.b16 %v3542
    %v4200 = vpack.c.b16 %v3819, %v3816
    %v4201 = vpack.c.b16 %v3820, %v3817
    %v4202 = vpack.c.b16 %v3821, %v3818
    %v4203 = vpack.c.b16 %v3825, %v3822
    %v4204 = vpack.c.b16 %v3826, %v3823
    %v4205 = vpack.c.b16 %v3827, %v3824
    %v4206 = vpack.c.b16 %v3831, %v3828
    %v4207 = vpack.c.b16 %v3832, %v3829
    %v4208 = vpack.c.b16 %v3833, %v3830
    %v4209 = vpack.c.b16 %v3837, %v3834
    %v4210 = vpack.c.b16 %v3838, %v3835
    %v4211 = vpack.c.b16 %v3839, %v3836
    %v4212 = vpack.c.b16 %v3843, %v3840
    %v4213 = vpack.c.b16 %v3844, %v3841
    %v4214 = vpack.c.b16 %v3845, %v3842
    %v4215 = vpack.c.b16 %v3849, %v3846
    %v4216 = vpack.c.b16 %v3850, %v3847
    %v4217 = vpack.c.b16 %v3851, %v3848
    %v4218 = vpack.c.b16 %v3855, %v3852
    %v4219 = vpack.c.b16 %v3856, %v3853
    %v4220 = vpack.c.b16 %v3857, %v3854
    %v4221 = vpack.c.b16 %v3861, %v3858
    %v4222 = vpack.c.b16 %v3862, %v3859
    %v4223 = vpack.c.b16 %v3863, %v3860
    %v4224 = vpack.c.b16 %v3867, %v3864
    %v4225 = vpack.c.b16 %v3868, %v3865
    %v4226 = vpack.c.b16 %v3869, %v3866
    %v4227 = vpack.c.b16 %v3873, %v3870
    %v4228 = vpack.c.b16 %v3874, %v3871
    %v4229 = vpack.c.b16 %v3875, %v3872
    %v4230 = vpack.c.b16 %v3879, %v3876
    %v4231 = vpack.c.b16 %v3880, %v3877
    %v4232 = vpack.c.b16 %v3881, %v3878
    %v4233 = vpack.c.b16 %v3885, %v3882
    %v4234 = vpack.c.b16 %v3886, %v3883
    %v4235 = vpack.c.b16 %v3887, %v3884
    %v4236 = vpack.c.b16 %v3891, %v3888
    %v4237 = vpack.c.b16 %v3892, %v3889
    %v4238 = vpack.c.b16 %v3893, %v3890
    %v4239 = vpack.c.b16 %v3897, %v3894
    %v4240 = vpack.c.b16 %v3898, %v3895
    %v4241 = vpack.c.b16 %v3899, %v3896
    %v4242 = vpack.c.b16 %v3903, %v3900
    %v4243 = vpack.c.b16 %v3904, %v3901
    %v4244 = vpack.c.b16 %v3905, %v3902
    %v4245 = vpack.c.b16 %v3909, %v3906
    %v4246 = vpack.c.b16 %v3910, %v3907
    %v4247 = vpack.c.b16 %v3911, %v3908
    %v4248 = vpack.c.b16 %v3915, %v3912
    %v4249 = vpack.c.b16 %v3916, %v3913
    %v4250 = vpack.c.b16 %v3917, %v3914
    %v4251 = vpack.c.b16 %v3921, %v3918
    %v4252 = vpack.c.b16 %v3922, %v3919
    %v4253 = vpack.c.b16 %v3923, %v3920
    %v4254 = vpack.c.b16 %v3927, %v3924
    %v4255 = vpack.c.b16 %v3928, %v3925
    %v4256 = vpack.c.b16 %v3929, %v3926
    %v4257 = vpack.c.b16 %v3933, %v3930
    %v4258 = vpack.c.b16 %v3934, %v3931
    %v4259 = vpack.c.b16 %v3935, %v3932
    %v4260 = vpack.c.b16 %v3939, %v3936
    %v4261 = vpack.c.b16 %v3940, %v3937
    %v4262 = vpack.c.b16 %v3941, %v3938
    %v4263 = vpack.c.b16 %v3945, %v3942
    %v4264 = vpack.c.b16 %v3946, %v3943
    %v4265 = vpack.c.b16 %v3947, %v3944
    %v4266 = vpack.c.b16 %v3951, %v3948
    %v4267 = vpack.c.b16 %v3952, %v3949
    %v4268 = vpack.c.b16 %v3953, %v3950
    %v4269 = vpack.c.b16 %v3957, %v3954
    %v4270 = vpack.c.b16 %v3958, %v3955
    %v4271 = vpack.c.b16 %v3959, %v3956
    %v4272 = vpack.c.b16 %v3963, %v3960
    %v4273 = vpack.c.b16 %v3964, %v3961
    %v4274 = vpack.c.b16 %v3965, %v3962
    %v4275 = vpack.c.b16 %v3969, %v3966
    %v4276 = vpack.c.b16 %v3970, %v3967
    %v4277 = vpack.c.b16 %v3971, %v3968
    %v4278 = vpack.c.b16 %v3975, %v3972
    %v4279 = vpack.c.b16 %v3976, %v3973
    %v4280 = vpack.c.b16 %v3977, %v3974
    %v4281 = vpack.c.b16 %v3981, %v3978
    %v4282 = vpack.c.b16 %v3982, %v3979
    %v4283 = vpack.c.b16 %v3983, %v3980
    %v4284 = vpack.c.b16 %v3987, %v3984
    %v4285 = vpack.c.b16 %v3988, %v3985
    %v4286 = vpack.c.b16 %v3989, %v3986
    %v4287 = vpack.c.b16 %v3993, %v3990
    %v4288 = vpack.c.b16 %v3994, %v3991
    %v4289 = vpack.c.b16 %v3995, %v3992
    %v4290 = vpack.c.b16 %v3999, %v3996
    %v4291 = vpack.c.b16 %v4000, %v3997
    %v4292 = vpack.c.b16 %v4001, %v3998
    %v4293 = vpack.c.b16 %v4005, %v4002
    %v4294 = vpack.c.b16 %v4006, %v4003
    %v4295 = vpack.c.b16 %v4007, %v4004
    %v4296 = vpack.c.b16 %v4011, %v4008
    %v4297 = vpack.c.b16 %v4012, %v4009
    %v4298 = vpack.c.b16 %v4013, %v4010
    %v4299 = vpack.c.b16 %v4017, %v4014
    %v4300 = vpack.c.b16 %v4018, %v4015
    %v4301 = vpack.c.b16 %v4019, %v4016
    %v4302 = vpack.c.b16 %v4023, %v4020
    %v4303 = vpack.c.b16 %v4024, %v4021
    %v4304 = vpack.c.b16 %v4025, %v4022
    %v4305 = vpack.c.b16 %v4029, %v4026
    %v4306 = vpack.c.b16 %v4030, %v4027
    %v4307 = vpack.c.b16 %v4031, %v4028
    %v4308 = vpack.c.b16 %v4035, %v4032
    %v4309 = vpack.c.b16 %v4036, %v4033
    %v4310 = vpack.c.b16 %v4037, %v4034
    %v4311 = vpack.c.b16 %v4041, %v4038
    %v4312 = vpack.c.b16 %v4042, %v4039
    %v4313 = vpack.c.b16 %v4043, %v4040
    %v4314 = vpack.c.b16 %v4047, %v4044
    %v4315 = vpack.c.b16 %v4048, %v4045
    %v4316 = vpack.c.b16 %v4049, %v4046
    %v4317 = vpack.c.b16 %v4053, %v4050
    %v4318 = vpack.c.b16 %v4054, %v4051
    %v4319 = vpack.c.b16 %v4055, %v4052
    %v4320 = vpack.c.b16 %v4059, %v4056
    %v4321 = vpack.c.b16 %v4060, %v4057
    %v4322 = vpack.c.b16 %v4061, %v4058
    %v4323 = vpack.c.b16 %v4065, %v4062
    %v4324 = vpack.c.b16 %v4066, %v4063
    %v4325 = vpack.c.b16 %v4067, %v4064
    %v4326 = vpack.c.b16 %v4071, %v4068
    %v4327 = vpack.c.b16 %v4072, %v4069
    %v4328 = vpack.c.b16 %v4073, %v4070
    %v4329 = vpack.c.b16 %v4077, %v4074
    %v4330 = vpack.c.b16 %v4078, %v4075
    %v4331 = vpack.c.b16 %v4079, %v4076
    %v4332 = vpack.c.b16 %v4083, %v4080
    %v4333 = vpack.c.b16 %v4084, %v4081
    %v4334 = vpack.c.b16 %v4085, %v4082
    %v4335 = vpack.c.b16 %v4089, %v4086
    %v4336 = vpack.c.b16 %v4090, %v4087
    %v4337 = vpack.c.b16 %v4091, %v4088
    %v4338 = vpack.c.b16 %v4095, %v4092
    %v4339 = vpack.c.b16 %v4096, %v4093
    %v4340 = vpack.c.b16 %v4097, %v4094
    %v4341 = vpack.c.b16 %v4101, %v4098
    %v4342 = vpack.c.b16 %v4102, %v4099
    %v4343 = vpack.c.b16 %v4103, %v4100
    %v4344 = vpack.c.b16 %v4107, %v4104
    %v4345 = vpack.c.b16 %v4108, %v4105
    %v4346 = vpack.c.b16 %v4109, %v4106
    %v4347 = vpack.c.b16 %v4113, %v4110
    %v4348 = vpack.c.b16 %v4114, %v4111
    %v4349 = vpack.c.b16 %v4115, %v4112
    %v4350 = vpack.c.b16 %v4119, %v4116
    %v4351 = vpack.c.b16 %v4120, %v4117
    %v4352 = vpack.c.b16 %v4121, %v4118
    %v4353 = vpack.c.b16 %v4125, %v4122
    %v4354 = vpack.c.b16 %v4126, %v4123
    %v4355 = vpack.c.b16 %v4127, %v4124
    %v4356 = vpack.c.b16 %v4131, %v4128
    %v4357 = vpack.c.b16 %v4132, %v4129
    %v4358 = vpack.c.b16 %v4133, %v4130
    %v4359 = vpack.c.b16 %v4137, %v4134
    %v4360 = vpack.c.b16 %v4138, %v4135
    %v4361 = vpack.c.b16 %v4139, %v4136
    %v4362 = vpack.c.b16 %v4143, %v4140
    %v4363 = vpack.c.b16 %v4144, %v4141
    %v4364 = vpack.c.b16 %v4145, %v4142
    %v4365 = vpack.c.b16 %v4149, %v4146
    %v4366 = vpack.c.b16 %v4150, %v4147
    %v4367 = vpack.c.b16 %v4151, %v4148
    %v4368 = vpack.c.b16 %v4155, %v4152
    %v4369 = vpack.c.b16 %v4156, %v4153
    %v4370 = vpack.c.b16 %v4157, %v4154
    %v4371 = vpack.c.b16 %v4161, %v4158
    %v4372 = vpack.c.b16 %v4162, %v4159
    %v4373 = vpack.c.b16 %v4163, %v4160
    %v4374 = vpack.c.b16 %v4167, %v4164
    %v4375 = vpack.c.b16 %v4168, %v4165
    %v4376 = vpack.c.b16 %v4169, %v4166
    %v4377 = vpack.c.b16 %v4173, %v4170
    %v4378 = vpack.c.b16 %v4174, %v4171
    %v4379 = vpack.c.b16 %v4175, %v4172
    %v4380 = vpack.c.b16 %v4179, %v4176
    %v4381 = vpack.c.b16 %v4180, %v4177
    %v4382 = vpack.c.b16 %v4181, %v4178
    %v4383 = vpack.c.b16 %v4185, %v4182
    %v4384 = vpack.c.b16 %v4186, %v4183
    %v4385 = vpack.c.b16 %v4187, %v4184
    %v4386 = vpack.c.b16 %v4191, %v4188
    %v4387 = vpack.c.b16 %v4192, %v4189
    %v4388 = vpack.c.b16 %v4193, %v4190
    %v4389 = vpack.c.b16 %v4197, %v4194
    %v4390 = vpack.c.b16 %v4198, %v4195
    %v4391 = vpack.c.b16 %v4199, %v4196
    %4584 = vmatprep.subr.bf16.mxu0 %v4201
    %4585 = vmatpush1.bf16.msra.mxu0 %v4200
    %4586 = vmatprep.subr.bf16.mxu0 %v4204
    %4587 = vmatpush1.bf16.msra.mxu0 %v4203
    %4588 = vmatprep.subr.bf16.mxu0 %v4207
    %4589 = vmatpush1.bf16.msra.mxu0 %v4206
    %4590 = vmatprep.subr.bf16.mxu0 %v4210
    %4591 = vmatpush1.bf16.msra.mxu0 %v4209
    %4592 = vmatprep.subr.bf16.mxu0 %v4213
    %4593 = vmatpush1.bf16.msra.mxu0 %v4212
    %4594 = vmatprep.subr.bf16.mxu0 %v4216
    %4595 = vmatpush1.bf16.msra.mxu0 %v4215
    %4596 = vmatprep.subr.bf16.mxu0 %v4219
    %4597 = vmatpush1.bf16.msra.mxu0 %v4218
    %4598 = vmatprep.subr.bf16.mxu0 %v4222
    %4599 = vmatpush1.bf16.msra.mxu0 %v4221
    %4600 = vmatprep.subr.bf16.mxu0 %v4225
    %4601 = vmatpush1.bf16.msra.mxu0 %v4224
    %4602 = vmatprep.subr.bf16.mxu0 %v4228
    %4603 = vmatpush1.bf16.msra.mxu0 %v4227
    %4604 = vmatprep.subr.bf16.mxu0 %v4231
    %4605 = vmatpush1.bf16.msra.mxu0 %v4230
    %4606 = vmatprep.subr.bf16.mxu0 %v4234
    %4607 = vmatpush1.bf16.msra.mxu0 %v4233
    %4608 = vmatprep.subr.bf16.mxu0 %v4237
    %4609 = vmatpush1.bf16.msra.mxu0 %v4236
    %4610 = vmatprep.subr.bf16.mxu0 %v4240
    %4611 = vmatpush1.bf16.msra.mxu0 %v4239
    %4612 = vmatprep.subr.bf16.mxu0 %v4243
    %4613 = vmatpush1.bf16.msra.mxu0 %v4242
    %4614 = vmatprep.subr.bf16.mxu0 %v4246
    %4615 = vmatpush1.bf16.msra.mxu0 %v4245
    %4616 = vmatprep.mubr.bf16.mxu0 %v3280
    %4617 = vmatmul.mubr.bf16.gmra.mrb[0].mxu0 %v3279
    %v4618 = vpop.f32.mrb[0].mxu0
    %v4619 = vadd.f32 %v3548, %v4618
    %v4620 = vpop.f32.mrb[0].mxu0
    %v4621 = vadd.f32 %v3552, %v4620
    %v4622 = vpop.f32.mrb[0].mxu0
    %v4623 = vpop.f32.mrb[0].mxu0
    %4624 = vdwg.mxu0
    %4625 = vmatprep.subr.bf16.mxu0 %v4249
    %4626 = vmatpush1.bf16.msra.mxu0 %v4248
    %4627 = vmatprep.subr.bf16.mxu0 %v4252
    %4628 = vmatpush1.bf16.msra.mxu0 %v4251
    %4629 = vmatprep.subr.bf16.mxu0 %v4255
    %4630 = vmatpush1.bf16.msra.mxu0 %v4254
    %4631 = vmatprep.subr.bf16.mxu0 %v4258
    %4632 = vmatpush1.bf16.msra.mxu0 %v4257
    %4633 = vmatprep.subr.bf16.mxu0 %v4261
    %4634 = vmatpush1.bf16.msra.mxu0 %v4260
    %4635 = vmatprep.subr.bf16.mxu0 %v4264
    %4636 = vmatpush1.bf16.msra.mxu0 %v4263
    %4637 = vmatprep.subr.bf16.mxu0 %v4267
    %4638 = vmatpush1.bf16.msra.mxu0 %v4266
    %4639 = vmatprep.subr.bf16.mxu0 %v4270
    %4640 = vmatpush1.bf16.msra.mxu0 %v4269
    %4641 = vmatprep.subr.bf16.mxu0 %v4273
    %4642 = vmatpush1.bf16.msra.mxu0 %v4272
    %4643 = vmatprep.subr.bf16.mxu0 %v4276
    %4644 = vmatpush1.bf16.msra.mxu0 %v4275
    %4645 = vmatprep.subr.bf16.mxu0 %v4279
    %4646 = vmatpush1.bf16.msra.mxu0 %v4278
    %4647 = vmatprep.subr.bf16.mxu0 %v4282
    %4648 = vmatpush1.bf16.msra.mxu0 %v4281
    %4649 = vmatprep.subr.bf16.mxu0 %v4285
    %4650 = vmatpush1.bf16.msra.mxu0 %v4284
    %4651 = vmatprep.subr.bf16.mxu0 %v4288
    %4652 = vmatpush1.bf16.msra.mxu0 %v4287
    %4653 = vmatprep.subr.bf16.mxu0 %v4291
    %4654 = vmatpush1.bf16.msra.mxu0 %v4290
    %4655 = vmatprep.subr.bf16.mxu0 %v4294
    %4656 = vmatpush1.bf16.msra.mxu0 %v4293
    %4657 = vmatprep.mubr.bf16.mxu0 %v3282
    %4658 = vmatmul.mubr.bf16.gmra.mrb[0].mxu0 %v3281
    %v4659 = vpop.f32.mrb[0].mxu0
    %v4660 = vadd.f32 %v4619, %v4659
    %v4661 = vpop.f32.mrb[0].mxu0
    %v4662 = vadd.f32 %v4621, %v4661
    %v4663 = vpop.f32.mrb[0].mxu0
    %v4664 = vpop.f32.mrb[0].mxu0
    %4665 = vdwg.mxu0
    %4666 = vmatprep.subr.bf16.mxu0 %v4297
    %4667 = vmatpush1.bf16.msra.mxu0 %v4296
    %4668 = vmatprep.subr.bf16.mxu0 %v4300
    %4669 = vmatpush1.bf16.msra.mxu0 %v4299
    %4670 = vmatprep.subr.bf16.mxu0 %v4303
    %4671 = vmatpush1.bf16.msra.mxu0 %v4302
    %4672 = vmatprep.subr.bf16.mxu0 %v4306
    %4673 = vmatpush1.bf16.msra.mxu0 %v4305
    %4674 = vmatprep.subr.bf16.mxu0 %v4309
    %4675 = vmatpush1.bf16.msra.mxu0 %v4308
    %4676 = vmatprep.subr.bf16.mxu0 %v4312
    %4677 = vmatpush1.bf16.msra.mxu0 %v4311
    %4678 = vmatprep.subr.bf16.mxu0 %v4315
    %4679 = vmatpush1.bf16.msra.mxu0 %v4314
    %4680 = vmatprep.subr.bf16.mxu0 %v4318
    %4681 = vmatpush1.bf16.msra.mxu0 %v4317
    %4682 = vmatprep.subr.bf16.mxu0 %v4321
    %4683 = vmatpush1.bf16.msra.mxu0 %v4320
    %4684 = vmatprep.subr.bf16.mxu0 %v4324
    %4685 = vmatpush1.bf16.msra.mxu0 %v4323
    %4686 = vmatprep.subr.bf16.mxu0 %v4327
    %4687 = vmatpush1.bf16.msra.mxu0 %v4326
    %4688 = vmatprep.subr.bf16.mxu0 %v4330
    %4689 = vmatpush1.bf16.msra.mxu0 %v4329
    %4690 = vmatprep.subr.bf16.mxu0 %v4333
    %4691 = vmatpush1.bf16.msra.mxu0 %v4332
    %4692 = vmatprep.subr.bf16.mxu0 %v4336
    %4693 = vmatpush1.bf16.msra.mxu0 %v4335
    %4694 = vmatprep.subr.bf16.mxu0 %v4339
    %4695 = vmatpush1.bf16.msra.mxu0 %v4338
    %4696 = vmatprep.subr.bf16.mxu0 %v4342
    %4697 = vmatpush1.bf16.msra.mxu0 %v4341
    %4698 = vmatprep.mubr.bf16.mxu0 %v3284
    %4699 = vmatmul.mubr.bf16.gmra.mrb[0].mxu0 %v3283
    %v4700 = vpop.f32.mrb[0].mxu0
    %v4701 = vadd.f32 %v4660, %v4700
    %v4702 = vpop.f32.mrb[0].mxu0
    %v4703 = vadd.f32 %v4662, %v4702
    %v4704 = vpop.f32.mrb[0].mxu0
    %v4705 = vpop.f32.mrb[0].mxu0
    %4706 = vdwg.mxu0
    %4707 = vmatprep.subr.bf16.mxu0 %v4345
    %4708 = vmatpush1.bf16.msra.mxu0 %v4344
    %4709 = vmatprep.subr.bf16.mxu0 %v4348
    %4710 = vmatpush1.bf16.msra.mxu0 %v4347
    %4711 = vmatprep.subr.bf16.mxu0 %v4351
    %4712 = vmatpush1.bf16.msra.mxu0 %v4350
    %4713 = vmatprep.subr.bf16.mxu0 %v4354
    %4714 = vmatpush1.bf16.msra.mxu0 %v4353
    %4715 = vmatprep.subr.bf16.mxu0 %v4357
    %4716 = vmatpush1.bf16.msra.mxu0 %v4356
    %4717 = vmatprep.subr.bf16.mxu0 %v4360
    %4718 = vmatpush1.bf16.msra.mxu0 %v4359
    %4719 = vmatprep.subr.bf16.mxu0 %v4363
    %4720 = vmatpush1.bf16.msra.mxu0 %v4362
    %4721 = vmatprep.subr.bf16.mxu0 %v4366
    %4722 = vmatpush1.bf16.msra.mxu0 %v4365
    %4723 = vmatprep.subr.bf16.mxu0 %v4369
    %4724 = vmatpush1.bf16.msra.mxu0 %v4368
    %4725 = vmatprep.subr.bf16.mxu0 %v4372
    %4726 = vmatpush1.bf16.msra.mxu0 %v4371
    %4727 = vmatprep.subr.bf16.mxu0 %v4375
    %4728 = vmatpush1.bf16.msra.mxu0 %v4374
    %4729 = vmatprep.subr.bf16.mxu0 %v4378
    %4730 = vmatpush1.bf16.msra.mxu0 %v4377
    %4731 = vmatprep.subr.bf16.mxu0 %v4381
    %4732 = vmatpush1.bf16.msra.mxu0 %v4380
    %4733 = vmatprep.subr.bf16.mxu0 %v4384
    %4734 = vmatpush1.bf16.msra.mxu0 %v4383
    %4735 = vmatprep.subr.bf16.mxu0 %v4387
    %4736 = vmatpush1.bf16.msra.mxu0 %v4386
    %4737 = vmatprep.subr.bf16.mxu0 %v4390
    %4738 = vmatpush1.bf16.msra.mxu0 %v4389
    %4739 = vmatprep.mubr.bf16.mxu0 %v3286
    %4740 = vmatmul.mubr.bf16.gmra.mrb[0].mxu0 %v3285
    %v4741 = vpop.f32.mrb[0].mxu0
    %v4742 = vadd.f32 %v4701, %v4741
    %v4743 = vpop.f32.mrb[0].mxu0
    %v4744 = vadd.f32 %v4703, %v4743
    %v4745 = vpop.f32.mrb[0].mxu0
    %v4746 = vpop.f32.mrb[0].mxu0
    %4747 = vdwg.mxu0
    %4748 = vmatprep.subr.bf16.mxu0 0
    %4749 = vmatpush1.bf16.msra.mxu0 %v4202
    %4750 = vmatprep.subr.bf16.mxu0 0
    %4751 = vmatpush1.bf16.msra.mxu0 %v4205
    %4752 = vmatprep.subr.bf16.mxu0 0
    %4753 = vmatpush1.bf16.msra.mxu0 %v4208
    %4754 = vmatprep.subr.bf16.mxu0 0
    %4755 = vmatpush1.bf16.msra.mxu0 %v4211
    %4756 = vmatprep.subr.bf16.mxu0 0
    %4757 = vmatpush1.bf16.msra.mxu0 %v4214
    %4758 = vmatprep.subr.bf16.mxu0 0
    %4759 = vmatpush1.bf16.msra.mxu0 %v4217
    %4760 = vmatprep.subr.bf16.mxu0 0
    %4761 = vmatpush1.bf16.msra.mxu0 %v4220
    %4762 = vmatprep.subr.bf16.mxu0 0
    %4763 = vmatpush1.bf16.msra.mxu0 %v4223
    %4764 = vmatprep.subr.bf16.mxu0 0
    %4765 = vmatpush1.bf16.msra.mxu0 %v4226
    %4766 = vmatprep.subr.bf16.mxu0 0
    %4767 = vmatpush1.bf16.msra.mxu0 %v4229
    %4768 = vmatprep.subr.bf16.mxu0 0
    %4769 = vmatpush1.bf16.msra.mxu0 %v4232
    %4770 = vmatprep.subr.bf16.mxu0 0
    %4771 = vmatpush1.bf16.msra.mxu0 %v4235
    %4772 = vmatprep.subr.bf16.mxu0 0
    %4773 = vmatpush1.bf16.msra.mxu0 %v4238
    %4774 = vmatprep.subr.bf16.mxu0 0
    %4775 = vmatpush1.bf16.msra.mxu0 %v4241
    %4776 = vmatprep.subr.bf16.mxu0 0
    %4777 = vmatpush1.bf16.msra.mxu0 %v4244
    %4778 = vmatprep.subr.bf16.mxu0 0
    %4779 = vmatpush1.bf16.msra.mxu0 %v4247
    %4780 = vmatprep.mubr.bf16.mxu0 %v3280
    %4781 = vmatmul.mubr.bf16.gmra.mrb[0].mxu0 %v3279
    %v4782 = vpop.f32.mrb[0].mxu0
    %v4783 = vadd.f32 %v3556, %v4782
    %v4784 = vpop.f32.mrb[0].mxu0
    %v4785 = vpop.f32.mrb[0].mxu0
    %v4786 = vpop.f32.mrb[0].mxu0
    %4787 = vdwg.mxu0
    %4788 = vmatprep.subr.bf16.mxu0 0
    %4789 = vmatpush1.bf16.msra.mxu0 %v4250
    %4790 = vmatprep.subr.bf16.mxu0 0
    %4791 = vmatpush1.bf16.msra.mxu0 %v4253
    %4792 = vmatprep.subr.bf16.mxu0 0
    %4793 = vmatpush1.bf16.msra.mxu0 %v4256
    %4794 = vmatprep.subr.bf16.mxu0 0
    %4795 = vmatpush1.bf16.msra.mxu0 %v4259
    %4796 = vmatprep.subr.bf16.mxu0 0
    %4797 = vmatpush1.bf16.msra.mxu0 %v4262
    %4798 = vmatprep.subr.bf16.mxu0 0
    %4799 = vmatpush1.bf16.msra.mxu0 %v4265
    %4800 = vmatprep.subr.bf16.mxu0 0
    %4801 = vmatpush1.bf16.msra.mxu0 %v4268
    %4802 = vmatprep.subr.bf16.mxu0 0
    %4803 = vmatpush1.bf16.msra.mxu0 %v4271
    %4804 = vmatprep.subr.bf16.mxu0 0
    %4805 = vmatpush1.bf16.msra.mxu0 %v4274
    %4806 = vmatprep.subr.bf16.mxu0 0
    %4807 = vmatpush1.bf16.msra.mxu0 %v4277
    %4808 = vmatprep.subr.bf16.mxu0 0
    %4809 = vmatpush1.bf16.msra.mxu0 %v4280
    %4810 = vmatprep.subr.bf16.mxu0 0
    %4811 = vmatpush1.bf16.msra.mxu0 %v4283
    %4812 = vmatprep.subr.bf16.mxu0 0
    %4813 = vmatpush1.bf16.msra.mxu0 %v4286
    %4814 = vmatprep.subr.bf16.mxu0 0
    %4815 = vmatpush1.bf16.msra.mxu0 %v4289
    %4816 = vmatprep.subr.bf16.mxu0 0
    %4817 = vmatpush1.bf16.msra.mxu0 %v4292
    %4818 = vmatprep.subr.bf16.mxu0 0
    %4819 = vmatpush1.bf16.msra.mxu0 %v4295
    %4820 = vmatprep.mubr.bf16.mxu0 %v3282
    %4821 = vmatmul.mubr.bf16.gmra.mrb[0].mxu0 %v3281
    %v4822 = vpop.f32.mrb[0].mxu0
    %v4823 = vadd.f32 %v4783, %v4822
    %v4824 = vpop.f32.mrb[0].mxu0
    %v4825 = vpop.f32.mrb[0].mxu0
    %v4826 = vpop.f32.mrb[0].mxu0
    %4827 = vdwg.mxu0
    %4828 = vmatprep.subr.bf16.mxu0 0
    %4829 = vmatpush1.bf16.msra.mxu0 %v4298
    %4830 = vmatprep.subr.bf16.mxu0 0
    %4831 = vmatpush1.bf16.msra.mxu0 %v4301
    %4832 = vmatprep.subr.bf16.mxu0 0
    %4833 = vmatpush1.bf16.msra.mxu0 %v4304
    %4834 = vmatprep.subr.bf16.mxu0 0
    %4835 = vmatpush1.bf16.msra.mxu0 %v4307
    %4836 = vmatprep.subr.bf16.mxu0 0
    %4837 = vmatpush1.bf16.msra.mxu0 %v4310
    %4838 = vmatprep.subr.bf16.mxu0 0
    %4839 = vmatpush1.bf16.msra.mxu0 %v4313
    %4840 = vmatprep.subr.bf16.mxu0 0
    %4841 = vmatpush1.bf16.msra.mxu0 %v4316
    %4842 = vmatprep.subr.bf16.mxu0 0
    %4843 = vmatpush1.bf16.msra.mxu0 %v4319
    %4844 = vmatprep.subr.bf16.mxu0 0
    %4845 = vmatpush1.bf16.msra.mxu0 %v4322
    %4846 = vmatprep.subr.bf16.mxu0 0
    %4847 = vmatpush1.bf16.msra.mxu0 %v4325
    %4848 = vmatprep.subr.bf16.mxu0 0
    %4849 = vmatpush1.bf16.msra.mxu0 %v4328
    %4850 = vmatprep.subr.bf16.mxu0 0
    %4851 = vmatpush1.bf16.msra.mxu0 %v4331
    %4852 = vmatprep.subr.bf16.mxu0 0
    %4853 = vmatpush1.bf16.msra.mxu0 %v4334
    %4854 = vmatprep.subr.bf16.mxu0 0
    %4855 = vmatpush1.bf16.msra.mxu0 %v4337
    %4856 = vmatprep.subr.bf16.mxu0 0
    %4857 = vmatpush1.bf16.msra.mxu0 %v4340
    %4858 = vmatprep.subr.bf16.mxu0 0
    %4859 = vmatpush1.bf16.msra.mxu0 %v4343
    %4860 = vmatprep.mubr.bf16.mxu0 %v3284
    %4861 = vmatmul.mubr.bf16.gmra.mrb[0].mxu0 %v3283
    %v4862 = vpop.f32.mrb[0].mxu0
    %v4863 = vadd.f32 %v4823, %v4862
    %v4864 = vpop.f32.mrb[0].mxu0
    %v4865 = vpop.f32.mrb[0].mxu0
    %v4866 = vpop.f32.mrb[0].mxu0
    %4867 = vdwg.mxu0
    %4868 = vmatprep.subr.bf16.mxu0 0
    %4869 = vmatpush1.bf16.msra.mxu0 %v4346
    %4870 = vmatprep.subr.bf16.mxu0 0
    %4871 = vmatpush1.bf16.msra.mxu0 %v4349
    %4872 = vmatprep.subr.bf16.mxu0 0
    %4873 = vmatpush1.bf16.msra.mxu0 %v4352
    %4874 = vmatprep.subr.bf16.mxu0 0
    %4875 = vmatpush1.bf16.msra.mxu0 %v4355
    %4876 = vmatprep.subr.bf16.mxu0 0
    %4877 = vmatpush1.bf16.msra.mxu0 %v4358
    %4878 = vmatprep.subr.bf16.mxu0 0
    %4879 = vmatpush1.bf16.msra.mxu0 %v4361
    %4880 = vmatprep.subr.bf16.mxu0 0
    %4881 = vmatpush1.bf16.msra.mxu0 %v4364
    %4882 = vmatprep.subr.bf16.mxu0 0
    %4883 = vmatpush1.bf16.msra.mxu0 %v4367
    %4884 = vmatprep.subr.bf16.mxu0 0
    %4885 = vmatpush1.bf16.msra.mxu0 %v4370
    %4886 = vmatprep.subr.bf16.mxu0 0
    %4887 = vmatpush1.bf16.msra.mxu0 %v4373
    %4888 = vmatprep.subr.bf16.mxu0 0
    %4889 = vmatpush1.bf16.msra.mxu0 %v4376
    %4890 = vmatprep.subr.bf16.mxu0 0
    %4891 = vmatpush1.bf16.msra.mxu0 %v4379
    %4892 = vmatprep.subr.bf16.mxu0 0
    %4893 = vmatpush1.bf16.msra.mxu0 %v4382
    %4894 = vmatprep.subr.bf16.mxu0 0
    %4895 = vmatpush1.bf16.msra.mxu0 %v4385
    %4896 = vmatprep.subr.bf16.mxu0 0
    %4897 = vmatpush1.bf16.msra.mxu0 %v4388
    %4898 = vmatprep.subr.bf16.mxu0 0
    %4899 = vmatpush1.bf16.msra.mxu0 %v4391
    %4900 = vmatprep.mubr.bf16.mxu0 %v3286
    %4901 = vmatmul.mubr.bf16.gmra.mrb[0].mxu0 %v3285
    %v4902 = vpop.f32.mrb[0].mxu0
    %v4903 = vadd.f32 %v4863, %v4902
    %v4904 = vpop.f32.mrb[0].mxu0
    %v4905 = vpop.f32.mrb[0].mxu0
    %v4906 = vpop.f32.mrb[0].mxu0
    %4907 = vdwg.mxu0
    %4908 = vst [vmem:[#allocation16] sm:$0xff] %v4742
    %4909 = vst [vmem:[#allocation16 + $0x8] sm:$0xff] %v4744
    %4910 = vst [vmem:[#allocation16 + $0x10] sm:$0xff] %v4903
    // Predicated region
    $region78: #{deep_decoder_forward.1} parent=1 // pred_check
      _
    $region79: #{deep_decoder_forward.1} parent=1 // pred_check_branch
      %4912 = sbr.rel (0) target = $region81
    $region80: #{deep_decoder_forward.1} parent=1 // pred_region
      %s4914 = ssub.s32 384, 384
      %4915 = vsyncadd [#allocation4], %s4914
      %s4917 = sshll.u32 [#allocation16], 4
      %s4918 = int_to_ptr.vmem [resolvable:$true] %s4917
      %4920 = dma.vmem_to_hbm [thread:$0]  %s4918, 384, %s11, [#allocation4]
    $region81: #{deep_decoder_forward.1} parent=1 // pred_fallthru
      _
    // Predicated region
    $region82: #{deep_decoder_forward.1} parent=1 // pred_check
      _
    $region83: #{deep_decoder_forward.1} parent=1 // pred_check_branch
      %4922 = sbr.rel (0) target = $region85
    $region84: #{deep_decoder_forward.1} parent=1 // pred_region
      %4923 = dma.done [#allocation4], 384
    $region85: #{deep_decoder_forward.1} parent=1 // pred_fallthru
      _
    %4924 = vsyncpa [#allocation3], 1
    %4925 = vsyncpa [#allocation6], 1
    %4926 = vsyncpa [#allocation9], 1
    %4927 = vsyncpa [#allocation12], 1
    %4928 = vsyncpa [#allocation15], 1
    %4929 = vsyncpa [#allocation4], 1

</llo_original>
